<compile_context>
chip_gen: v6e
topology: v6e:2x2x1
jax: 0.10.0
libtpu: 0.0.40
codegen_flags: <defaults>
</compile_context>

<pallas_src>
import functools

import jax
import jax.numpy as jnp
from jax import lax
from jax.experimental import pallas as pl
from jax.experimental.pallas import tpu as pltpu


# ----------------------------------------------------------------------------
# Fused kernel: num_conv x (3x3 conv + dense skip adds + folded BN + ReLU)
# ----------------------------------------------------------------------------
def _densenet_kernel(x_ref, w_ref, s_ref, b_ref, m_ref, o_ref, *, width, num_conv):
    # x_ref : (1, C, HW)        one batch element, NCHW with (H, W) flattened
    # w_ref : (L*9, C, C)       per-tap (C_out, C_in) weights, tap = ky*3 + kx
    # s_ref : (L, C, 1)         folded BN scale
    # b_ref : (L, C, 1)         folded BN bias (conv bias folded in)
    # m_ref : (9, 1, HW)        padding=1 validity masks per tap
    # o_ref : (1, C, HW)
    hw = x_ref.shape[2]
    taps = tuple((dy, dx) for dy in (-1, 0, 1) for dx in (-1, 0, 1))

    # Boundary masks for the 8 shifted taps, loaded once and reused across all
    # layers (the centre tap needs neither a shift nor a mask).
    masks = [None if (dy == 0 and dx == 0) else m_ref[t]
             for t, (dy, dx) in enumerate(taps)]

    cur = x_ref[0].astype(jnp.float32)          # outs[i]            (C, HW)
    run_sum = jnp.zeros_like(cur)               # sum_{j<i} outs[j]  (C, HW)

    for i in range(num_conv):                   # static unroll (num_conv = 4)
        t_acc = run_sum                         # dense skip sum seeds the acc
        for t, (dy, dx) in enumerate(taps):
            if dy == 0 and dx == 0:
                shifted = cur
            else:
                # shifted[p] = cur[p + dy*W + dx] where the 2D neighbour is in
                # bounds, else 0 (== padding=1).  Flat lane roll + mask.
                d = dy * width + dx
                shifted = pltpu.roll(cur, shift=(-d) % hw, axis=1) * masks[t]
            # (C_out, C_in) @ (C_in, HW): lane-dense output, f32 accumulation.
            # NOTE: at production channel counts ship w_ref in bf16.
            t_acc = t_acc + jnp.dot(w_ref[i * 9 + t], shifted,
                                    preferred_element_type=jnp.float32)
        y = jnp.maximum(t_acc * s_ref[i] + b_ref[i], 0.0)   # folded BN + ReLU
        run_sum = run_sum + cur
        cur = y

    o_ref[0] = cur.astype(o_ref.dtype)


# ----------------------------------------------------------------------------
# Wrapper: NCHW in / NCHW out, one fused pallas_call.
# ----------------------------------------------------------------------------
@jax.jit
def single_level_densenet_forward(x_nchw, w_oihw, conv_bias, gamma, beta, mean,
                                  var, eps=1e-5):
    """x_nchw: (N, C, H, W); w_oihw: (L, C, C, 3, 3) (PyTorch layout);
    conv_bias / gamma / beta / mean / var: (L, C)."""
    n, c, h, w = x_nchw.shape
    num_conv = w_oihw.shape[0]
    hw = h * w

    # NCHW consumed directly: merging (H, W) -> HW is a free contiguous reshape.
    xf = x_nchw.reshape(n, c, hw)

    # Per-tap (C_out, C_in) weight matrices, tap index = ky*3 + kx.
    wt = jnp.transpose(w_oihw, (0, 3, 4, 1, 2)).reshape(num_conv * 9, c, c)
    wt = wt.astype(jnp.float32)

    # Fold conv bias + eval-mode BN into per-channel scale/bias, shaped (L,C,1)
    # so the epilogue broadcast is a cheap per-sublane broadcast.
    scale = gamma * lax.rsqrt(var + eps)                      # (L, C)
    bias = (conv_bias - mean) * scale + beta                  # (L, C)
    s3 = scale.reshape(num_conv, c, 1).astype(jnp.float32)
    b3 = bias.reshape(num_conv, c, 1).astype(jnp.float32)

    # padding=1 validity masks for the 9 taps (tap = (dy+1)*3 + (dx+1)).
    row = jnp.arange(hw, dtype=jnp.int32) // w
    col = jnp.arange(hw, dtype=jnp.int32) % w
    mask_list = []
    for dy in (-1, 0, 1):
        for dx in (-1, 0, 1):
            valid = ((row + dy >= 0) & (row + dy < h) &
                     (col + dx >= 0) & (col + dx < w))
            mask_list.append(valid.astype(jnp.float32))
    masks = jnp.stack(mask_list).reshape(9, 1, hw)

    kernel = functools.partial(_densenet_kernel, width=w, num_conv=num_conv)

    out = pl.pallas_call(
        kernel,
        out_shape=jax.ShapeDtypeStruct((n, c, hw), x_nchw.dtype),
        grid_spec=pltpu.PrefetchScalarGridSpec(
            num_scalar_prefetch=0,
            grid=(n,),
            in_specs=[
                pl.BlockSpec((1, c, hw), lambda i: (i, 0, 0)),            # x
                pl.BlockSpec((num_conv * 9, c, c), lambda i: (0, 0, 0)),  # w
                pl.BlockSpec((num_conv, c, 1), lambda i: (0, 0, 0)),      # scale
                pl.BlockSpec((num_conv, c, 1), lambda i: (0, 0, 0)),      # bias
                pl.BlockSpec((9, 1, hw), lambda i: (0, 0, 0)),            # masks
            ],
            out_specs=pl.BlockSpec((1, c, hw), lambda i: (i, 0, 0)),
        ),
        compiler_params=pltpu.CompilerParams(
            dimension_semantics=("parallel",)),
    )(xf, wt, s3, b3, masks)

    return out.reshape(n, c, h, w)


# ----------------------------------------------------------------------------
# Pure-JAX reference (eval-mode BN, full f32 conv) for verification.
# ----------------------------------------------------------------------------
def densenet_reference(x_nchw, w_oihw, conv_bias, gamma, beta, mean, var, eps=1e-5):
    outs = [x_nchw]
    num_conv = w_oihw.shape[0]
    for i in range(num_conv):
        t = lax.conv_general_dilated(
            outs[i], w_oihw[i], (1, 1), ((1, 1), (1, 1)),
            dimension_numbers=("NCHW", "OIHW", "NCHW"),
            precision=lax.Precision.HIGHEST,
        ) + conv_bias[i][None, :, None, None]
        for j in range(i):
            t = t + outs[j]
        s = gamma[i] / jnp.sqrt(var[i] + eps)
        t = (t - mean[i][None, :, None, None]) * s[None, :, None, None] \
            + beta[i][None, :, None, None]
        outs.append(jnp.maximum(t, 0.0))
    return outs[-1]


if __name__ == "__main__":
    filters, num_conv = 4, 4          # Single_level_densenet(filters=4, num_conv=4)
    n, h, w = 2, 16, 16

    key = jax.random.PRNGKey(0)
    kx, kw, kb, kg, kbe, km, kv = jax.random.split(key, 7)

    x = jax.random.normal(kx, (n, filters, h, w), jnp.float32)

    # Conv weights (PyTorch OIHW per layer), conv bias, eval-mode BN params.
    w_oihw = jax.random.normal(kw, (num_conv, filters, filters, 3, 3), jnp.float32) * 0.15
    conv_b = jax.random.normal(kb, (num_conv, filters), jnp.float32) * 0.1
    gamma = jax.random.uniform(kg, (num_conv, filters), jnp.float32, 0.5, 1.5)
    beta = jax.random.normal(kbe, (num_conv, filters), jnp.float32) * 0.1
    mean = jax.random.normal(km, (num_conv, filters), jnp.float32) * 0.1
    var = jax.random.uniform(kv, (num_conv, filters), jnp.float32, 0.5, 1.5)

    out = jax.block_until_ready(
        single_level_densenet_forward(x, w_oihw, conv_b, gamma, beta, mean, var))
    ref = jax.block_until_ready(
        densenet_reference(x, w_oihw, conv_b, gamma, beta, mean, var))

    assert out.shape == (n, filters, h, w), out.shape
    # Kernel matmuls run at default MXU precision vs. an f32 HIGHEST reference;
    # flagged: fine for inference, revisit precision if this feeds training.
    max_err = float(jnp.max(jnp.abs(out - ref)))
    assert jnp.allclose(out, ref, atol=2e-2, rtol=2e-2), max_err
    print("KERNEL_OK")
</pallas_src>

<mosaic_0001>
module attributes {stable_mosaic.version = 11 : i64} {
  func.func @_densenet_kernel(%arg0: i32, %arg1: memref<1x4x256xf32, #tpu.memory_space<vmem>>, %arg2: memref<36x4x4xf32, #tpu.memory_space<vmem>>, %arg3: memref<4x4x1xf32, #tpu.memory_space<vmem>>, %arg4: memref<4x4x1xf32, #tpu.memory_space<vmem>>, %arg5: memref<9x1x256xf32, #tpu.memory_space<vmem>>, %arg6: memref<1x4x256xf32, #tpu.memory_space<vmem>>) attributes {dimension_semantics = [#tpu.dimension_semantics<parallel>], iteration_bounds = array<i64: 2>, scalar_prefetch = 0 : i64, scratch_operands = 0 : i64, tpu.core_type = #tpu.core_type<tc>, window_params = [{transform_indices = @transform_0, window_bounds = array<i64: 1, 4, 256>}, {pipeline_mode = #tpu.pipeline_mode<synchronous>, transform_indices = @transform_1, window_bounds = array<i64: 36, 4, 4>}, {pipeline_mode = #tpu.pipeline_mode<synchronous>, transform_indices = @transform_2, window_bounds = array<i64: 4, 4, 1>}, {pipeline_mode = #tpu.pipeline_mode<synchronous>, transform_indices = @transform_3, window_bounds = array<i64: 4, 4, 1>}, {pipeline_mode = #tpu.pipeline_mode<synchronous>, transform_indices = @transform_4, window_bounds = array<i64: 9, 1, 256>}, {transform_indices = @transform_5, window_bounds = array<i64: 1, 4, 256>}]} {
    %c0 = arith.constant 0 : index
    %c0_0 = arith.constant 0 : index
    %c0_1 = arith.constant 0 : index
    %0 = vector.load %arg5[%c0, %c0_0, %c0_1] : memref<9x1x256xf32, #tpu.memory_space<vmem>>, vector<1x1x256xf32>
    %1 = vector.shape_cast %0 : vector<1x1x256xf32> to vector<1x256xf32>
    %c1 = arith.constant 1 : index
    %c0_2 = arith.constant 0 : index
    %c0_3 = arith.constant 0 : index
    %2 = vector.load %arg5[%c1, %c0_2, %c0_3] : memref<9x1x256xf32, #tpu.memory_space<vmem>>, vector<1x1x256xf32>
    %3 = vector.shape_cast %2 : vector<1x1x256xf32> to vector<1x256xf32>
    %c2 = arith.constant 2 : index
    %c0_4 = arith.constant 0 : index
    %c0_5 = arith.constant 0 : index
    %4 = vector.load %arg5[%c2, %c0_4, %c0_5] : memref<9x1x256xf32, #tpu.memory_space<vmem>>, vector<1x1x256xf32>
    %5 = vector.shape_cast %4 : vector<1x1x256xf32> to vector<1x256xf32>
    %c3 = arith.constant 3 : index
    %c0_6 = arith.constant 0 : index
    %c0_7 = arith.constant 0 : index
    %6 = vector.load %arg5[%c3, %c0_6, %c0_7] : memref<9x1x256xf32, #tpu.memory_space<vmem>>, vector<1x1x256xf32>
    %7 = vector.shape_cast %6 : vector<1x1x256xf32> to vector<1x256xf32>
    %c5 = arith.constant 5 : index
    %c0_8 = arith.constant 0 : index
    %c0_9 = arith.constant 0 : index
    %8 = vector.load %arg5[%c5, %c0_8, %c0_9] : memref<9x1x256xf32, #tpu.memory_space<vmem>>, vector<1x1x256xf32>
    %9 = vector.shape_cast %8 : vector<1x1x256xf32> to vector<1x256xf32>
    %c6 = arith.constant 6 : index
    %c0_10 = arith.constant 0 : index
    %c0_11 = arith.constant 0 : index
    %10 = vector.load %arg5[%c6, %c0_10, %c0_11] : memref<9x1x256xf32, #tpu.memory_space<vmem>>, vector<1x1x256xf32>
    %11 = vector.shape_cast %10 : vector<1x1x256xf32> to vector<1x256xf32>
    %c7 = arith.constant 7 : index
    %c0_12 = arith.constant 0 : index
    %c0_13 = arith.constant 0 : index
    %12 = vector.load %arg5[%c7, %c0_12, %c0_13] : memref<9x1x256xf32, #tpu.memory_space<vmem>>, vector<1x1x256xf32>
    %13 = vector.shape_cast %12 : vector<1x1x256xf32> to vector<1x256xf32>
    %c8 = arith.constant 8 : index
    %c0_14 = arith.constant 0 : index
    %c0_15 = arith.constant 0 : index
    %14 = vector.load %arg5[%c8, %c0_14, %c0_15] : memref<9x1x256xf32, #tpu.memory_space<vmem>>, vector<1x1x256xf32>
    %15 = vector.shape_cast %14 : vector<1x1x256xf32> to vector<1x256xf32>
    %c0_16 = arith.constant 0 : index
    %c0_17 = arith.constant 0 : index
    %c0_18 = arith.constant 0 : index
    %16 = vector.load %arg1[%c0_16, %c0_17, %c0_18] : memref<1x4x256xf32, #tpu.memory_space<vmem>>, vector<1x4x256xf32>
    %17 = vector.shape_cast %16 : vector<1x4x256xf32> to vector<4x256xf32>
    %cst = arith.constant 0.000000e+00 : f32
    %18 = vector.broadcast %cst : f32 to vector<4x256xf32>
    %c17_i32 = arith.constant 17 : i32
    %19 = tpu.dynamic_rotate %17 by %c17_i32 dim 1 : vector<4x256xf32>, i32 -> vector<4x256xf32>
    %20 = vector.broadcast %1 : vector<1x256xf32> to vector<4x256xf32>
    %21 = arith.mulf %19, %20 : vector<4x256xf32>
    %c0_19 = arith.constant 0 : index
    %c0_20 = arith.constant 0 : index
    %c0_21 = arith.constant 0 : index
    %22 = vector.load %arg2[%c0_19, %c0_20, %c0_21] : memref<36x4x4xf32, #tpu.memory_space<vmem>>, vector<1x4x4xf32>
    %23 = vector.shape_cast %22 : vector<1x4x4xf32> to vector<4x4xf32>
    %cst_22 = arith.constant dense<0.000000e+00> : vector<4x256xf32>
    %24 = tpu.matmul %23, %21, %cst_22 {dimension_numbers = #tpu.dot_dimension_numbers<[1], [0], [0], [1], [0, 0, 1, 1], [], []>} : vector<4x4xf32>, vector<4x256xf32>, vector<4x256xf32> -> vector<4x256xf32>
    %25 = arith.addf %18, %24 : vector<4x256xf32>
    %c16_i32 = arith.constant 16 : i32
    %26 = tpu.dynamic_rotate %17 by %c16_i32 dim 1 : vector<4x256xf32>, i32 -> vector<4x256xf32>
    %27 = vector.broadcast %3 : vector<1x256xf32> to vector<4x256xf32>
    %28 = arith.mulf %26, %27 : vector<4x256xf32>
    %c1_23 = arith.constant 1 : index
    %c0_24 = arith.constant 0 : index
    %c0_25 = arith.constant 0 : index
    %29 = vector.load %arg2[%c1_23, %c0_24, %c0_25] : memref<36x4x4xf32, #tpu.memory_space<vmem>>, vector<1x4x4xf32>
    %30 = vector.shape_cast %29 : vector<1x4x4xf32> to vector<4x4xf32>
    %cst_26 = arith.constant dense<0.000000e+00> : vector<4x256xf32>
    %31 = tpu.matmul %30, %28, %cst_26 {dimension_numbers = #tpu.dot_dimension_numbers<[1], [0], [0], [1], [0, 0, 1, 1], [], []>} : vector<4x4xf32>, vector<4x256xf32>, vector<4x256xf32> -> vector<4x256xf32>
    %32 = arith.addf %25, %31 : vector<4x256xf32>
    %c15_i32 = arith.constant 15 : i32
    %33 = tpu.dynamic_rotate %17 by %c15_i32 dim 1 : vector<4x256xf32>, i32 -> vector<4x256xf32>
    %34 = vector.broadcast %5 : vector<1x256xf32> to vector<4x256xf32>
    %35 = arith.mulf %33, %34 : vector<4x256xf32>
    %c2_27 = arith.constant 2 : index
    %c0_28 = arith.constant 0 : index
    %c0_29 = arith.constant 0 : index
    %36 = vector.load %arg2[%c2_27, %c0_28, %c0_29] : memref<36x4x4xf32, #tpu.memory_space<vmem>>, vector<1x4x4xf32>
    %37 = vector.shape_cast %36 : vector<1x4x4xf32> to vector<4x4xf32>
    %cst_30 = arith.constant dense<0.000000e+00> : vector<4x256xf32>
    %38 = tpu.matmul %37, %35, %cst_30 {dimension_numbers = #tpu.dot_dimension_numbers<[1], [0], [0], [1], [0, 0, 1, 1], [], []>} : vector<4x4xf32>, vector<4x256xf32>, vector<4x256xf32> -> vector<4x256xf32>
    %39 = arith.addf %32, %38 : vector<4x256xf32>
    %c1_i32 = arith.constant 1 : i32
    %40 = tpu.dynamic_rotate %17 by %c1_i32 dim 1 : vector<4x256xf32>, i32 -> vector<4x256xf32>
    %41 = vector.broadcast %7 : vector<1x256xf32> to vector<4x256xf32>
    %42 = arith.mulf %40, %41 : vector<4x256xf32>
    %c3_31 = arith.constant 3 : index
    %c0_32 = arith.constant 0 : index
    %c0_33 = arith.constant 0 : index
    %43 = vector.load %arg2[%c3_31, %c0_32, %c0_33] : memref<36x4x4xf32, #tpu.memory_space<vmem>>, vector<1x4x4xf32>
    %44 = vector.shape_cast %43 : vector<1x4x4xf32> to vector<4x4xf32>
    %cst_34 = arith.constant dense<0.000000e+00> : vector<4x256xf32>
    %45 = tpu.matmul %44, %42, %cst_34 {dimension_numbers = #tpu.dot_dimension_numbers<[1], [0], [0], [1], [0, 0, 1, 1], [], []>} : vector<4x4xf32>, vector<4x256xf32>, vector<4x256xf32> -> vector<4x256xf32>
    %46 = arith.addf %39, %45 : vector<4x256xf32>
    %c4 = arith.constant 4 : index
    %c0_35 = arith.constant 0 : index
    %c0_36 = arith.constant 0 : index
    %47 = vector.load %arg2[%c4, %c0_35, %c0_36] : memref<36x4x4xf32, #tpu.memory_space<vmem>>, vector<1x4x4xf32>
    %48 = vector.shape_cast %47 : vector<1x4x4xf32> to vector<4x4xf32>
    %cst_37 = arith.constant dense<0.000000e+00> : vector<4x256xf32>
    %49 = tpu.matmul %48, %17, %cst_37 {dimension_numbers = #tpu.dot_dimension_numbers<[1], [0], [0], [1], [0, 0, 1, 1], [], []>} : vector<4x4xf32>, vector<4x256xf32>, vector<4x256xf32> -> vector<4x256xf32>
    %50 = arith.addf %46, %49 : vector<4x256xf32>
    %c255_i32 = arith.constant 255 : i32
    %51 = tpu.dynamic_rotate %17 by %c255_i32 dim 1 : vector<4x256xf32>, i32 -> vector<4x256xf32>
    %52 = vector.broadcast %9 : vector<1x256xf32> to vector<4x256xf32>
    %53 = arith.mulf %51, %52 : vector<4x256xf32>
    %c5_38 = arith.constant 5 : index
    %c0_39 = arith.constant 0 : index
    %c0_40 = arith.constant 0 : index
    %54 = vector.load %arg2[%c5_38, %c0_39, %c0_40] : memref<36x4x4xf32, #tpu.memory_space<vmem>>, vector<1x4x4xf32>
    %55 = vector.shape_cast %54 : vector<1x4x4xf32> to vector<4x4xf32>
    %cst_41 = arith.constant dense<0.000000e+00> : vector<4x256xf32>
    %56 = tpu.matmul %55, %53, %cst_41 {dimension_numbers = #tpu.dot_dimension_numbers<[1], [0], [0], [1], [0, 0, 1, 1], [], []>} : vector<4x4xf32>, vector<4x256xf32>, vector<4x256xf32> -> vector<4x256xf32>
    %57 = arith.addf %50, %56 : vector<4x256xf32>
    %c241_i32 = arith.constant 241 : i32
    %58 = tpu.dynamic_rotate %17 by %c241_i32 dim 1 : vector<4x256xf32>, i32 -> vector<4x256xf32>
    %59 = vector.broadcast %11 : vector<1x256xf32> to vector<4x256xf32>
    %60 = arith.mulf %58, %59 : vector<4x256xf32>
    %c6_42 = arith.constant 6 : index
    %c0_43 = arith.constant 0 : index
    %c0_44 = arith.constant 0 : index
    %61 = vector.load %arg2[%c6_42, %c0_43, %c0_44] : memref<36x4x4xf32, #tpu.memory_space<vmem>>, vector<1x4x4xf32>
    %62 = vector.shape_cast %61 : vector<1x4x4xf32> to vector<4x4xf32>
    %cst_45 = arith.constant dense<0.000000e+00> : vector<4x256xf32>
    %63 = tpu.matmul %62, %60, %cst_45 {dimension_numbers = #tpu.dot_dimension_numbers<[1], [0], [0], [1], [0, 0, 1, 1], [], []>} : vector<4x4xf32>, vector<4x256xf32>, vector<4x256xf32> -> vector<4x256xf32>
    %64 = arith.addf %57, %63 : vector<4x256xf32>
    %c240_i32 = arith.constant 240 : i32
    %65 = tpu.dynamic_rotate %17 by %c240_i32 dim 1 : vector<4x256xf32>, i32 -> vector<4x256xf32>
    %66 = vector.broadcast %13 : vector<1x256xf32> to vector<4x256xf32>
    %67 = arith.mulf %65, %66 : vector<4x256xf32>
    %c7_46 = arith.constant 7 : index
    %c0_47 = arith.constant 0 : index
    %c0_48 = arith.constant 0 : index
    %68 = vector.load %arg2[%c7_46, %c0_47, %c0_48] : memref<36x4x4xf32, #tpu.memory_space<vmem>>, vector<1x4x4xf32>
    %69 = vector.shape_cast %68 : vector<1x4x4xf32> to vector<4x4xf32>
    %cst_49 = arith.constant dense<0.000000e+00> : vector<4x256xf32>
    %70 = tpu.matmul %69, %67, %cst_49 {dimension_numbers = #tpu.dot_dimension_numbers<[1], [0], [0], [1], [0, 0, 1, 1], [], []>} : vector<4x4xf32>, vector<4x256xf32>, vector<4x256xf32> -> vector<4x256xf32>
    %71 = arith.addf %64, %70 : vector<4x256xf32>
    %c239_i32 = arith.constant 239 : i32
    %72 = tpu.dynamic_rotate %17 by %c239_i32 dim 1 : vector<4x256xf32>, i32 -> vector<4x256xf32>
    %73 = vector.broadcast %15 : vector<1x256xf32> to vector<4x256xf32>
    %74 = arith.mulf %72, %73 : vector<4x256xf32>
    %c8_50 = arith.constant 8 : index
    %c0_51 = arith.constant 0 : index
    %c0_52 = arith.constant 0 : index
    %75 = vector.load %arg2[%c8_50, %c0_51, %c0_52] : memref<36x4x4xf32, #tpu.memory_space<vmem>>, vector<1x4x4xf32>
    %76 = vector.shape_cast %75 : vector<1x4x4xf32> to vector<4x4xf32>
    %cst_53 = arith.constant dense<0.000000e+00> : vector<4x256xf32>
    %77 = tpu.matmul %76, %74, %cst_53 {dimension_numbers = #tpu.dot_dimension_numbers<[1], [0], [0], [1], [0, 0, 1, 1], [], []>} : vector<4x4xf32>, vector<4x256xf32>, vector<4x256xf32> -> vector<4x256xf32>
    %78 = arith.addf %71, %77 : vector<4x256xf32>
    %c0_54 = arith.constant 0 : index
    %c0_55 = arith.constant 0 : index
    %c0_56 = arith.constant 0 : index
    %79 = vector.load %arg3[%c0_54, %c0_55, %c0_56] : memref<4x4x1xf32, #tpu.memory_space<vmem>>, vector<1x4x1xf32>
    %80 = vector.shape_cast %79 : vector<1x4x1xf32> to vector<4x1xf32>
    %81 = vector.broadcast %80 : vector<4x1xf32> to vector<4x256xf32>
    %82 = arith.mulf %78, %81 : vector<4x256xf32>
    %c0_57 = arith.constant 0 : index
    %c0_58 = arith.constant 0 : index
    %c0_59 = arith.constant 0 : index
    %83 = vector.load %arg4[%c0_57, %c0_58, %c0_59] : memref<4x4x1xf32, #tpu.memory_space<vmem>>, vector<1x4x1xf32>
    %84 = vector.shape_cast %83 : vector<1x4x1xf32> to vector<4x1xf32>
    %85 = vector.broadcast %84 : vector<4x1xf32> to vector<4x256xf32>
    %86 = arith.addf %82, %85 : vector<4x256xf32>
    %cst_60 = arith.constant 0.000000e+00 : f32
    %87 = vector.broadcast %cst_60 : f32 to vector<4x256xf32>
    %88 = arith.maximumf %86, %87 : vector<4x256xf32>
    %89 = arith.addf %18, %17 : vector<4x256xf32>
    %c17_i32_61 = arith.constant 17 : i32
    %90 = tpu.dynamic_rotate %88 by %c17_i32_61 dim 1 : vector<4x256xf32>, i32 -> vector<4x256xf32>
    %91 = vector.broadcast %1 : vector<1x256xf32> to vector<4x256xf32>
    %92 = arith.mulf %90, %91 : vector<4x256xf32>
    %c9 = arith.constant 9 : index
    %c0_62 = arith.constant 0 : index
    %c0_63 = arith.constant 0 : index
    %93 = vector.load %arg2[%c9, %c0_62, %c0_63] : memref<36x4x4xf32, #tpu.memory_space<vmem>>, vector<1x4x4xf32>
    %94 = vector.shape_cast %93 : vector<1x4x4xf32> to vector<4x4xf32>
    %cst_64 = arith.constant dense<0.000000e+00> : vector<4x256xf32>
    %95 = tpu.matmul %94, %92, %cst_64 {dimension_numbers = #tpu.dot_dimension_numbers<[1], [0], [0], [1], [0, 0, 1, 1], [], []>} : vector<4x4xf32>, vector<4x256xf32>, vector<4x256xf32> -> vector<4x256xf32>
    %96 = arith.addf %89, %95 : vector<4x256xf32>
    %c16_i32_65 = arith.constant 16 : i32
    %97 = tpu.dynamic_rotate %88 by %c16_i32_65 dim 1 : vector<4x256xf32>, i32 -> vector<4x256xf32>
    %98 = vector.broadcast %3 : vector<1x256xf32> to vector<4x256xf32>
    %99 = arith.mulf %97, %98 : vector<4x256xf32>
    %c10 = arith.constant 10 : index
    %c0_66 = arith.constant 0 : index
    %c0_67 = arith.constant 0 : index
    %100 = vector.load %arg2[%c10, %c0_66, %c0_67] : memref<36x4x4xf32, #tpu.memory_space<vmem>>, vector<1x4x4xf32>
    %101 = vector.shape_cast %100 : vector<1x4x4xf32> to vector<4x4xf32>
    %cst_68 = arith.constant dense<0.000000e+00> : vector<4x256xf32>
    %102 = tpu.matmul %101, %99, %cst_68 {dimension_numbers = #tpu.dot_dimension_numbers<[1], [0], [0], [1], [0, 0, 1, 1], [], []>} : vector<4x4xf32>, vector<4x256xf32>, vector<4x256xf32> -> vector<4x256xf32>
    %103 = arith.addf %96, %102 : vector<4x256xf32>
    %c15_i32_69 = arith.constant 15 : i32
    %104 = tpu.dynamic_rotate %88 by %c15_i32_69 dim 1 : vector<4x256xf32>, i32 -> vector<4x256xf32>
    %105 = vector.broadcast %5 : vector<1x256xf32> to vector<4x256xf32>
    %106 = arith.mulf %104, %105 : vector<4x256xf32>
    %c11 = arith.constant 11 : index
    %c0_70 = arith.constant 0 : index
    %c0_71 = arith.constant 0 : index
    %107 = vector.load %arg2[%c11, %c0_70, %c0_71] : memref<36x4x4xf32, #tpu.memory_space<vmem>>, vector<1x4x4xf32>
    %108 = vector.shape_cast %107 : vector<1x4x4xf32> to vector<4x4xf32>
    %cst_72 = arith.constant dense<0.000000e+00> : vector<4x256xf32>
    %109 = tpu.matmul %108, %106, %cst_72 {dimension_numbers = #tpu.dot_dimension_numbers<[1], [0], [0], [1], [0, 0, 1, 1], [], []>} : vector<4x4xf32>, vector<4x256xf32>, vector<4x256xf32> -> vector<4x256xf32>
    %110 = arith.addf %103, %109 : vector<4x256xf32>
    %c1_i32_73 = arith.constant 1 : i32
    %111 = tpu.dynamic_rotate %88 by %c1_i32_73 dim 1 : vector<4x256xf32>, i32 -> vector<4x256xf32>
    %112 = vector.broadcast %7 : vector<1x256xf32> to vector<4x256xf32>
    %113 = arith.mulf %111, %112 : vector<4x256xf32>
    %c12 = arith.constant 12 : index
    %c0_74 = arith.constant 0 : index
    %c0_75 = arith.constant 0 : index
    %114 = vector.load %arg2[%c12, %c0_74, %c0_75] : memref<36x4x4xf32, #tpu.memory_space<vmem>>, vector<1x4x4xf32>
    %115 = vector.shape_cast %114 : vector<1x4x4xf32> to vector<4x4xf32>
    %cst_76 = arith.constant dense<0.000000e+00> : vector<4x256xf32>
    %116 = tpu.matmul %115, %113, %cst_76 {dimension_numbers = #tpu.dot_dimension_numbers<[1], [0], [0], [1], [0, 0, 1, 1], [], []>} : vector<4x4xf32>, vector<4x256xf32>, vector<4x256xf32> -> vector<4x256xf32>
    %117 = arith.addf %110, %116 : vector<4x256xf32>
    %c13 = arith.constant 13 : index
    %c0_77 = arith.constant 0 : index
    %c0_78 = arith.constant 0 : index
    %118 = vector.load %arg2[%c13, %c0_77, %c0_78] : memref<36x4x4xf32, #tpu.memory_space<vmem>>, vector<1x4x4xf32>
    %119 = vector.shape_cast %118 : vector<1x4x4xf32> to vector<4x4xf32>
    %cst_79 = arith.constant dense<0.000000e+00> : vector<4x256xf32>
    %120 = tpu.matmul %119, %88, %cst_79 {dimension_numbers = #tpu.dot_dimension_numbers<[1], [0], [0], [1], [0, 0, 1, 1], [], []>} : vector<4x4xf32>, vector<4x256xf32>, vector<4x256xf32> -> vector<4x256xf32>
    %121 = arith.addf %117, %120 : vector<4x256xf32>
    %c255_i32_80 = arith.constant 255 : i32
    %122 = tpu.dynamic_rotate %88 by %c255_i32_80 dim 1 : vector<4x256xf32>, i32 -> vector<4x256xf32>
    %123 = vector.broadcast %9 : vector<1x256xf32> to vector<4x256xf32>
    %124 = arith.mulf %122, %123 : vector<4x256xf32>
    %c14 = arith.constant 14 : index
    %c0_81 = arith.constant 0 : index
    %c0_82 = arith.constant 0 : index
    %125 = vector.load %arg2[%c14, %c0_81, %c0_82] : memref<36x4x4xf32, #tpu.memory_space<vmem>>, vector<1x4x4xf32>
    %126 = vector.shape_cast %125 : vector<1x4x4xf32> to vector<4x4xf32>
    %cst_83 = arith.constant dense<0.000000e+00> : vector<4x256xf32>
    %127 = tpu.matmul %126, %124, %cst_83 {dimension_numbers = #tpu.dot_dimension_numbers<[1], [0], [0], [1], [0, 0, 1, 1], [], []>} : vector<4x4xf32>, vector<4x256xf32>, vector<4x256xf32> -> vector<4x256xf32>
    %128 = arith.addf %121, %127 : vector<4x256xf32>
    %c241_i32_84 = arith.constant 241 : i32
    %129 = tpu.dynamic_rotate %88 by %c241_i32_84 dim 1 : vector<4x256xf32>, i32 -> vector<4x256xf32>
    %130 = vector.broadcast %11 : vector<1x256xf32> to vector<4x256xf32>
    %131 = arith.mulf %129, %130 : vector<4x256xf32>
    %c15 = arith.constant 15 : index
    %c0_85 = arith.constant 0 : index
    %c0_86 = arith.constant 0 : index
    %132 = vector.load %arg2[%c15, %c0_85, %c0_86] : memref<36x4x4xf32, #tpu.memory_space<vmem>>, vector<1x4x4xf32>
    %133 = vector.shape_cast %132 : vector<1x4x4xf32> to vector<4x4xf32>
    %cst_87 = arith.constant dense<0.000000e+00> : vector<4x256xf32>
    %134 = tpu.matmul %133, %131, %cst_87 {dimension_numbers = #tpu.dot_dimension_numbers<[1], [0], [0], [1], [0, 0, 1, 1], [], []>} : vector<4x4xf32>, vector<4x256xf32>, vector<4x256xf32> -> vector<4x256xf32>
    %135 = arith.addf %128, %134 : vector<4x256xf32>
    %c240_i32_88 = arith.constant 240 : i32
    %136 = tpu.dynamic_rotate %88 by %c240_i32_88 dim 1 : vector<4x256xf32>, i32 -> vector<4x256xf32>
    %137 = vector.broadcast %13 : vector<1x256xf32> to vector<4x256xf32>
    %138 = arith.mulf %136, %137 : vector<4x256xf32>
    %c16 = arith.constant 16 : index
    %c0_89 = arith.constant 0 : index
    %c0_90 = arith.constant 0 : index
    %139 = vector.load %arg2[%c16, %c0_89, %c0_90] : memref<36x4x4xf32, #tpu.memory_space<vmem>>, vector<1x4x4xf32>
    %140 = vector.shape_cast %139 : vector<1x4x4xf32> to vector<4x4xf32>
    %cst_91 = arith.constant dense<0.000000e+00> : vector<4x256xf32>
    %141 = tpu.matmul %140, %138, %cst_91 {dimension_numbers = #tpu.dot_dimension_numbers<[1], [0], [0], [1], [0, 0, 1, 1], [], []>} : vector<4x4xf32>, vector<4x256xf32>, vector<4x256xf32> -> vector<4x256xf32>
    %142 = arith.addf %135, %141 : vector<4x256xf32>
    %c239_i32_92 = arith.constant 239 : i32
    %143 = tpu.dynamic_rotate %88 by %c239_i32_92 dim 1 : vector<4x256xf32>, i32 -> vector<4x256xf32>
    %144 = vector.broadcast %15 : vector<1x256xf32> to vector<4x256xf32>
    %145 = arith.mulf %143, %144 : vector<4x256xf32>
    %c17 = arith.constant 17 : index
    %c0_93 = arith.constant 0 : index
    %c0_94 = arith.constant 0 : index
    %146 = vector.load %arg2[%c17, %c0_93, %c0_94] : memref<36x4x4xf32, #tpu.memory_space<vmem>>, vector<1x4x4xf32>
    %147 = vector.shape_cast %146 : vector<1x4x4xf32> to vector<4x4xf32>
    %cst_95 = arith.constant dense<0.000000e+00> : vector<4x256xf32>
    %148 = tpu.matmul %147, %145, %cst_95 {dimension_numbers = #tpu.dot_dimension_numbers<[1], [0], [0], [1], [0, 0, 1, 1], [], []>} : vector<4x4xf32>, vector<4x256xf32>, vector<4x256xf32> -> vector<4x256xf32>
    %149 = arith.addf %142, %148 : vector<4x256xf32>
    %c1_96 = arith.constant 1 : index
    %c0_97 = arith.constant 0 : index
    %c0_98 = arith.constant 0 : index
    %150 = vector.load %arg3[%c1_96, %c0_97, %c0_98] : memref<4x4x1xf32, #tpu.memory_space<vmem>>, vector<1x4x1xf32>
    %151 = vector.shape_cast %150 : vector<1x4x1xf32> to vector<4x1xf32>
    %152 = vector.broadcast %151 : vector<4x1xf32> to vector<4x256xf32>
    %153 = arith.mulf %149, %152 : vector<4x256xf32>
    %c1_99 = arith.constant 1 : index
    %c0_100 = arith.constant 0 : index
    %c0_101 = arith.constant 0 : index
    %154 = vector.load %arg4[%c1_99, %c0_100, %c0_101] : memref<4x4x1xf32, #tpu.memory_space<vmem>>, vector<1x4x1xf32>
    %155 = vector.shape_cast %154 : vector<1x4x1xf32> to vector<4x1xf32>
    %156 = vector.broadcast %155 : vector<4x1xf32> to vector<4x256xf32>
    %157 = arith.addf %153, %156 : vector<4x256xf32>
    %cst_102 = arith.constant 0.000000e+00 : f32
    %158 = vector.broadcast %cst_102 : f32 to vector<4x256xf32>
    %159 = arith.maximumf %157, %158 : vector<4x256xf32>
    %160 = arith.addf %89, %88 : vector<4x256xf32>
    %c17_i32_103 = arith.constant 17 : i32
    %161 = tpu.dynamic_rotate %159 by %c17_i32_103 dim 1 : vector<4x256xf32>, i32 -> vector<4x256xf32>
    %162 = vector.broadcast %1 : vector<1x256xf32> to vector<4x256xf32>
    %163 = arith.mulf %161, %162 : vector<4x256xf32>
    %c18 = arith.constant 18 : index
    %c0_104 = arith.constant 0 : index
    %c0_105 = arith.constant 0 : index
    %164 = vector.load %arg2[%c18, %c0_104, %c0_105] : memref<36x4x4xf32, #tpu.memory_space<vmem>>, vector<1x4x4xf32>
    %165 = vector.shape_cast %164 : vector<1x4x4xf32> to vector<4x4xf32>
    %cst_106 = arith.constant dense<0.000000e+00> : vector<4x256xf32>
    %166 = tpu.matmul %165, %163, %cst_106 {dimension_numbers = #tpu.dot_dimension_numbers<[1], [0], [0], [1], [0, 0, 1, 1], [], []>} : vector<4x4xf32>, vector<4x256xf32>, vector<4x256xf32> -> vector<4x256xf32>
    %167 = arith.addf %160, %166 : vector<4x256xf32>
    %c16_i32_107 = arith.constant 16 : i32
    %168 = tpu.dynamic_rotate %159 by %c16_i32_107 dim 1 : vector<4x256xf32>, i32 -> vector<4x256xf32>
    %169 = vector.broadcast %3 : vector<1x256xf32> to vector<4x256xf32>
    %170 = arith.mulf %168, %169 : vector<4x256xf32>
    %c19 = arith.constant 19 : index
    %c0_108 = arith.constant 0 : index
    %c0_109 = arith.constant 0 : index
    %171 = vector.load %arg2[%c19, %c0_108, %c0_109] : memref<36x4x4xf32, #tpu.memory_space<vmem>>, vector<1x4x4xf32>
    %172 = vector.shape_cast %171 : vector<1x4x4xf32> to vector<4x4xf32>
    %cst_110 = arith.constant dense<0.000000e+00> : vector<4x256xf32>
    %173 = tpu.matmul %172, %170, %cst_110 {dimension_numbers = #tpu.dot_dimension_numbers<[1], [0], [0], [1], [0, 0, 1, 1], [], []>} : vector<4x4xf32>, vector<4x256xf32>, vector<4x256xf32> -> vector<4x256xf32>
    %174 = arith.addf %167, %173 : vector<4x256xf32>
    %c15_i32_111 = arith.constant 15 : i32
    %175 = tpu.dynamic_rotate %159 by %c15_i32_111 dim 1 : vector<4x256xf32>, i32 -> vector<4x256xf32>
    %176 = vector.broadcast %5 : vector<1x256xf32> to vector<4x256xf32>
    %177 = arith.mulf %175, %176 : vector<4x256xf32>
    %c20 = arith.constant 20 : index
    %c0_112 = arith.constant 0 : index
    %c0_113 = arith.constant 0 : index
    %178 = vector.load %arg2[%c20, %c0_112, %c0_113] : memref<36x4x4xf32, #tpu.memory_space<vmem>>, vector<1x4x4xf32>
    %179 = vector.shape_cast %178 : vector<1x4x4xf32> to vector<4x4xf32>
    %cst_114 = arith.constant dense<0.000000e+00> : vector<4x256xf32>
    %180 = tpu.matmul %179, %177, %cst_114 {dimension_numbers = #tpu.dot_dimension_numbers<[1], [0], [0], [1], [0, 0, 1, 1], [], []>} : vector<4x4xf32>, vector<4x256xf32>, vector<4x256xf32> -> vector<4x256xf32>
    %181 = arith.addf %174, %180 : vector<4x256xf32>
    %c1_i32_115 = arith.constant 1 : i32
    %182 = tpu.dynamic_rotate %159 by %c1_i32_115 dim 1 : vector<4x256xf32>, i32 -> vector<4x256xf32>
    %183 = vector.broadcast %7 : vector<1x256xf32> to vector<4x256xf32>
    %184 = arith.mulf %182, %183 : vector<4x256xf32>
    %c21 = arith.constant 21 : index
    %c0_116 = arith.constant 0 : index
    %c0_117 = arith.constant 0 : index
    %185 = vector.load %arg2[%c21, %c0_116, %c0_117] : memref<36x4x4xf32, #tpu.memory_space<vmem>>, vector<1x4x4xf32>
    %186 = vector.shape_cast %185 : vector<1x4x4xf32> to vector<4x4xf32>
    %cst_118 = arith.constant dense<0.000000e+00> : vector<4x256xf32>
    %187 = tpu.matmul %186, %184, %cst_118 {dimension_numbers = #tpu.dot_dimension_numbers<[1], [0], [0], [1], [0, 0, 1, 1], [], []>} : vector<4x4xf32>, vector<4x256xf32>, vector<4x256xf32> -> vector<4x256xf32>
    %188 = arith.addf %181, %187 : vector<4x256xf32>
    %c22 = arith.constant 22 : index
    %c0_119 = arith.constant 0 : index
    %c0_120 = arith.constant 0 : index
    %189 = vector.load %arg2[%c22, %c0_119, %c0_120] : memref<36x4x4xf32, #tpu.memory_space<vmem>>, vector<1x4x4xf32>
    %190 = vector.shape_cast %189 : vector<1x4x4xf32> to vector<4x4xf32>
    %cst_121 = arith.constant dense<0.000000e+00> : vector<4x256xf32>
    %191 = tpu.matmul %190, %159, %cst_121 {dimension_numbers = #tpu.dot_dimension_numbers<[1], [0], [0], [1], [0, 0, 1, 1], [], []>} : vector<4x4xf32>, vector<4x256xf32>, vector<4x256xf32> -> vector<4x256xf32>
    %192 = arith.addf %188, %191 : vector<4x256xf32>
    %c255_i32_122 = arith.constant 255 : i32
    %193 = tpu.dynamic_rotate %159 by %c255_i32_122 dim 1 : vector<4x256xf32>, i32 -> vector<4x256xf32>
    %194 = vector.broadcast %9 : vector<1x256xf32> to vector<4x256xf32>
    %195 = arith.mulf %193, %194 : vector<4x256xf32>
    %c23 = arith.constant 23 : index
    %c0_123 = arith.constant 0 : index
    %c0_124 = arith.constant 0 : index
    %196 = vector.load %arg2[%c23, %c0_123, %c0_124] : memref<36x4x4xf32, #tpu.memory_space<vmem>>, vector<1x4x4xf32>
    %197 = vector.shape_cast %196 : vector<1x4x4xf32> to vector<4x4xf32>
    %cst_125 = arith.constant dense<0.000000e+00> : vector<4x256xf32>
    %198 = tpu.matmul %197, %195, %cst_125 {dimension_numbers = #tpu.dot_dimension_numbers<[1], [0], [0], [1], [0, 0, 1, 1], [], []>} : vector<4x4xf32>, vector<4x256xf32>, vector<4x256xf32> -> vector<4x256xf32>
    %199 = arith.addf %192, %198 : vector<4x256xf32>
    %c241_i32_126 = arith.constant 241 : i32
    %200 = tpu.dynamic_rotate %159 by %c241_i32_126 dim 1 : vector<4x256xf32>, i32 -> vector<4x256xf32>
    %201 = vector.broadcast %11 : vector<1x256xf32> to vector<4x256xf32>
    %202 = arith.mulf %200, %201 : vector<4x256xf32>
    %c24 = arith.constant 24 : index
    %c0_127 = arith.constant 0 : index
    %c0_128 = arith.constant 0 : index
    %203 = vector.load %arg2[%c24, %c0_127, %c0_128] : memref<36x4x4xf32, #tpu.memory_space<vmem>>, vector<1x4x4xf32>
    %204 = vector.shape_cast %203 : vector<1x4x4xf32> to vector<4x4xf32>
    %cst_129 = arith.constant dense<0.000000e+00> : vector<4x256xf32>
    %205 = tpu.matmul %204, %202, %cst_129 {dimension_numbers = #tpu.dot_dimension_numbers<[1], [0], [0], [1], [0, 0, 1, 1], [], []>} : vector<4x4xf32>, vector<4x256xf32>, vector<4x256xf32> -> vector<4x256xf32>
    %206 = arith.addf %199, %205 : vector<4x256xf32>
    %c240_i32_130 = arith.constant 240 : i32
    %207 = tpu.dynamic_rotate %159 by %c240_i32_130 dim 1 : vector<4x256xf32>, i32 -> vector<4x256xf32>
    %208 = vector.broadcast %13 : vector<1x256xf32> to vector<4x256xf32>
    %209 = arith.mulf %207, %208 : vector<4x256xf32>
    %c25 = arith.constant 25 : index
    %c0_131 = arith.constant 0 : index
    %c0_132 = arith.constant 0 : index
    %210 = vector.load %arg2[%c25, %c0_131, %c0_132] : memref<36x4x4xf32, #tpu.memory_space<vmem>>, vector<1x4x4xf32>
    %211 = vector.shape_cast %210 : vector<1x4x4xf32> to vector<4x4xf32>
    %cst_133 = arith.constant dense<0.000000e+00> : vector<4x256xf32>
    %212 = tpu.matmul %211, %209, %cst_133 {dimension_numbers = #tpu.dot_dimension_numbers<[1], [0], [0], [1], [0, 0, 1, 1], [], []>} : vector<4x4xf32>, vector<4x256xf32>, vector<4x256xf32> -> vector<4x256xf32>
    %213 = arith.addf %206, %212 : vector<4x256xf32>
    %c239_i32_134 = arith.constant 239 : i32
    %214 = tpu.dynamic_rotate %159 by %c239_i32_134 dim 1 : vector<4x256xf32>, i32 -> vector<4x256xf32>
    %215 = vector.broadcast %15 : vector<1x256xf32> to vector<4x256xf32>
    %216 = arith.mulf %214, %215 : vector<4x256xf32>
    %c26 = arith.constant 26 : index
    %c0_135 = arith.constant 0 : index
    %c0_136 = arith.constant 0 : index
    %217 = vector.load %arg2[%c26, %c0_135, %c0_136] : memref<36x4x4xf32, #tpu.memory_space<vmem>>, vector<1x4x4xf32>
    %218 = vector.shape_cast %217 : vector<1x4x4xf32> to vector<4x4xf32>
    %cst_137 = arith.constant dense<0.000000e+00> : vector<4x256xf32>
    %219 = tpu.matmul %218, %216, %cst_137 {dimension_numbers = #tpu.dot_dimension_numbers<[1], [0], [0], [1], [0, 0, 1, 1], [], []>} : vector<4x4xf32>, vector<4x256xf32>, vector<4x256xf32> -> vector<4x256xf32>
    %220 = arith.addf %213, %219 : vector<4x256xf32>
    %c2_138 = arith.constant 2 : index
    %c0_139 = arith.constant 0 : index
    %c0_140 = arith.constant 0 : index
    %221 = vector.load %arg3[%c2_138, %c0_139, %c0_140] : memref<4x4x1xf32, #tpu.memory_space<vmem>>, vector<1x4x1xf32>
    %222 = vector.shape_cast %221 : vector<1x4x1xf32> to vector<4x1xf32>
    %223 = vector.broadcast %222 : vector<4x1xf32> to vector<4x256xf32>
    %224 = arith.mulf %220, %223 : vector<4x256xf32>
    %c2_141 = arith.constant 2 : index
    %c0_142 = arith.constant 0 : index
    %c0_143 = arith.constant 0 : index
    %225 = vector.load %arg4[%c2_141, %c0_142, %c0_143] : memref<4x4x1xf32, #tpu.memory_space<vmem>>, vector<1x4x1xf32>
    %226 = vector.shape_cast %225 : vector<1x4x1xf32> to vector<4x1xf32>
    %227 = vector.broadcast %226 : vector<4x1xf32> to vector<4x256xf32>
    %228 = arith.addf %224, %227 : vector<4x256xf32>
    %cst_144 = arith.constant 0.000000e+00 : f32
    %229 = vector.broadcast %cst_144 : f32 to vector<4x256xf32>
    %230 = arith.maximumf %228, %229 : vector<4x256xf32>
    %231 = arith.addf %160, %159 : vector<4x256xf32>
    %c17_i32_145 = arith.constant 17 : i32
    %232 = tpu.dynamic_rotate %230 by %c17_i32_145 dim 1 : vector<4x256xf32>, i32 -> vector<4x256xf32>
    %233 = vector.broadcast %1 : vector<1x256xf32> to vector<4x256xf32>
    %234 = arith.mulf %232, %233 : vector<4x256xf32>
    %c27 = arith.constant 27 : index
    %c0_146 = arith.constant 0 : index
    %c0_147 = arith.constant 0 : index
    %235 = vector.load %arg2[%c27, %c0_146, %c0_147] : memref<36x4x4xf32, #tpu.memory_space<vmem>>, vector<1x4x4xf32>
    %236 = vector.shape_cast %235 : vector<1x4x4xf32> to vector<4x4xf32>
    %cst_148 = arith.constant dense<0.000000e+00> : vector<4x256xf32>
    %237 = tpu.matmul %236, %234, %cst_148 {dimension_numbers = #tpu.dot_dimension_numbers<[1], [0], [0], [1], [0, 0, 1, 1], [], []>} : vector<4x4xf32>, vector<4x256xf32>, vector<4x256xf32> -> vector<4x256xf32>
    %238 = arith.addf %231, %237 : vector<4x256xf32>
    %c16_i32_149 = arith.constant 16 : i32
    %239 = tpu.dynamic_rotate %230 by %c16_i32_149 dim 1 : vector<4x256xf32>, i32 -> vector<4x256xf32>
    %240 = vector.broadcast %3 : vector<1x256xf32> to vector<4x256xf32>
    %241 = arith.mulf %239, %240 : vector<4x256xf32>
    %c28 = arith.constant 28 : index
    %c0_150 = arith.constant 0 : index
    %c0_151 = arith.constant 0 : index
    %242 = vector.load %arg2[%c28, %c0_150, %c0_151] : memref<36x4x4xf32, #tpu.memory_space<vmem>>, vector<1x4x4xf32>
    %243 = vector.shape_cast %242 : vector<1x4x4xf32> to vector<4x4xf32>
    %cst_152 = arith.constant dense<0.000000e+00> : vector<4x256xf32>
    %244 = tpu.matmul %243, %241, %cst_152 {dimension_numbers = #tpu.dot_dimension_numbers<[1], [0], [0], [1], [0, 0, 1, 1], [], []>} : vector<4x4xf32>, vector<4x256xf32>, vector<4x256xf32> -> vector<4x256xf32>
    %245 = arith.addf %238, %244 : vector<4x256xf32>
    %c15_i32_153 = arith.constant 15 : i32
    %246 = tpu.dynamic_rotate %230 by %c15_i32_153 dim 1 : vector<4x256xf32>, i32 -> vector<4x256xf32>
    %247 = vector.broadcast %5 : vector<1x256xf32> to vector<4x256xf32>
    %248 = arith.mulf %246, %247 : vector<4x256xf32>
    %c29 = arith.constant 29 : index
    %c0_154 = arith.constant 0 : index
    %c0_155 = arith.constant 0 : index
    %249 = vector.load %arg2[%c29, %c0_154, %c0_155] : memref<36x4x4xf32, #tpu.memory_space<vmem>>, vector<1x4x4xf32>
    %250 = vector.shape_cast %249 : vector<1x4x4xf32> to vector<4x4xf32>
    %cst_156 = arith.constant dense<0.000000e+00> : vector<4x256xf32>
    %251 = tpu.matmul %250, %248, %cst_156 {dimension_numbers = #tpu.dot_dimension_numbers<[1], [0], [0], [1], [0, 0, 1, 1], [], []>} : vector<4x4xf32>, vector<4x256xf32>, vector<4x256xf32> -> vector<4x256xf32>
    %252 = arith.addf %245, %251 : vector<4x256xf32>
    %c1_i32_157 = arith.constant 1 : i32
    %253 = tpu.dynamic_rotate %230 by %c1_i32_157 dim 1 : vector<4x256xf32>, i32 -> vector<4x256xf32>
    %254 = vector.broadcast %7 : vector<1x256xf32> to vector<4x256xf32>
    %255 = arith.mulf %253, %254 : vector<4x256xf32>
    %c30 = arith.constant 30 : index
    %c0_158 = arith.constant 0 : index
    %c0_159 = arith.constant 0 : index
    %256 = vector.load %arg2[%c30, %c0_158, %c0_159] : memref<36x4x4xf32, #tpu.memory_space<vmem>>, vector<1x4x4xf32>
    %257 = vector.shape_cast %256 : vector<1x4x4xf32> to vector<4x4xf32>
    %cst_160 = arith.constant dense<0.000000e+00> : vector<4x256xf32>
    %258 = tpu.matmul %257, %255, %cst_160 {dimension_numbers = #tpu.dot_dimension_numbers<[1], [0], [0], [1], [0, 0, 1, 1], [], []>} : vector<4x4xf32>, vector<4x256xf32>, vector<4x256xf32> -> vector<4x256xf32>
    %259 = arith.addf %252, %258 : vector<4x256xf32>
    %c31 = arith.constant 31 : index
    %c0_161 = arith.constant 0 : index
    %c0_162 = arith.constant 0 : index
    %260 = vector.load %arg2[%c31, %c0_161, %c0_162] : memref<36x4x4xf32, #tpu.memory_space<vmem>>, vector<1x4x4xf32>
    %261 = vector.shape_cast %260 : vector<1x4x4xf32> to vector<4x4xf32>
    %cst_163 = arith.constant dense<0.000000e+00> : vector<4x256xf32>
    %262 = tpu.matmul %261, %230, %cst_163 {dimension_numbers = #tpu.dot_dimension_numbers<[1], [0], [0], [1], [0, 0, 1, 1], [], []>} : vector<4x4xf32>, vector<4x256xf32>, vector<4x256xf32> -> vector<4x256xf32>
    %263 = arith.addf %259, %262 : vector<4x256xf32>
    %c255_i32_164 = arith.constant 255 : i32
    %264 = tpu.dynamic_rotate %230 by %c255_i32_164 dim 1 : vector<4x256xf32>, i32 -> vector<4x256xf32>
    %265 = vector.broadcast %9 : vector<1x256xf32> to vector<4x256xf32>
    %266 = arith.mulf %264, %265 : vector<4x256xf32>
    %c32 = arith.constant 32 : index
    %c0_165 = arith.constant 0 : index
    %c0_166 = arith.constant 0 : index
    %267 = vector.load %arg2[%c32, %c0_165, %c0_166] : memref<36x4x4xf32, #tpu.memory_space<vmem>>, vector<1x4x4xf32>
    %268 = vector.shape_cast %267 : vector<1x4x4xf32> to vector<4x4xf32>
    %cst_167 = arith.constant dense<0.000000e+00> : vector<4x256xf32>
    %269 = tpu.matmul %268, %266, %cst_167 {dimension_numbers = #tpu.dot_dimension_numbers<[1], [0], [0], [1], [0, 0, 1, 1], [], []>} : vector<4x4xf32>, vector<4x256xf32>, vector<4x256xf32> -> vector<4x256xf32>
    %270 = arith.addf %263, %269 : vector<4x256xf32>
    %c241_i32_168 = arith.constant 241 : i32
    %271 = tpu.dynamic_rotate %230 by %c241_i32_168 dim 1 : vector<4x256xf32>, i32 -> vector<4x256xf32>
    %272 = vector.broadcast %11 : vector<1x256xf32> to vector<4x256xf32>
    %273 = arith.mulf %271, %272 : vector<4x256xf32>
    %c33 = arith.constant 33 : index
    %c0_169 = arith.constant 0 : index
    %c0_170 = arith.constant 0 : index
    %274 = vector.load %arg2[%c33, %c0_169, %c0_170] : memref<36x4x4xf32, #tpu.memory_space<vmem>>, vector<1x4x4xf32>
    %275 = vector.shape_cast %274 : vector<1x4x4xf32> to vector<4x4xf32>
    %cst_171 = arith.constant dense<0.000000e+00> : vector<4x256xf32>
    %276 = tpu.matmul %275, %273, %cst_171 {dimension_numbers = #tpu.dot_dimension_numbers<[1], [0], [0], [1], [0, 0, 1, 1], [], []>} : vector<4x4xf32>, vector<4x256xf32>, vector<4x256xf32> -> vector<4x256xf32>
    %277 = arith.addf %270, %276 : vector<4x256xf32>
    %c240_i32_172 = arith.constant 240 : i32
    %278 = tpu.dynamic_rotate %230 by %c240_i32_172 dim 1 : vector<4x256xf32>, i32 -> vector<4x256xf32>
    %279 = vector.broadcast %13 : vector<1x256xf32> to vector<4x256xf32>
    %280 = arith.mulf %278, %279 : vector<4x256xf32>
    %c34 = arith.constant 34 : index
    %c0_173 = arith.constant 0 : index
    %c0_174 = arith.constant 0 : index
    %281 = vector.load %arg2[%c34, %c0_173, %c0_174] : memref<36x4x4xf32, #tpu.memory_space<vmem>>, vector<1x4x4xf32>
    %282 = vector.shape_cast %281 : vector<1x4x4xf32> to vector<4x4xf32>
    %cst_175 = arith.constant dense<0.000000e+00> : vector<4x256xf32>
    %283 = tpu.matmul %282, %280, %cst_175 {dimension_numbers = #tpu.dot_dimension_numbers<[1], [0], [0], [1], [0, 0, 1, 1], [], []>} : vector<4x4xf32>, vector<4x256xf32>, vector<4x256xf32> -> vector<4x256xf32>
    %284 = arith.addf %277, %283 : vector<4x256xf32>
    %c239_i32_176 = arith.constant 239 : i32
    %285 = tpu.dynamic_rotate %230 by %c239_i32_176 dim 1 : vector<4x256xf32>, i32 -> vector<4x256xf32>
    %286 = vector.broadcast %15 : vector<1x256xf32> to vector<4x256xf32>
    %287 = arith.mulf %285, %286 : vector<4x256xf32>
    %c35 = arith.constant 35 : index
    %c0_177 = arith.constant 0 : index
    %c0_178 = arith.constant 0 : index
    %288 = vector.load %arg2[%c35, %c0_177, %c0_178] : memref<36x4x4xf32, #tpu.memory_space<vmem>>, vector<1x4x4xf32>
    %289 = vector.shape_cast %288 : vector<1x4x4xf32> to vector<4x4xf32>
    %cst_179 = arith.constant dense<0.000000e+00> : vector<4x256xf32>
    %290 = tpu.matmul %289, %287, %cst_179 {dimension_numbers = #tpu.dot_dimension_numbers<[1], [0], [0], [1], [0, 0, 1, 1], [], []>} : vector<4x4xf32>, vector<4x256xf32>, vector<4x256xf32> -> vector<4x256xf32>
    %291 = arith.addf %284, %290 : vector<4x256xf32>
    %c3_180 = arith.constant 3 : index
    %c0_181 = arith.constant 0 : index
    %c0_182 = arith.constant 0 : index
    %292 = vector.load %arg3[%c3_180, %c0_181, %c0_182] : memref<4x4x1xf32, #tpu.memory_space<vmem>>, vector<1x4x1xf32>
    %293 = vector.shape_cast %292 : vector<1x4x1xf32> to vector<4x1xf32>
    %294 = vector.broadcast %293 : vector<4x1xf32> to vector<4x256xf32>
    %295 = arith.mulf %291, %294 : vector<4x256xf32>
    %c3_183 = arith.constant 3 : index
    %c0_184 = arith.constant 0 : index
    %c0_185 = arith.constant 0 : index
    %296 = vector.load %arg4[%c3_183, %c0_184, %c0_185] : memref<4x4x1xf32, #tpu.memory_space<vmem>>, vector<1x4x1xf32>
    %297 = vector.shape_cast %296 : vector<1x4x1xf32> to vector<4x1xf32>
    %298 = vector.broadcast %297 : vector<4x1xf32> to vector<4x256xf32>
    %299 = arith.addf %295, %298 : vector<4x256xf32>
    %cst_186 = arith.constant 0.000000e+00 : f32
    %300 = vector.broadcast %cst_186 : f32 to vector<4x256xf32>
    %301 = arith.maximumf %299, %300 : vector<4x256xf32>
    %c0_187 = arith.constant 0 : index
    %c0_188 = arith.constant 0 : index
    %c0_189 = arith.constant 0 : index
    %302 = vector.load %arg6[%c0_187, %c0_188, %c0_189] : memref<1x4x256xf32, #tpu.memory_space<vmem>>, vector<1x4x256xf32>
    %303 = vector.shape_cast %302 : vector<1x4x256xf32> to vector<4x256xf32>
    %304 = vector.shape_cast %301 : vector<4x256xf32> to vector<1x4x256xf32>
    tpu.vector_store %arg6[%c0_187, %c0_188, %c0_189], %304 {strides = array<i32>} : memref<1x4x256xf32, #tpu.memory_space<vmem>>, vector<1x4x256xf32>,
    return
  }
  func.func @transform_0(%arg0: i32) -> (i32, i32, i32) {
    %c0_i32 = arith.constant 0 : i32
    %c0_i32_0 = arith.constant 0 : i32
    %c0_i32_1 = arith.constant 0 : i32
    return %arg0, %c0_i32, %c0_i32_0 : i32, i32, i32
  }
  func.func @transform_1(%arg0: i32) -> (i32, i32, i32) {
    %c0_i32 = arith.constant 0 : i32
    %c0_i32_0 = arith.constant 0 : i32
    %c0_i32_1 = arith.constant 0 : i32
    %c0_i32_2 = arith.constant 0 : i32
    return %c0_i32, %c0_i32_0, %c0_i32_1 : i32, i32, i32
  }
  func.func @transform_2(%arg0: i32) -> (i32, i32, i32) {
    %c0_i32 = arith.constant 0 : i32
    %c0_i32_0 = arith.constant 0 : i32
    %c0_i32_1 = arith.constant 0 : i32
    %c0_i32_2 = arith.constant 0 : i32
    return %c0_i32, %c0_i32_0, %c0_i32_1 : i32, i32, i32
  }
  func.func @transform_3(%arg0: i32) -> (i32, i32, i32) {
    %c0_i32 = arith.constant 0 : i32
    %c0_i32_0 = arith.constant 0 : i32
    %c0_i32_1 = arith.constant 0 : i32
    %c0_i32_2 = arith.constant 0 : i32
    return %c0_i32, %c0_i32_0, %c0_i32_1 : i32, i32, i32
  }
  func.func @transform_4(%arg0: i32) -> (i32, i32, i32) {
    %c0_i32 = arith.constant 0 : i32
    %c0_i32_0 = arith.constant 0 : i32
    %c0_i32_1 = arith.constant 0 : i32
    %c0_i32_2 = arith.constant 0 : i32
    return %c0_i32, %c0_i32_0, %c0_i32_1 : i32, i32, i32
  }
  func.func @transform_5(%arg0: i32) -> (i32, i32, i32) {
    %c0_i32 = arith.constant 0 : i32
    %c0_i32_0 = arith.constant 0 : i32
    %c0_i32_1 = arith.constant 0 : i32
    return %arg0, %c0_i32, %c0_i32_0 : i32, i32, i32
  }
}

</mosaic_0001>

<llo_original>
// kernel: single_level_densenet_forward.1
$region0: #{single_level_densenet_forward.1}
  #allocation0 [shape = 'u32[]', space=smem, size = 0x4, offset = 0x4, fixed_abs, tag = 'smem constant byte address 0x4 - core index']
  #allocation1 [shape = 'u32[144,128]{1,0:T(1,128)}', space=vmem, size = 0x12000, scoped, tag = 'internal scratch']
  %s0 = inlined_call_operand.vmem [shape: f32[2,4,256], index: 0, kind: input, shape index: {}]
  %s1 = inlined_call_operand.vmem [shape: f32[36,4,4], index: 1, kind: input, shape index: {}]
  %s2 = inlined_call_operand.vmem [shape: f32[4,4,1], index: 2, kind: input, shape index: {}]
  %s3 = inlined_call_operand.vmem [shape: f32[4,4,1], index: 3, kind: input, shape index: {}]
  %s4 = inlined_call_operand.vmem [shape: f32[9,1,256], index: 4, kind: input, shape index: {}]
  %s5 = inlined_call_operand.vmem [shape: f32[2,4,256], index: 5, kind: output, shape index: {}]
  %s6 = sld [smem:[#allocation0]]
  $region53: #{single_level_densenet_forward.1} parent=0
    _
  %s8 = ssub.s32 1, %s6
  %s9 = scalar_select 0, %s8, %s6
  loop: start=0, step=1, limit=4
  $region2: #{single_level_densenet_forward.1} parent=0 // loop_pre_header
    _
  $region3: #{single_level_densenet_forward.1} parent=0 // loop_header
    %s11 = sphi 0, %s15
    %p12 = scmp.ge.s32.totalorder %s11, 4
    %s21 = sphi 0, %s23
    %s24 = sphi 0, %s21
    %s25 = sphi 0, %s24
    %s41 = sphi 0, %s25
    %s45 = sphi 0, %s45
    %s47 = sphi 0, %s45
    %s48 = sphi 0, %s47
    %s62 = sphi 0, %s48
    %s66 = sphi 0, %s66
    %s68 = sphi 0, %s66
    %s69 = sphi 0, %s68
    %s83 = sphi 0, %s69
    %s87 = sphi 0, %s87
    %s89 = sphi 0, %s87
    %s90 = sphi 0, %s89
    %s104 = sphi 0, %s90
    %s108 = sphi 0, %s108
    %s110 = sphi 0, %s108
    %s111 = sphi 0, %s110
    %s125 = sphi 0, %s111
    %s131 = sphi 0, %s133
    %s134 = sphi 0, %s131
    %s135 = sphi 0, %s134
    %s151 = sphi 0, %s135
  $region4: #{single_level_densenet_forward.1} parent=0 // loop_header_branch
    %14 = sbr.rel (%p12) target = $region8
  $region5: #{single_level_densenet_forward.1} parent=0 // loop_body
    %s16 = ssub.s32 %s11, 1
    %s17 = ssub.s32 %s11, 2
    %s18 = sadd.s32 %s11, 1
    %s19 = ssub.s32 %s11, %s18
    %p20 = scmp.eq.s32.totalorder %s19, 0
    %s22 = sadd.s32 %s21, 1
    %s23 = scalar_select %p20, %s21, %s22
    %p26 = pneg %p20
    %p27 = scmp.eq.s32.totalorder %s11, 1
    %p28 = por %p26, %p27
    %p29 = scmp.ne.s32.totalorder %s21, %s24
    %p30 = scmp.eq.s32.totalorder %s11, 0
    %p31 = por %p29, %p30
    %p32 = scmp.ne.s32.totalorder %s21, %s24
    %p33 = scmp.eq.s32.totalorder %s16, 1
    %p34 = por %p32, %p33
    %p35 = scmp.ne.s32.totalorder %s24, %s25
    %p36 = scmp.eq.s32.totalorder %s16, 0
    %p37 = por %p35, %p36
    %p38 = scmp.ne.s32.totalorder %s24, %s25
    %p39 = scmp.eq.s32.totalorder %s17, 1
    %p40 = por %p38, %p39
    %p42 = scmp.ne.s32.totalorder %s25, %s41
    %p43 = scmp.eq.s32.totalorder %s17, 0
    %p44 = por %p42, %p43
    %s46 = sadd.s32 %s45, 1
    %p49 = scmp.eq.s32.totalorder %s11, 1
    %p50 = scmp.ne.s32.totalorder %s45, %s47
    %p51 = scmp.eq.s32.totalorder %s11, 0
    %p52 = por %p50, %p51
    %p53 = scmp.ne.s32.totalorder %s45, %s47
    %p54 = scmp.eq.s32.totalorder %s16, 1
    %p55 = por %p53, %p54
    %p56 = scmp.ne.s32.totalorder %s47, %s48
    %p57 = scmp.eq.s32.totalorder %s16, 0
    %p58 = por %p56, %p57
    %p59 = scmp.ne.s32.totalorder %s47, %s48
    %p60 = scmp.eq.s32.totalorder %s17, 1
    %p61 = por %p59, %p60
    %p63 = scmp.ne.s32.totalorder %s48, %s62
    %p64 = scmp.eq.s32.totalorder %s17, 0
    %p65 = por %p63, %p64
    %s67 = sadd.s32 %s66, 1
    %p70 = scmp.eq.s32.totalorder %s11, 1
    %p71 = scmp.ne.s32.totalorder %s66, %s68
    %p72 = scmp.eq.s32.totalorder %s11, 0
    %p73 = por %p71, %p72
    %p74 = scmp.ne.s32.totalorder %s66, %s68
    %p75 = scmp.eq.s32.totalorder %s16, 1
    %p76 = por %p74, %p75
    %p77 = scmp.ne.s32.totalorder %s68, %s69
    %p78 = scmp.eq.s32.totalorder %s16, 0
    %p79 = por %p77, %p78
    %p80 = scmp.ne.s32.totalorder %s68, %s69
    %p81 = scmp.eq.s32.totalorder %s17, 1
    %p82 = por %p80, %p81
    %p84 = scmp.ne.s32.totalorder %s69, %s83
    %p85 = scmp.eq.s32.totalorder %s17, 0
    %p86 = por %p84, %p85
    %s88 = sadd.s32 %s87, 1
    %p91 = scmp.eq.s32.totalorder %s11, 1
    %p92 = scmp.ne.s32.totalorder %s87, %s89
    %p93 = scmp.eq.s32.totalorder %s11, 0
    %p94 = por %p92, %p93
    %p95 = scmp.ne.s32.totalorder %s87, %s89
    %p96 = scmp.eq.s32.totalorder %s16, 1
    %p97 = por %p95, %p96
    %p98 = scmp.ne.s32.totalorder %s89, %s90
    %p99 = scmp.eq.s32.totalorder %s16, 0
    %p100 = por %p98, %p99
    %p101 = scmp.ne.s32.totalorder %s89, %s90
    %p102 = scmp.eq.s32.totalorder %s17, 1
    %p103 = por %p101, %p102
    %p105 = scmp.ne.s32.totalorder %s90, %s104
    %p106 = scmp.eq.s32.totalorder %s17, 0
    %p107 = por %p105, %p106
    %s109 = sadd.s32 %s108, 1
    %p112 = scmp.eq.s32.totalorder %s11, 1
    %p113 = scmp.ne.s32.totalorder %s108, %s110
    %p114 = scmp.eq.s32.totalorder %s11, 0
    %p115 = por %p113, %p114
    %p116 = scmp.ne.s32.totalorder %s108, %s110
    %p117 = scmp.eq.s32.totalorder %s16, 1
    %p118 = por %p116, %p117
    %p119 = scmp.ne.s32.totalorder %s110, %s111
    %p120 = scmp.eq.s32.totalorder %s16, 0
    %p121 = por %p119, %p120
    %p122 = scmp.ne.s32.totalorder %s110, %s111
    %p123 = scmp.eq.s32.totalorder %s17, 1
    %p124 = por %p122, %p123
    %p126 = scmp.ne.s32.totalorder %s111, %s125
    %p127 = scmp.eq.s32.totalorder %s17, 0
    %p128 = por %p126, %p127
    %s129 = ssub.s32 %s11, %s18
    %p130 = scmp.eq.s32.totalorder %s129, 0
    %s132 = sadd.s32 %s131, 1
    %s133 = scalar_select %p130, %s131, %s132
    %p136 = pneg %p130
    %p137 = scmp.eq.s32.totalorder %s11, 1
    %p138 = por %p136, %p137
    %p139 = scmp.ne.s32.totalorder %s131, %s134
    %p140 = scmp.eq.s32.totalorder %s11, 0
    %p141 = por %p139, %p140
    %p142 = scmp.ne.s32.totalorder %s131, %s134
    %p143 = scmp.eq.s32.totalorder %s16, 1
    %p144 = por %p142, %p143
    %p145 = scmp.ne.s32.totalorder %s134, %s135
    %p146 = scmp.eq.s32.totalorder %s16, 0
    %p147 = por %p145, %p146
    %p148 = scmp.ne.s32.totalorder %s134, %s135
    %p149 = scmp.eq.s32.totalorder %s17, 1
    %p150 = por %p148, %p149
    %p152 = scmp.ne.s32.totalorder %s135, %s151
    %p153 = scmp.eq.s32.totalorder %s17, 0
    %p154 = por %p152, %p153
    %p155 = scmp.le.s32.totalorder 1, %s11
    %p156 = scmp.lt.s32.totalorder %s11, 3
    %p157 = pnand %p155, %p156
    %p158 = pneg %p157
    // Predicated region
    $region9: #{single_level_densenet_forward.1} parent=5 // pred_check
      _
    $region10: #{single_level_densenet_forward.1} parent=5 // pred_check_branch
      %160 = sbr.rel (%p157) target = $region12
    $region11: #{single_level_densenet_forward.1} parent=5 // pred_region
      %s161 = ssub.s32 %s11, 1
      // Predicated region
      $region13: #{single_level_densenet_forward.1} parent=11 // pred_check
        %p162 = pneg %p58
      $region14: #{single_level_densenet_forward.1} parent=11 // pred_check_branch
        %164 = sbr.rel (%p162) target = $region16
      $region15: #{single_level_densenet_forward.1} parent=11 // pred_region
        _
      $region16: #{single_level_densenet_forward.1} parent=11 // pred_fallthru
        _
      // Predicated region
      $region17: #{single_level_densenet_forward.1} parent=11 // pred_check
        %p165 = pneg %p79
      $region18: #{single_level_densenet_forward.1} parent=11 // pred_check_branch
        %167 = sbr.rel (%p165) target = $region20
      $region19: #{single_level_densenet_forward.1} parent=11 // pred_region
        _
      $region20: #{single_level_densenet_forward.1} parent=11 // pred_fallthru
        _
      // Predicated region
      $region21: #{single_level_densenet_forward.1} parent=11 // pred_check
        %p168 = pneg %p100
      $region22: #{single_level_densenet_forward.1} parent=11 // pred_check_branch
        %170 = sbr.rel (%p168) target = $region24
      $region23: #{single_level_densenet_forward.1} parent=11 // pred_region
        _
      $region24: #{single_level_densenet_forward.1} parent=11 // pred_fallthru
        _
      // Predicated region
      $region25: #{single_level_densenet_forward.1} parent=11 // pred_check
        %p171 = pneg %p121
      $region26: #{single_level_densenet_forward.1} parent=11 // pred_check_branch
        %173 = sbr.rel (%p171) target = $region28
      $region27: #{single_level_densenet_forward.1} parent=11 // pred_region
        _
      $region28: #{single_level_densenet_forward.1} parent=11 // pred_fallthru
        _
    $region12: #{single_level_densenet_forward.1} parent=5 // pred_fallthru
      _
    %p174 = scmp.lt.s32.totalorder %s11, 2
    // Predicated region
    $region29: #{single_level_densenet_forward.1} parent=5 // pred_check
      %p175 = pneg %p174
    $region30: #{single_level_densenet_forward.1} parent=5 // pred_check_branch
      %177 = sbr.rel (%p175) target = $region32
    $region31: #{single_level_densenet_forward.1} parent=5 // pred_region
      // Predicated region
      $region33: #{single_level_densenet_forward.1} parent=31 // pred_check
        %p178 = pneg %p31
      $region34: #{single_level_densenet_forward.1} parent=31 // pred_check_branch
        %180 = sbr.rel (%p178) target = $region36
      $region35: #{single_level_densenet_forward.1} parent=31 // pred_region
        %p181 = scmp.lt.s32.totalorder %s11, 1
        %s182 = scalar_select %p181, %s11, 1
        %s183 = smul.addr %s182, 2
        %s184 = smul.addr %s183, 4
        %s185 = scalar_lea.vmem %s0, %s184
      $region36: #{single_level_densenet_forward.1} parent=31 // pred_fallthru
        _
    $region32: #{single_level_densenet_forward.1} parent=5 // pred_fallthru
      _
    %p186 = scmp.le.s32.totalorder 1, %s11
    %p187 = scmp.lt.s32.totalorder %s11, 3
    %p188 = pnand %p186, %p187
    %p189 = pneg %p188
    // Predicated region
    $region37: #{single_level_densenet_forward.1} parent=5 // pred_check
      _
    $region38: #{single_level_densenet_forward.1} parent=5 // pred_check_branch
      %191 = sbr.rel (%p188) target = $region40
    $region39: #{single_level_densenet_forward.1} parent=5 // pred_region
      %s192 = ssub.s32 %s11, 1
      %p193 = scmp.lt.s32.totalorder %s16, 1
      %s194 = scalar_select %p193, %s16, 1
      %s195 = smul.addr %s194, 2
      %s196 = smul.addr %s195, 4
      %s197 = scalar_lea.vmem %s0, %s196
      %p198 = pneg %p37
      %p199 = pneg %p34
      %p200 = pneg %p58
      %p201 = pneg %p55
      %p202 = pneg %p79
      %p203 = pneg %p76
      %p204 = pneg %p100
      %p205 = pneg %p97
      %p206 = pneg %p121
      %p207 = pneg %p118
      %p208 = pneg %p147
      %p209 = pneg %p144
      %p210 = scmp.lt.s32.totalorder %s16, 1
      %s211 = scalar_select %p210, %s16, 1
      %s212 = smul.addr %s211, 2
      %s213 = smul.addr %s212, 4
      %s214 = scalar_lea.vmem %s5, %s213
      %p215 = scmp.lt.s32.totalorder %s16, 1
      %s216 = scalar_select %p215, %s16, 1
      %s217 = smul.addr %s216, 2
      %s218 = smul.addr %s217, 4
      %s219 = scalar_lea.vmem %s0, %s218
      %p220 = scmp.lt.s32.totalorder %s16, 1
      %s221 = scalar_select %p220, %s16, 1
      %s222 = smul.addr %s221, 2
      %s223 = smul.addr %s222, 4
      %s224 = scalar_lea.vmem %s5, %s223
      %v225 = vld [vmem:[%s4] sm:$0x3]
      %s226 = scalar_lea.vmem %s4, 2
      %v227 = vld [vmem:[%s226] sm:$0x3]
      %s228 = scalar_lea.vmem %s4, 4
      %v229 = vld [vmem:[%s228] sm:$0x3]
      %s230 = scalar_lea.vmem %s4, 6
      %v231 = vld [vmem:[%s230] sm:$0x3]
      %s232 = scalar_lea.vmem %s4, 10
      %v233 = vld [vmem:[%s232] sm:$0x3]
      %s234 = scalar_lea.vmem %s4, 12
      %v235 = vld [vmem:[%s234] sm:$0x3]
      %s236 = scalar_lea.vmem %s4, 14
      %v237 = vld [vmem:[%s236] sm:$0x3]
      %s238 = scalar_lea.vmem %s4, 16
      %v239 = vld [vmem:[%s238] sm:$0x3]
      %v240 = vld [vmem:[%s219] sm:$0xff]
      %v242 = vcombine.high %v240, %v240
      %244 = vrot.lane.b32.xlu0 %v240, 17
      %v245 = vpop.permute.xlu0 %244
      %246 = vrot.lane.b32.xlu0 %v242, 17
      %v247 = vpop.permute.xlu0 %246
      %v248 = vlaneseq
      %v249 = vand.u32 %v248, 127
      %vm250 = vcmp.lt.s32.totalorder %v249, 17
      %v251 = vsel %vm250, %v245, %v247
      %v252 = vsel %vm250, %v247, %v245
      %v254 = vlaneseq
      %v255 = vshrl.u32 %v254, 7
      %v256 = vsub.s32 0, %v255
      %v257 = vrot.slane %v225, %v256
      %v258 = vlaneseq
      %v259 = vshrl.u32 %v258, 7
      %v260 = vsub.s32 1, %v259
      %v261 = vrot.slane %v225, %v260
      %v264 = vmul.f32 %v252, %v257
      %v265 = vmul.f32 %v251, %v261
      %v266 = vld [vmem:[%s1] sm:$0xf]
      %267 = vrot.lane.b32.xlu0 %v240, 16
      %v268 = vpop.permute.xlu0 %267
      %269 = vrot.lane.b32.xlu0 %v242, 16
      %v270 = vpop.permute.xlu0 %269
      %vm271 = vcmp.lt.s32.totalorder %v249, 16
      %v272 = vsel %vm271, %v268, %v270
      %v273 = vsel %vm271, %v270, %v268
      %v275 = vlaneseq
      %v276 = vshrl.u32 %v275, 7
      %v277 = vsub.s32 0, %v276
      %v278 = vrot.slane %v227, %v277
      %v279 = vlaneseq
      %v280 = vshrl.u32 %v279, 7
      %v281 = vsub.s32 1, %v280
      %v282 = vrot.slane %v227, %v281
      %v285 = vmul.f32 %v273, %v278
      %v286 = vmul.f32 %v272, %v282
      %s287 = scalar_lea.vmem %s1, 4
      %v288 = vld [vmem:[%s287] sm:$0xf]
      %vm289 = vcmask 31744
      %v291 = vsel %vm289, %v288, 0
      %vm293 = vcmask 1043456
      %v295 = vsel %vm293, %v285, 0
      %v298 = vsel %vm293, %v286, 0
      %300 = vmatprep.subr.mxu0 0.0
      %301 = vmatpush1.msra.mxu0 0.0
      %302 = vmatprep.subr.mxu0 0.0
      %303 = vmatpush1.msra.mxu0 0.0
      %304 = vmatprep.subr.mxu0 0.0
      %305 = vmatpush1.msra.mxu0 0.0
      %306 = vmatprep.subr.mxu0 0.0
      %307 = vmatpush1.msra.mxu0 0.0
      %308 = vmatprep.subr.mxu0 0.0
      %309 = vmatpush1.msra.mxu0 0.0
      %310 = vmatprep.subr.mxu0 0.0
      %311 = vmatpush1.msra.mxu0 0.0
      %312 = vmatprep.subr.mxu0 0.0
      %313 = vmatpush1.msra.mxu0 0.0
      %314 = vmatprep.subr.mxu0 0.0
      %315 = vmatpush1.msra.mxu0 0.0
      %316 = vmatprep.subr.mxu0 0.0
      %317 = vmatpush1.msra.mxu0 0.0
      %318 = vmatprep.subr.mxu0 0.0
      %319 = vmatpush1.msra.mxu0 0.0
      %320 = vmatprep.subr.mxu0 0.0
      %321 = vmatpush1.msra.mxu0 0.0
      %322 = vmatprep.subr.mxu0 0.0
      %323 = vmatpush1.msra.mxu0 0.0
      %324 = vmatprep.subr.mxu0 0.0
      %325 = vmatpush1.msra.mxu0 0.0
      %326 = vmatprep.subr.mxu0 0.0
      %327 = vmatpush1.msra.mxu0 0.0
      %328 = vmatprep.subr.mxu0 0.0
      %329 = vmatpush1.msra.mxu0 0.0
      %330 = vmatprep.subr.mxu0 %v298
      %331 = vmatpush1.msra.mxu0 %v295
      %332 = vmatprep.subr.mxu0 0.0
      %333 = vmatpush2.msra.mxu0 0.0
      %334 = vmatprep.subr.mxu0 0.0
      %335 = vmatpush2.msra.mxu0 0.0
      %336 = vmatprep.subr.mxu0 0.0
      %337 = vmatpush2.msra.mxu0 0.0
      %338 = vmatprep.subr.mxu0 0.0
      %339 = vmatpush2.msra.mxu0 0.0
      %340 = vmatprep.subr.mxu0 0.0
      %341 = vmatpush2.msra.mxu0 0.0
      %342 = vmatprep.subr.mxu0 0.0
      %343 = vmatpush2.msra.mxu0 0.0
      %344 = vmatprep.subr.mxu0 0.0
      %345 = vmatpush2.msra.mxu0 0.0
      %346 = vmatprep.subr.mxu0 0.0
      %347 = vmatpush2.msra.mxu0 0.0
      %348 = vmatprep.subr.mxu0 0.0
      %349 = vmatpush2.msra.mxu0 0.0
      %350 = vmatprep.subr.mxu0 0.0
      %351 = vmatpush2.msra.mxu0 0.0
      %352 = vmatprep.subr.mxu0 0.0
      %353 = vmatpush2.msra.mxu0 0.0
      %354 = vmatprep.subr.mxu0 0.0
      %355 = vmatpush2.msra.mxu0 0.0
      %356 = vmatprep.subr.mxu0 0.0
      %357 = vmatpush2.msra.mxu0 0.0
      %358 = vmatprep.subr.mxu0 0.0
      %359 = vmatpush2.msra.mxu0 0.0
      %360 = vmatprep.subr.mxu0 0.0
      %361 = vmatpush2.msra.mxu0 0.0
      %362 = vmatprep.subr.mxu0 0.0
      %363 = vmatpush2.msra.mxu0 0.0
      %364 = vmatprep.mubr.f32.mxu0 0.0
      %365 = vmatmul.mubr.f32.gmra.mxu0 %v291
      %v366 = vpop.f32.mrf.mxu0
      %v367 = vadd.f32 0.0, %v366
      %v368 = vpop.f32.mrf.mxu0
      %v369 = vadd.f32 0.0, %v368
      %370 = vdwg.mxu0
      %v372 = vsel %vm289, %v266, 0
      %v375 = vsel %vm293, %v264, 0
      %v378 = vsel %vm293, %v265, 0
      %380 = vmatprep.subr.mxu0 0.0
      %381 = vmatpush1.msra.mxu0 0.0
      %382 = vmatprep.subr.mxu0 0.0
      %383 = vmatpush1.msra.mxu0 0.0
      %384 = vmatprep.subr.mxu0 0.0
      %385 = vmatpush1.msra.mxu0 0.0
      %386 = vmatprep.subr.mxu0 0.0
      %387 = vmatpush1.msra.mxu0 0.0
      %388 = vmatprep.subr.mxu0 0.0
      %389 = vmatpush1.msra.mxu0 0.0
      %390 = vmatprep.subr.mxu0 0.0
      %391 = vmatpush1.msra.mxu0 0.0
      %392 = vmatprep.subr.mxu0 0.0
      %393 = vmatpush1.msra.mxu0 0.0
      %394 = vmatprep.subr.mxu0 0.0
      %395 = vmatpush1.msra.mxu0 0.0
      %396 = vmatprep.subr.mxu0 0.0
      %397 = vmatpush1.msra.mxu0 0.0
      %398 = vmatprep.subr.mxu0 0.0
      %399 = vmatpush1.msra.mxu0 0.0
      %400 = vmatprep.subr.mxu0 0.0
      %401 = vmatpush1.msra.mxu0 0.0
      %402 = vmatprep.subr.mxu0 0.0
      %403 = vmatpush1.msra.mxu0 0.0
      %404 = vmatprep.subr.mxu0 0.0
      %405 = vmatpush1.msra.mxu0 0.0
      %406 = vmatprep.subr.mxu0 0.0
      %407 = vmatpush1.msra.mxu0 0.0
      %408 = vmatprep.subr.mxu0 0.0
      %409 = vmatpush1.msra.mxu0 0.0
      %410 = vmatprep.subr.mxu0 %v378
      %411 = vmatpush1.msra.mxu0 %v375
      %412 = vmatprep.subr.mxu0 0.0
      %413 = vmatpush2.msra.mxu0 0.0
      %414 = vmatprep.subr.mxu0 0.0
      %415 = vmatpush2.msra.mxu0 0.0
      %416 = vmatprep.subr.mxu0 0.0
      %417 = vmatpush2.msra.mxu0 0.0
      %418 = vmatprep.subr.mxu0 0.0
      %419 = vmatpush2.msra.mxu0 0.0
      %420 = vmatprep.subr.mxu0 0.0
      %421 = vmatpush2.msra.mxu0 0.0
      %422 = vmatprep.subr.mxu0 0.0
      %423 = vmatpush2.msra.mxu0 0.0
      %424 = vmatprep.subr.mxu0 0.0
      %425 = vmatpush2.msra.mxu0 0.0
      %426 = vmatprep.subr.mxu0 0.0
      %427 = vmatpush2.msra.mxu0 0.0
      %428 = vmatprep.subr.mxu0 0.0
      %429 = vmatpush2.msra.mxu0 0.0
      %430 = vmatprep.subr.mxu0 0.0
      %431 = vmatpush2.msra.mxu0 0.0
      %432 = vmatprep.subr.mxu0 0.0
      %433 = vmatpush2.msra.mxu0 0.0
      %434 = vmatprep.subr.mxu0 0.0
      %435 = vmatpush2.msra.mxu0 0.0
      %436 = vmatprep.subr.mxu0 0.0
      %437 = vmatpush2.msra.mxu0 0.0
      %438 = vmatprep.subr.mxu0 0.0
      %439 = vmatpush2.msra.mxu0 0.0
      %440 = vmatprep.subr.mxu0 0.0
      %441 = vmatpush2.msra.mxu0 0.0
      %442 = vmatprep.subr.mxu0 0.0
      %443 = vmatpush2.msra.mxu0 0.0
      %444 = vmatprep.mubr.f32.mxu0 0.0
      %445 = vmatmul.mubr.f32.gmra.mxu0 %v372
      %v446 = vpop.f32.mrf.mxu0
      %v447 = vadd.f32 %v367, %v446
      %v448 = vpop.f32.mrf.mxu0
      %v449 = vadd.f32 %v369, %v448
      %450 = vdwg.mxu0
      %451 = vrot.lane.b32.xlu0 %v240, 15
      %v452 = vpop.permute.xlu0 %451
      %453 = vrot.lane.b32.xlu0 %v242, 15
      %v454 = vpop.permute.xlu0 %453
      %vm455 = vcmp.lt.s32.totalorder %v249, 15
      %v456 = vsel %vm455, %v452, %v454
      %v457 = vsel %vm455, %v454, %v452
      %v459 = vlaneseq
      %v460 = vshrl.u32 %v459, 7
      %v461 = vsub.s32 0, %v460
      %v462 = vrot.slane %v229, %v461
      %v463 = vlaneseq
      %v464 = vshrl.u32 %v463, 7
      %v465 = vsub.s32 1, %v464
      %v466 = vrot.slane %v229, %v465
      %v469 = vmul.f32 %v457, %v462
      %v470 = vmul.f32 %v456, %v466
      %s471 = scalar_lea.vmem %s1, 8
      %v472 = vld [vmem:[%s471] sm:$0xf]
      %v474 = vsel %vm289, %v472, 0
      %v477 = vsel %vm293, %v469, 0
      %v480 = vsel %vm293, %v470, 0
      %482 = vmatprep.subr.mxu0 0.0
      %483 = vmatpush1.msra.mxu0 0.0
      %484 = vmatprep.subr.mxu0 0.0
      %485 = vmatpush1.msra.mxu0 0.0
      %486 = vmatprep.subr.mxu0 0.0
      %487 = vmatpush1.msra.mxu0 0.0
      %488 = vmatprep.subr.mxu0 0.0
      %489 = vmatpush1.msra.mxu0 0.0
      %490 = vmatprep.subr.mxu0 0.0
      %491 = vmatpush1.msra.mxu0 0.0
      %492 = vmatprep.subr.mxu0 0.0
      %493 = vmatpush1.msra.mxu0 0.0
      %494 = vmatprep.subr.mxu0 0.0
      %495 = vmatpush1.msra.mxu0 0.0
      %496 = vmatprep.subr.mxu0 0.0
      %497 = vmatpush1.msra.mxu0 0.0
      %498 = vmatprep.subr.mxu0 0.0
      %499 = vmatpush1.msra.mxu0 0.0
      %500 = vmatprep.subr.mxu0 0.0
      %501 = vmatpush1.msra.mxu0 0.0
      %502 = vmatprep.subr.mxu0 0.0
      %503 = vmatpush1.msra.mxu0 0.0
      %504 = vmatprep.subr.mxu0 0.0
      %505 = vmatpush1.msra.mxu0 0.0
      %506 = vmatprep.subr.mxu0 0.0
      %507 = vmatpush1.msra.mxu0 0.0
      %508 = vmatprep.subr.mxu0 0.0
      %509 = vmatpush1.msra.mxu0 0.0
      %510 = vmatprep.subr.mxu0 0.0
      %511 = vmatpush1.msra.mxu0 0.0
      %512 = vmatprep.subr.mxu0 %v480
      %513 = vmatpush1.msra.mxu0 %v477
      %514 = vmatprep.subr.mxu0 0.0
      %515 = vmatpush2.msra.mxu0 0.0
      %516 = vmatprep.subr.mxu0 0.0
      %517 = vmatpush2.msra.mxu0 0.0
      %518 = vmatprep.subr.mxu0 0.0
      %519 = vmatpush2.msra.mxu0 0.0
      %520 = vmatprep.subr.mxu0 0.0
      %521 = vmatpush2.msra.mxu0 0.0
      %522 = vmatprep.subr.mxu0 0.0
      %523 = vmatpush2.msra.mxu0 0.0
      %524 = vmatprep.subr.mxu0 0.0
      %525 = vmatpush2.msra.mxu0 0.0
      %526 = vmatprep.subr.mxu0 0.0
      %527 = vmatpush2.msra.mxu0 0.0
      %528 = vmatprep.subr.mxu0 0.0
      %529 = vmatpush2.msra.mxu0 0.0
      %530 = vmatprep.subr.mxu0 0.0
      %531 = vmatpush2.msra.mxu0 0.0
      %532 = vmatprep.subr.mxu0 0.0
      %533 = vmatpush2.msra.mxu0 0.0
      %534 = vmatprep.subr.mxu0 0.0
      %535 = vmatpush2.msra.mxu0 0.0
      %536 = vmatprep.subr.mxu0 0.0
      %537 = vmatpush2.msra.mxu0 0.0
      %538 = vmatprep.subr.mxu0 0.0
      %539 = vmatpush2.msra.mxu0 0.0
      %540 = vmatprep.subr.mxu0 0.0
      %541 = vmatpush2.msra.mxu0 0.0
      %542 = vmatprep.subr.mxu0 0.0
      %543 = vmatpush2.msra.mxu0 0.0
      %544 = vmatprep.subr.mxu0 0.0
      %545 = vmatpush2.msra.mxu0 0.0
      %546 = vmatprep.mubr.f32.mxu0 0.0
      %547 = vmatmul.mubr.f32.gmra.mxu0 %v474
      %v548 = vpop.f32.mrf.mxu0
      %v549 = vadd.f32 0.0, %v548
      %v550 = vpop.f32.mrf.mxu0
      %v551 = vadd.f32 0.0, %v550
      %552 = vdwg.mxu0
      %v553 = vadd.f32 %v447, %v549
      %v554 = vadd.f32 %v449, %v551
      %555 = vrot.lane.b32.xlu0 %v240, 1
      %v556 = vpop.permute.xlu0 %555
      %557 = vrot.lane.b32.xlu0 %v242, 1
      %v558 = vpop.permute.xlu0 %557
      %vm559 = vcmp.lt.s32.totalorder %v249, 1
      %v560 = vsel %vm559, %v556, %v558
      %v561 = vsel %vm559, %v558, %v556
      %v563 = vlaneseq
      %v564 = vshrl.u32 %v563, 7
      %v565 = vsub.s32 0, %v564
      %v566 = vrot.slane %v231, %v565
      %v567 = vlaneseq
      %v568 = vshrl.u32 %v567, 7
      %v569 = vsub.s32 1, %v568
      %v570 = vrot.slane %v231, %v569
      %v573 = vmul.f32 %v561, %v566
      %v574 = vmul.f32 %v560, %v570
      %s575 = scalar_lea.vmem %s1, 12
      %v576 = vld [vmem:[%s575] sm:$0xf]
      %v578 = vsel %vm289, %v576, 0
      %v581 = vsel %vm293, %v573, 0
      %v584 = vsel %vm293, %v574, 0
      %586 = vmatprep.subr.mxu0 0.0
      %587 = vmatpush1.msra.mxu0 0.0
      %588 = vmatprep.subr.mxu0 0.0
      %589 = vmatpush1.msra.mxu0 0.0
      %590 = vmatprep.subr.mxu0 0.0
      %591 = vmatpush1.msra.mxu0 0.0
      %592 = vmatprep.subr.mxu0 0.0
      %593 = vmatpush1.msra.mxu0 0.0
      %594 = vmatprep.subr.mxu0 0.0
      %595 = vmatpush1.msra.mxu0 0.0
      %596 = vmatprep.subr.mxu0 0.0
      %597 = vmatpush1.msra.mxu0 0.0
      %598 = vmatprep.subr.mxu0 0.0
      %599 = vmatpush1.msra.mxu0 0.0
      %600 = vmatprep.subr.mxu0 0.0
      %601 = vmatpush1.msra.mxu0 0.0
      %602 = vmatprep.subr.mxu0 0.0
      %603 = vmatpush1.msra.mxu0 0.0
      %604 = vmatprep.subr.mxu0 0.0
      %605 = vmatpush1.msra.mxu0 0.0
      %606 = vmatprep.subr.mxu0 0.0
      %607 = vmatpush1.msra.mxu0 0.0
      %608 = vmatprep.subr.mxu0 0.0
      %609 = vmatpush1.msra.mxu0 0.0
      %610 = vmatprep.subr.mxu0 0.0
      %611 = vmatpush1.msra.mxu0 0.0
      %612 = vmatprep.subr.mxu0 0.0
      %613 = vmatpush1.msra.mxu0 0.0
      %614 = vmatprep.subr.mxu0 0.0
      %615 = vmatpush1.msra.mxu0 0.0
      %616 = vmatprep.subr.mxu0 %v584
      %617 = vmatpush1.msra.mxu0 %v581
      %618 = vmatprep.subr.mxu0 0.0
      %619 = vmatpush2.msra.mxu0 0.0
      %620 = vmatprep.subr.mxu0 0.0
      %621 = vmatpush2.msra.mxu0 0.0
      %622 = vmatprep.subr.mxu0 0.0
      %623 = vmatpush2.msra.mxu0 0.0
      %624 = vmatprep.subr.mxu0 0.0
      %625 = vmatpush2.msra.mxu0 0.0
      %626 = vmatprep.subr.mxu0 0.0
      %627 = vmatpush2.msra.mxu0 0.0
      %628 = vmatprep.subr.mxu0 0.0
      %629 = vmatpush2.msra.mxu0 0.0
      %630 = vmatprep.subr.mxu0 0.0
      %631 = vmatpush2.msra.mxu0 0.0
      %632 = vmatprep.subr.mxu0 0.0
      %633 = vmatpush2.msra.mxu0 0.0
      %634 = vmatprep.subr.mxu0 0.0
      %635 = vmatpush2.msra.mxu0 0.0
      %636 = vmatprep.subr.mxu0 0.0
      %637 = vmatpush2.msra.mxu0 0.0
      %638 = vmatprep.subr.mxu0 0.0
      %639 = vmatpush2.msra.mxu0 0.0
      %640 = vmatprep.subr.mxu0 0.0
      %641 = vmatpush2.msra.mxu0 0.0
      %642 = vmatprep.subr.mxu0 0.0
      %643 = vmatpush2.msra.mxu0 0.0
      %644 = vmatprep.subr.mxu0 0.0
      %645 = vmatpush2.msra.mxu0 0.0
      %646 = vmatprep.subr.mxu0 0.0
      %647 = vmatpush2.msra.mxu0 0.0
      %648 = vmatprep.subr.mxu0 0.0
      %649 = vmatpush2.msra.mxu0 0.0
      %650 = vmatprep.mubr.f32.mxu0 0.0
      %651 = vmatmul.mubr.f32.gmra.mxu0 %v578
      %v652 = vpop.f32.mrf.mxu0
      %v653 = vadd.f32 0.0, %v652
      %v654 = vpop.f32.mrf.mxu0
      %v655 = vadd.f32 0.0, %v654
      %656 = vdwg.mxu0
      %v657 = vadd.f32 %v553, %v653
      %v658 = vadd.f32 %v554, %v655
      %s659 = scalar_lea.vmem %s1, 16
      %v660 = vld [vmem:[%s659] sm:$0xf]
      %v662 = vsel %vm289, %v660, 0
      %v664 = vsel %vm293, %v240, 0
      %v666 = vsel %vm293, %v242, 0
      %668 = vmatprep.subr.mxu0 0.0
      %669 = vmatpush1.msra.mxu0 0.0
      %670 = vmatprep.subr.mxu0 0.0
      %671 = vmatpush1.msra.mxu0 0.0
      %672 = vmatprep.subr.mxu0 0.0
      %673 = vmatpush1.msra.mxu0 0.0
      %674 = vmatprep.subr.mxu0 0.0
      %675 = vmatpush1.msra.mxu0 0.0
      %676 = vmatprep.subr.mxu0 0.0
      %677 = vmatpush1.msra.mxu0 0.0
      %678 = vmatprep.subr.mxu0 0.0
      %679 = vmatpush1.msra.mxu0 0.0
      %680 = vmatprep.subr.mxu0 0.0
      %681 = vmatpush1.msra.mxu0 0.0
      %682 = vmatprep.subr.mxu0 0.0
      %683 = vmatpush1.msra.mxu0 0.0
      %684 = vmatprep.subr.mxu0 0.0
      %685 = vmatpush1.msra.mxu0 0.0
      %686 = vmatprep.subr.mxu0 0.0
      %687 = vmatpush1.msra.mxu0 0.0
      %688 = vmatprep.subr.mxu0 0.0
      %689 = vmatpush1.msra.mxu0 0.0
      %690 = vmatprep.subr.mxu0 0.0
      %691 = vmatpush1.msra.mxu0 0.0
      %692 = vmatprep.subr.mxu0 0.0
      %693 = vmatpush1.msra.mxu0 0.0
      %694 = vmatprep.subr.mxu0 0.0
      %695 = vmatpush1.msra.mxu0 0.0
      %696 = vmatprep.subr.mxu0 0.0
      %697 = vmatpush1.msra.mxu0 0.0
      %698 = vmatprep.subr.mxu0 %v666
      %699 = vmatpush1.msra.mxu0 %v664
      %700 = vmatprep.subr.mxu0 0.0
      %701 = vmatpush2.msra.mxu0 0.0
      %702 = vmatprep.subr.mxu0 0.0
      %703 = vmatpush2.msra.mxu0 0.0
      %704 = vmatprep.subr.mxu0 0.0
      %705 = vmatpush2.msra.mxu0 0.0
      %706 = vmatprep.subr.mxu0 0.0
      %707 = vmatpush2.msra.mxu0 0.0
      %708 = vmatprep.subr.mxu0 0.0
      %709 = vmatpush2.msra.mxu0 0.0
      %710 = vmatprep.subr.mxu0 0.0
      %711 = vmatpush2.msra.mxu0 0.0
      %712 = vmatprep.subr.mxu0 0.0
      %713 = vmatpush2.msra.mxu0 0.0
      %714 = vmatprep.subr.mxu0 0.0
      %715 = vmatpush2.msra.mxu0 0.0
      %716 = vmatprep.subr.mxu0 0.0
      %717 = vmatpush2.msra.mxu0 0.0
      %718 = vmatprep.subr.mxu0 0.0
      %719 = vmatpush2.msra.mxu0 0.0
      %720 = vmatprep.subr.mxu0 0.0
      %721 = vmatpush2.msra.mxu0 0.0
      %722 = vmatprep.subr.mxu0 0.0
      %723 = vmatpush2.msra.mxu0 0.0
      %724 = vmatprep.subr.mxu0 0.0
      %725 = vmatpush2.msra.mxu0 0.0
      %726 = vmatprep.subr.mxu0 0.0
      %727 = vmatpush2.msra.mxu0 0.0
      %728 = vmatprep.subr.mxu0 0.0
      %729 = vmatpush2.msra.mxu0 0.0
      %730 = vmatprep.subr.mxu0 0.0
      %731 = vmatpush2.msra.mxu0 0.0
      %732 = vmatprep.mubr.f32.mxu0 0.0
      %733 = vmatmul.mubr.f32.gmra.mxu0 %v662
      %v734 = vpop.f32.mrf.mxu0
      %v735 = vadd.f32 0.0, %v734
      %v736 = vpop.f32.mrf.mxu0
      %v737 = vadd.f32 0.0, %v736
      %738 = vdwg.mxu0
      %v739 = vadd.f32 %v657, %v735
      %v740 = vadd.f32 %v658, %v737
      %741 = vrot.lane.b32.xlu0 %v240, 127
      %v742 = vpop.permute.xlu0 %741
      %743 = vrot.lane.b32.xlu0 %v242, 127
      %v744 = vpop.permute.xlu0 %743
      %vm745 = vcmp.lt.s32.totalorder %v249, 127
      %v746 = vsel %vm745, %v742, %v744
      %v747 = vsel %vm745, %v744, %v742
      %v749 = vlaneseq
      %v750 = vshrl.u32 %v749, 7
      %v751 = vsub.s32 0, %v750
      %v752 = vrot.slane %v233, %v751
      %v753 = vlaneseq
      %v754 = vshrl.u32 %v753, 7
      %v755 = vsub.s32 1, %v754
      %v756 = vrot.slane %v233, %v755
      %v759 = vmul.f32 %v746, %v752
      %v760 = vmul.f32 %v747, %v756
      %s761 = scalar_lea.vmem %s1, 20
      %v762 = vld [vmem:[%s761] sm:$0xf]
      %v764 = vsel %vm289, %v762, 0
      %v767 = vsel %vm293, %v759, 0
      %v770 = vsel %vm293, %v760, 0
      %772 = vmatprep.subr.mxu0 0.0
      %773 = vmatpush1.msra.mxu0 0.0
      %774 = vmatprep.subr.mxu0 0.0
      %775 = vmatpush1.msra.mxu0 0.0
      %776 = vmatprep.subr.mxu0 0.0
      %777 = vmatpush1.msra.mxu0 0.0
      %778 = vmatprep.subr.mxu0 0.0
      %779 = vmatpush1.msra.mxu0 0.0
      %780 = vmatprep.subr.mxu0 0.0
      %781 = vmatpush1.msra.mxu0 0.0
      %782 = vmatprep.subr.mxu0 0.0
      %783 = vmatpush1.msra.mxu0 0.0
      %784 = vmatprep.subr.mxu0 0.0
      %785 = vmatpush1.msra.mxu0 0.0
      %786 = vmatprep.subr.mxu0 0.0
      %787 = vmatpush1.msra.mxu0 0.0
      %788 = vmatprep.subr.mxu0 0.0
      %789 = vmatpush1.msra.mxu0 0.0
      %790 = vmatprep.subr.mxu0 0.0
      %791 = vmatpush1.msra.mxu0 0.0
      %792 = vmatprep.subr.mxu0 0.0
      %793 = vmatpush1.msra.mxu0 0.0
      %794 = vmatprep.subr.mxu0 0.0
      %795 = vmatpush1.msra.mxu0 0.0
      %796 = vmatprep.subr.mxu0 0.0
      %797 = vmatpush1.msra.mxu0 0.0
      %798 = vmatprep.subr.mxu0 0.0
      %799 = vmatpush1.msra.mxu0 0.0
      %800 = vmatprep.subr.mxu0 0.0
      %801 = vmatpush1.msra.mxu0 0.0
      %802 = vmatprep.subr.mxu0 %v770
      %803 = vmatpush1.msra.mxu0 %v767
      %804 = vmatprep.subr.mxu0 0.0
      %805 = vmatpush2.msra.mxu0 0.0
      %806 = vmatprep.subr.mxu0 0.0
      %807 = vmatpush2.msra.mxu0 0.0
      %808 = vmatprep.subr.mxu0 0.0
      %809 = vmatpush2.msra.mxu0 0.0
      %810 = vmatprep.subr.mxu0 0.0
      %811 = vmatpush2.msra.mxu0 0.0
      %812 = vmatprep.subr.mxu0 0.0
      %813 = vmatpush2.msra.mxu0 0.0
      %814 = vmatprep.subr.mxu0 0.0
      %815 = vmatpush2.msra.mxu0 0.0
      %816 = vmatprep.subr.mxu0 0.0
      %817 = vmatpush2.msra.mxu0 0.0
      %818 = vmatprep.subr.mxu0 0.0
      %819 = vmatpush2.msra.mxu0 0.0
      %820 = vmatprep.subr.mxu0 0.0
      %821 = vmatpush2.msra.mxu0 0.0
      %822 = vmatprep.subr.mxu0 0.0
      %823 = vmatpush2.msra.mxu0 0.0
      %824 = vmatprep.subr.mxu0 0.0
      %825 = vmatpush2.msra.mxu0 0.0
      %826 = vmatprep.subr.mxu0 0.0
      %827 = vmatpush2.msra.mxu0 0.0
      %828 = vmatprep.subr.mxu0 0.0
      %829 = vmatpush2.msra.mxu0 0.0
      %830 = vmatprep.subr.mxu0 0.0
      %831 = vmatpush2.msra.mxu0 0.0
      %832 = vmatprep.subr.mxu0 0.0
      %833 = vmatpush2.msra.mxu0 0.0
      %834 = vmatprep.subr.mxu0 0.0
      %835 = vmatpush2.msra.mxu0 0.0
      %836 = vmatprep.mubr.f32.mxu0 0.0
      %837 = vmatmul.mubr.f32.gmra.mxu0 %v764
      %v838 = vpop.f32.mrf.mxu0
      %v839 = vadd.f32 0.0, %v838
      %v840 = vpop.f32.mrf.mxu0
      %v841 = vadd.f32 0.0, %v840
      %842 = vdwg.mxu0
      %v843 = vadd.f32 %v739, %v839
      %v844 = vadd.f32 %v740, %v841
      %845 = vrot.lane.b32.xlu0 %v240, 113
      %v846 = vpop.permute.xlu0 %845
      %847 = vrot.lane.b32.xlu0 %v242, 113
      %v848 = vpop.permute.xlu0 %847
      %vm849 = vcmp.lt.s32.totalorder %v249, 113
      %v850 = vsel %vm849, %v846, %v848
      %v851 = vsel %vm849, %v848, %v846
      %v853 = vlaneseq
      %v854 = vshrl.u32 %v853, 7
      %v855 = vsub.s32 0, %v854
      %v856 = vrot.slane %v235, %v855
      %v857 = vlaneseq
      %v858 = vshrl.u32 %v857, 7
      %v859 = vsub.s32 1, %v858
      %v860 = vrot.slane %v235, %v859
      %v863 = vmul.f32 %v850, %v856
      %v864 = vmul.f32 %v851, %v860
      %s865 = scalar_lea.vmem %s1, 24
      %v866 = vld [vmem:[%s865] sm:$0xf]
      %v868 = vsel %vm289, %v866, 0
      %v871 = vsel %vm293, %v863, 0
      %v874 = vsel %vm293, %v864, 0
      %876 = vmatprep.subr.mxu0 0.0
      %877 = vmatpush1.msra.mxu0 0.0
      %878 = vmatprep.subr.mxu0 0.0
      %879 = vmatpush1.msra.mxu0 0.0
      %880 = vmatprep.subr.mxu0 0.0
      %881 = vmatpush1.msra.mxu0 0.0
      %882 = vmatprep.subr.mxu0 0.0
      %883 = vmatpush1.msra.mxu0 0.0
      %884 = vmatprep.subr.mxu0 0.0
      %885 = vmatpush1.msra.mxu0 0.0
      %886 = vmatprep.subr.mxu0 0.0
      %887 = vmatpush1.msra.mxu0 0.0
      %888 = vmatprep.subr.mxu0 0.0
      %889 = vmatpush1.msra.mxu0 0.0
      %890 = vmatprep.subr.mxu0 0.0
      %891 = vmatpush1.msra.mxu0 0.0
      %892 = vmatprep.subr.mxu0 0.0
      %893 = vmatpush1.msra.mxu0 0.0
      %894 = vmatprep.subr.mxu0 0.0
      %895 = vmatpush1.msra.mxu0 0.0
      %896 = vmatprep.subr.mxu0 0.0
      %897 = vmatpush1.msra.mxu0 0.0
      %898 = vmatprep.subr.mxu0 0.0
      %899 = vmatpush1.msra.mxu0 0.0
      %900 = vmatprep.subr.mxu0 0.0
      %901 = vmatpush1.msra.mxu0 0.0
      %902 = vmatprep.subr.mxu0 0.0
      %903 = vmatpush1.msra.mxu0 0.0
      %904 = vmatprep.subr.mxu0 0.0
      %905 = vmatpush1.msra.mxu0 0.0
      %906 = vmatprep.subr.mxu0 %v874
      %907 = vmatpush1.msra.mxu0 %v871
      %908 = vmatprep.subr.mxu0 0.0
      %909 = vmatpush2.msra.mxu0 0.0
      %910 = vmatprep.subr.mxu0 0.0
      %911 = vmatpush2.msra.mxu0 0.0
      %912 = vmatprep.subr.mxu0 0.0
      %913 = vmatpush2.msra.mxu0 0.0
      %914 = vmatprep.subr.mxu0 0.0
      %915 = vmatpush2.msra.mxu0 0.0
      %916 = vmatprep.subr.mxu0 0.0
      %917 = vmatpush2.msra.mxu0 0.0
      %918 = vmatprep.subr.mxu0 0.0
      %919 = vmatpush2.msra.mxu0 0.0
      %920 = vmatprep.subr.mxu0 0.0
      %921 = vmatpush2.msra.mxu0 0.0
      %922 = vmatprep.subr.mxu0 0.0
      %923 = vmatpush2.msra.mxu0 0.0
      %924 = vmatprep.subr.mxu0 0.0
      %925 = vmatpush2.msra.mxu0 0.0
      %926 = vmatprep.subr.mxu0 0.0
      %927 = vmatpush2.msra.mxu0 0.0
      %928 = vmatprep.subr.mxu0 0.0
      %929 = vmatpush2.msra.mxu0 0.0
      %930 = vmatprep.subr.mxu0 0.0
      %931 = vmatpush2.msra.mxu0 0.0
      %932 = vmatprep.subr.mxu0 0.0
      %933 = vmatpush2.msra.mxu0 0.0
      %934 = vmatprep.subr.mxu0 0.0
      %935 = vmatpush2.msra.mxu0 0.0
      %936 = vmatprep.subr.mxu0 0.0
      %937 = vmatpush2.msra.mxu0 0.0
      %938 = vmatprep.subr.mxu0 0.0
      %939 = vmatpush2.msra.mxu0 0.0
      %940 = vmatprep.mubr.f32.mxu0 0.0
      %941 = vmatmul.mubr.f32.gmra.mxu0 %v868
      %v942 = vpop.f32.mrf.mxu0
      %v943 = vadd.f32 0.0, %v942
      %v944 = vpop.f32.mrf.mxu0
      %v945 = vadd.f32 0.0, %v944
      %946 = vdwg.mxu0
      %v947 = vadd.f32 %v843, %v943
      %v948 = vadd.f32 %v844, %v945
      %949 = vrot.lane.b32.xlu0 %v240, 112
      %v950 = vpop.permute.xlu0 %949
      %951 = vrot.lane.b32.xlu0 %v242, 112
      %v952 = vpop.permute.xlu0 %951
      %vm953 = vcmp.lt.s32.totalorder %v249, 112
      %v954 = vsel %vm953, %v950, %v952
      %v955 = vsel %vm953, %v952, %v950
      %v957 = vlaneseq
      %v958 = vshrl.u32 %v957, 7
      %v959 = vsub.s32 0, %v958
      %v960 = vrot.slane %v237, %v959
      %v961 = vlaneseq
      %v962 = vshrl.u32 %v961, 7
      %v963 = vsub.s32 1, %v962
      %v964 = vrot.slane %v237, %v963
      %v967 = vmul.f32 %v954, %v960
      %v968 = vmul.f32 %v955, %v964
      %s969 = scalar_lea.vmem %s1, 28
      %v970 = vld [vmem:[%s969] sm:$0xf]
      %v972 = vsel %vm289, %v970, 0
      %v975 = vsel %vm293, %v967, 0
      %v978 = vsel %vm293, %v968, 0
      %980 = vmatprep.subr.mxu0 0.0
      %981 = vmatpush1.msra.mxu0 0.0
      %982 = vmatprep.subr.mxu0 0.0
      %983 = vmatpush1.msra.mxu0 0.0
      %984 = vmatprep.subr.mxu0 0.0
      %985 = vmatpush1.msra.mxu0 0.0
      %986 = vmatprep.subr.mxu0 0.0
      %987 = vmatpush1.msra.mxu0 0.0
      %988 = vmatprep.subr.mxu0 0.0
      %989 = vmatpush1.msra.mxu0 0.0
      %990 = vmatprep.subr.mxu0 0.0
      %991 = vmatpush1.msra.mxu0 0.0
      %992 = vmatprep.subr.mxu0 0.0
      %993 = vmatpush1.msra.mxu0 0.0
      %994 = vmatprep.subr.mxu0 0.0
      %995 = vmatpush1.msra.mxu0 0.0
      %996 = vmatprep.subr.mxu0 0.0
      %997 = vmatpush1.msra.mxu0 0.0
      %998 = vmatprep.subr.mxu0 0.0
      %999 = vmatpush1.msra.mxu0 0.0
      %1000 = vmatprep.subr.mxu0 0.0
      %1001 = vmatpush1.msra.mxu0 0.0
      %1002 = vmatprep.subr.mxu0 0.0
      %1003 = vmatpush1.msra.mxu0 0.0
      %1004 = vmatprep.subr.mxu0 0.0
      %1005 = vmatpush1.msra.mxu0 0.0
      %1006 = vmatprep.subr.mxu0 0.0
      %1007 = vmatpush1.msra.mxu0 0.0
      %1008 = vmatprep.subr.mxu0 0.0
      %1009 = vmatpush1.msra.mxu0 0.0
      %1010 = vmatprep.subr.mxu0 %v978
      %1011 = vmatpush1.msra.mxu0 %v975
      %1012 = vmatprep.subr.mxu0 0.0
      %1013 = vmatpush2.msra.mxu0 0.0
      %1014 = vmatprep.subr.mxu0 0.0
      %1015 = vmatpush2.msra.mxu0 0.0
      %1016 = vmatprep.subr.mxu0 0.0
      %1017 = vmatpush2.msra.mxu0 0.0
      %1018 = vmatprep.subr.mxu0 0.0
      %1019 = vmatpush2.msra.mxu0 0.0
      %1020 = vmatprep.subr.mxu0 0.0
      %1021 = vmatpush2.msra.mxu0 0.0
      %1022 = vmatprep.subr.mxu0 0.0
      %1023 = vmatpush2.msra.mxu0 0.0
      %1024 = vmatprep.subr.mxu0 0.0
      %1025 = vmatpush2.msra.mxu0 0.0
      %1026 = vmatprep.subr.mxu0 0.0
      %1027 = vmatpush2.msra.mxu0 0.0
      %1028 = vmatprep.subr.mxu0 0.0
      %1029 = vmatpush2.msra.mxu0 0.0
      %1030 = vmatprep.subr.mxu0 0.0
      %1031 = vmatpush2.msra.mxu0 0.0
      %1032 = vmatprep.subr.mxu0 0.0
      %1033 = vmatpush2.msra.mxu0 0.0
      %1034 = vmatprep.subr.mxu0 0.0
      %1035 = vmatpush2.msra.mxu0 0.0
      %1036 = vmatprep.subr.mxu0 0.0
      %1037 = vmatpush2.msra.mxu0 0.0
      %1038 = vmatprep.subr.mxu0 0.0
      %1039 = vmatpush2.msra.mxu0 0.0
      %1040 = vmatprep.subr.mxu0 0.0
      %1041 = vmatpush2.msra.mxu0 0.0
      %1042 = vmatprep.subr.mxu0 0.0
      %1043 = vmatpush2.msra.mxu0 0.0
      %1044 = vmatprep.mubr.f32.mxu0 0.0
      %1045 = vmatmul.mubr.f32.gmra.mxu0 %v972
      %v1046 = vpop.f32.mrf.mxu0
      %v1047 = vadd.f32 0.0, %v1046
      %v1048 = vpop.f32.mrf.mxu0
      %v1049 = vadd.f32 0.0, %v1048
      %1050 = vdwg.mxu0
      %v1051 = vadd.f32 %v947, %v1047
      %v1052 = vadd.f32 %v948, %v1049
      %1053 = vrot.lane.b32.xlu0 %v240, 111
      %v1054 = vpop.permute.xlu0 %1053
      %1055 = vrot.lane.b32.xlu0 %v242, 111
      %v1056 = vpop.permute.xlu0 %1055
      %vm1057 = vcmp.lt.s32.totalorder %v249, 111
      %v1058 = vsel %vm1057, %v1054, %v1056
      %v1059 = vsel %vm1057, %v1056, %v1054
      %v1061 = vlaneseq
      %v1062 = vshrl.u32 %v1061, 7
      %v1063 = vsub.s32 0, %v1062
      %v1064 = vrot.slane %v239, %v1063
      %v1065 = vlaneseq
      %v1066 = vshrl.u32 %v1065, 7
      %v1067 = vsub.s32 1, %v1066
      %v1068 = vrot.slane %v239, %v1067
      %v1071 = vmul.f32 %v1058, %v1064
      %v1072 = vmul.f32 %v1059, %v1068
      %s1073 = scalar_lea.vmem %s1, 32
      %v1074 = vld [vmem:[%s1073] sm:$0xf]
      %v1076 = vsel %vm289, %v1074, 0
      %v1079 = vsel %vm293, %v1071, 0
      %v1082 = vsel %vm293, %v1072, 0
      %1084 = vmatprep.subr.mxu0 0.0
      %1085 = vmatpush1.msra.mxu0 0.0
      %1086 = vmatprep.subr.mxu0 0.0
      %1087 = vmatpush1.msra.mxu0 0.0
      %1088 = vmatprep.subr.mxu0 0.0
      %1089 = vmatpush1.msra.mxu0 0.0
      %1090 = vmatprep.subr.mxu0 0.0
      %1091 = vmatpush1.msra.mxu0 0.0
      %1092 = vmatprep.subr.mxu0 0.0
      %1093 = vmatpush1.msra.mxu0 0.0
      %1094 = vmatprep.subr.mxu0 0.0
      %1095 = vmatpush1.msra.mxu0 0.0
      %1096 = vmatprep.subr.mxu0 0.0
      %1097 = vmatpush1.msra.mxu0 0.0
      %1098 = vmatprep.subr.mxu0 0.0
      %1099 = vmatpush1.msra.mxu0 0.0
      %1100 = vmatprep.subr.mxu0 0.0
      %1101 = vmatpush1.msra.mxu0 0.0
      %1102 = vmatprep.subr.mxu0 0.0
      %1103 = vmatpush1.msra.mxu0 0.0
      %1104 = vmatprep.subr.mxu0 0.0
      %1105 = vmatpush1.msra.mxu0 0.0
      %1106 = vmatprep.subr.mxu0 0.0
      %1107 = vmatpush1.msra.mxu0 0.0
      %1108 = vmatprep.subr.mxu0 0.0
      %1109 = vmatpush1.msra.mxu0 0.0
      %1110 = vmatprep.subr.mxu0 0.0
      %1111 = vmatpush1.msra.mxu0 0.0
      %1112 = vmatprep.subr.mxu0 0.0
      %1113 = vmatpush1.msra.mxu0 0.0
      %1114 = vmatprep.subr.mxu0 %v1082
      %1115 = vmatpush1.msra.mxu0 %v1079
      %1116 = vmatprep.subr.mxu0 0.0
      %1117 = vmatpush2.msra.mxu0 0.0
      %1118 = vmatprep.subr.mxu0 0.0
      %1119 = vmatpush2.msra.mxu0 0.0
      %1120 = vmatprep.subr.mxu0 0.0
      %1121 = vmatpush2.msra.mxu0 0.0
      %1122 = vmatprep.subr.mxu0 0.0
      %1123 = vmatpush2.msra.mxu0 0.0
      %1124 = vmatprep.subr.mxu0 0.0
      %1125 = vmatpush2.msra.mxu0 0.0
      %1126 = vmatprep.subr.mxu0 0.0
      %1127 = vmatpush2.msra.mxu0 0.0
      %1128 = vmatprep.subr.mxu0 0.0
      %1129 = vmatpush2.msra.mxu0 0.0
      %1130 = vmatprep.subr.mxu0 0.0
      %1131 = vmatpush2.msra.mxu0 0.0
      %1132 = vmatprep.subr.mxu0 0.0
      %1133 = vmatpush2.msra.mxu0 0.0
      %1134 = vmatprep.subr.mxu0 0.0
      %1135 = vmatpush2.msra.mxu0 0.0
      %1136 = vmatprep.subr.mxu0 0.0
      %1137 = vmatpush2.msra.mxu0 0.0
      %1138 = vmatprep.subr.mxu0 0.0
      %1139 = vmatpush2.msra.mxu0 0.0
      %1140 = vmatprep.subr.mxu0 0.0
      %1141 = vmatpush2.msra.mxu0 0.0
      %1142 = vmatprep.subr.mxu0 0.0
      %1143 = vmatpush2.msra.mxu0 0.0
      %1144 = vmatprep.subr.mxu0 0.0
      %1145 = vmatpush2.msra.mxu0 0.0
      %1146 = vmatprep.subr.mxu0 0.0
      %1147 = vmatpush2.msra.mxu0 0.0
      %1148 = vmatprep.mubr.f32.mxu0 0.0
      %1149 = vmatmul.mubr.f32.gmra.mxu0 %v1076
      %v1150 = vpop.f32.mrf.mxu0
      %v1151 = vadd.f32 0.0, %v1150
      %v1152 = vpop.f32.mrf.mxu0
      %v1153 = vadd.f32 0.0, %v1152
      %1154 = vdwg.mxu0
      %v1155 = vadd.f32 %v1051, %v1151
      %v1156 = vadd.f32 %v1052, %v1153
      %v1157 = vld [vmem:[%s2] sm:$0xf]
      %1159 = vset.pattern.permute.xlu0 0
      %1160 = vperm.xlu0 %1159, %v1157
      %v1161 = vpop.permute.xlu0 %1160
      %v1163 = vmul.f32 %v1155, %v1161
      %v1164 = vmul.f32 %v1156, %v1161
      %v1165 = vld [vmem:[%s3] sm:$0xf]
      %1167 = vset.pattern.permute.xlu0 0
      %1168 = vperm.xlu0 %1167, %v1165
      %v1169 = vpop.permute.xlu0 %1168
      %v1171 = vadd.f32 %v1163, %v1169
      %v1172 = vadd.f32 %v1164, %v1169
      %v1173 = vmax.f32 %v1171, 0.0
      %v1174 = vmax.f32 %v1172, 0.0
      %v1175 = vadd.f32 %v240, 0.0
      %1176 = vrot.lane.b32.xlu0 %v1173, 17
      %v1177 = vpop.permute.xlu0 %1176
      %1178 = vrot.lane.b32.xlu0 %v1174, 17
      %v1179 = vpop.permute.xlu0 %1178
      %v1180 = vsel %vm250, %v1177, %v1179
      %v1181 = vsel %vm250, %v1179, %v1177
      %v1182 = vmul.f32 %v1181, %v257
      %v1183 = vmul.f32 %v1180, %v261
      %s1184 = scalar_lea.vmem %s1, 36
      %v1185 = vld [vmem:[%s1184] sm:$0xf]
      %v1187 = vsel %vm289, %v1185, 0
      %v1190 = vsel %vm293, %v1182, 0
      %v1193 = vsel %vm293, %v1183, 0
      %1195 = vmatprep.subr.mxu0 0.0
      %1196 = vmatpush1.msra.mxu0 0.0
      %1197 = vmatprep.subr.mxu0 0.0
      %1198 = vmatpush1.msra.mxu0 0.0
      %1199 = vmatprep.subr.mxu0 0.0
      %1200 = vmatpush1.msra.mxu0 0.0
      %1201 = vmatprep.subr.mxu0 0.0
      %1202 = vmatpush1.msra.mxu0 0.0
      %1203 = vmatprep.subr.mxu0 0.0
      %1204 = vmatpush1.msra.mxu0 0.0
      %1205 = vmatprep.subr.mxu0 0.0
      %1206 = vmatpush1.msra.mxu0 0.0
      %1207 = vmatprep.subr.mxu0 0.0
      %1208 = vmatpush1.msra.mxu0 0.0
      %1209 = vmatprep.subr.mxu0 0.0
      %1210 = vmatpush1.msra.mxu0 0.0
      %1211 = vmatprep.subr.mxu0 0.0
      %1212 = vmatpush1.msra.mxu0 0.0
      %1213 = vmatprep.subr.mxu0 0.0
      %1214 = vmatpush1.msra.mxu0 0.0
      %1215 = vmatprep.subr.mxu0 0.0
      %1216 = vmatpush1.msra.mxu0 0.0
      %1217 = vmatprep.subr.mxu0 0.0
      %1218 = vmatpush1.msra.mxu0 0.0
      %1219 = vmatprep.subr.mxu0 0.0
      %1220 = vmatpush1.msra.mxu0 0.0
      %1221 = vmatprep.subr.mxu0 0.0
      %1222 = vmatpush1.msra.mxu0 0.0
      %1223 = vmatprep.subr.mxu0 0.0
      %1224 = vmatpush1.msra.mxu0 0.0
      %1225 = vmatprep.subr.mxu0 %v1193
      %1226 = vmatpush1.msra.mxu0 %v1190
      %1227 = vmatprep.subr.mxu0 0.0
      %1228 = vmatpush2.msra.mxu0 0.0
      %1229 = vmatprep.subr.mxu0 0.0
      %1230 = vmatpush2.msra.mxu0 0.0
      %1231 = vmatprep.subr.mxu0 0.0
      %1232 = vmatpush2.msra.mxu0 0.0
      %1233 = vmatprep.subr.mxu0 0.0
      %1234 = vmatpush2.msra.mxu0 0.0
      %1235 = vmatprep.subr.mxu0 0.0
      %1236 = vmatpush2.msra.mxu0 0.0
      %1237 = vmatprep.subr.mxu0 0.0
      %1238 = vmatpush2.msra.mxu0 0.0
      %1239 = vmatprep.subr.mxu0 0.0
      %1240 = vmatpush2.msra.mxu0 0.0
      %1241 = vmatprep.subr.mxu0 0.0
      %1242 = vmatpush2.msra.mxu0 0.0
      %1243 = vmatprep.subr.mxu0 0.0
      %1244 = vmatpush2.msra.mxu0 0.0
      %1245 = vmatprep.subr.mxu0 0.0
      %1246 = vmatpush2.msra.mxu0 0.0
      %1247 = vmatprep.subr.mxu0 0.0
      %1248 = vmatpush2.msra.mxu0 0.0
      %1249 = vmatprep.subr.mxu0 0.0
      %1250 = vmatpush2.msra.mxu0 0.0
      %1251 = vmatprep.subr.mxu0 0.0
      %1252 = vmatpush2.msra.mxu0 0.0
      %1253 = vmatprep.subr.mxu0 0.0
      %1254 = vmatpush2.msra.mxu0 0.0
      %1255 = vmatprep.subr.mxu0 0.0
      %1256 = vmatpush2.msra.mxu0 0.0
      %1257 = vmatprep.subr.mxu0 0.0
      %1258 = vmatpush2.msra.mxu0 0.0
      %1259 = vmatprep.mubr.f32.mxu0 0.0
      %1260 = vmatmul.mubr.f32.gmra.mxu0 %v1187
      %v1261 = vpop.f32.mrf.mxu0
      %v1262 = vadd.f32 0.0, %v1261
      %v1263 = vpop.f32.mrf.mxu0
      %v1264 = vadd.f32 0.0, %v1263
      %1265 = vdwg.mxu0
      %v1268 = vcombine.low %v1262, %v1264
      %v1270 = vadd.f32 %v1175, %v1268
      %1271 = vrot.lane.b32.xlu0 %v1173, 16
      %v1272 = vpop.permute.xlu0 %1271
      %1273 = vrot.lane.b32.xlu0 %v1174, 16
      %v1274 = vpop.permute.xlu0 %1273
      %v1275 = vsel %vm271, %v1272, %v1274
      %v1276 = vsel %vm271, %v1274, %v1272
      %v1277 = vmul.f32 %v1276, %v278
      %v1278 = vmul.f32 %v1275, %v282
      %s1279 = scalar_lea.vmem %s1, 40
      %v1280 = vld [vmem:[%s1279] sm:$0xf]
      %v1282 = vsel %vm289, %v1280, 0
      %v1285 = vsel %vm293, %v1277, 0
      %v1288 = vsel %vm293, %v1278, 0
      %1290 = vmatprep.subr.mxu0 0.0
      %1291 = vmatpush1.msra.mxu0 0.0
      %1292 = vmatprep.subr.mxu0 0.0
      %1293 = vmatpush1.msra.mxu0 0.0
      %1294 = vmatprep.subr.mxu0 0.0
      %1295 = vmatpush1.msra.mxu0 0.0
      %1296 = vmatprep.subr.mxu0 0.0
      %1297 = vmatpush1.msra.mxu0 0.0
      %1298 = vmatprep.subr.mxu0 0.0
      %1299 = vmatpush1.msra.mxu0 0.0
      %1300 = vmatprep.subr.mxu0 0.0
      %1301 = vmatpush1.msra.mxu0 0.0
      %1302 = vmatprep.subr.mxu0 0.0
      %1303 = vmatpush1.msra.mxu0 0.0
      %1304 = vmatprep.subr.mxu0 0.0
      %1305 = vmatpush1.msra.mxu0 0.0
      %1306 = vmatprep.subr.mxu0 0.0
      %1307 = vmatpush1.msra.mxu0 0.0
      %1308 = vmatprep.subr.mxu0 0.0
      %1309 = vmatpush1.msra.mxu0 0.0
      %1310 = vmatprep.subr.mxu0 0.0
      %1311 = vmatpush1.msra.mxu0 0.0
      %1312 = vmatprep.subr.mxu0 0.0
      %1313 = vmatpush1.msra.mxu0 0.0
      %1314 = vmatprep.subr.mxu0 0.0
      %1315 = vmatpush1.msra.mxu0 0.0
      %1316 = vmatprep.subr.mxu0 0.0
      %1317 = vmatpush1.msra.mxu0 0.0
      %1318 = vmatprep.subr.mxu0 0.0
      %1319 = vmatpush1.msra.mxu0 0.0
      %1320 = vmatprep.subr.mxu0 %v1288
      %1321 = vmatpush1.msra.mxu0 %v1285
      %1322 = vmatprep.subr.mxu0 0.0
      %1323 = vmatpush2.msra.mxu0 0.0
      %1324 = vmatprep.subr.mxu0 0.0
      %1325 = vmatpush2.msra.mxu0 0.0
      %1326 = vmatprep.subr.mxu0 0.0
      %1327 = vmatpush2.msra.mxu0 0.0
      %1328 = vmatprep.subr.mxu0 0.0
      %1329 = vmatpush2.msra.mxu0 0.0
      %1330 = vmatprep.subr.mxu0 0.0
      %1331 = vmatpush2.msra.mxu0 0.0
      %1332 = vmatprep.subr.mxu0 0.0
      %1333 = vmatpush2.msra.mxu0 0.0
      %1334 = vmatprep.subr.mxu0 0.0
      %1335 = vmatpush2.msra.mxu0 0.0
      %1336 = vmatprep.subr.mxu0 0.0
      %1337 = vmatpush2.msra.mxu0 0.0
      %1338 = vmatprep.subr.mxu0 0.0
      %1339 = vmatpush2.msra.mxu0 0.0
      %1340 = vmatprep.subr.mxu0 0.0
      %1341 = vmatpush2.msra.mxu0 0.0
      %1342 = vmatprep.subr.mxu0 0.0
      %1343 = vmatpush2.msra.mxu0 0.0
      %1344 = vmatprep.subr.mxu0 0.0
      %1345 = vmatpush2.msra.mxu0 0.0
      %1346 = vmatprep.subr.mxu0 0.0
      %1347 = vmatpush2.msra.mxu0 0.0
      %1348 = vmatprep.subr.mxu0 0.0
      %1349 = vmatpush2.msra.mxu0 0.0
      %1350 = vmatprep.subr.mxu0 0.0
      %1351 = vmatpush2.msra.mxu0 0.0
      %1352 = vmatprep.subr.mxu0 0.0
      %1353 = vmatpush2.msra.mxu0 0.0
      %1354 = vmatprep.mubr.f32.mxu0 0.0
      %1355 = vmatmul.mubr.f32.gmra.mxu0 %v1282
      %v1356 = vpop.f32.mrf.mxu0
      %v1357 = vadd.f32 0.0, %v1356
      %v1358 = vpop.f32.mrf.mxu0
      %v1359 = vadd.f32 0.0, %v1358
      %1360 = vdwg.mxu0
      %v1363 = vcombine.low %v1357, %v1359
      %v1365 = vadd.f32 %v1270, %v1363
      %1366 = vrot.lane.b32.xlu0 %v1173, 15
      %v1367 = vpop.permute.xlu0 %1366
      %1368 = vrot.lane.b32.xlu0 %v1174, 15
      %v1369 = vpop.permute.xlu0 %1368
      %v1370 = vsel %vm455, %v1367, %v1369
      %v1371 = vsel %vm455, %v1369, %v1367
      %v1372 = vmul.f32 %v1371, %v462
      %v1373 = vmul.f32 %v1370, %v466
      %s1374 = scalar_lea.vmem %s1, 44
      %v1375 = vld [vmem:[%s1374] sm:$0xf]
      %v1377 = vsel %vm289, %v1375, 0
      %v1380 = vsel %vm293, %v1372, 0
      %v1383 = vsel %vm293, %v1373, 0
      %1385 = vmatprep.subr.mxu0 0.0
      %1386 = vmatpush1.msra.mxu0 0.0
      %1387 = vmatprep.subr.mxu0 0.0
      %1388 = vmatpush1.msra.mxu0 0.0
      %1389 = vmatprep.subr.mxu0 0.0
      %1390 = vmatpush1.msra.mxu0 0.0
      %1391 = vmatprep.subr.mxu0 0.0
      %1392 = vmatpush1.msra.mxu0 0.0
      %1393 = vmatprep.subr.mxu0 0.0
      %1394 = vmatpush1.msra.mxu0 0.0
      %1395 = vmatprep.subr.mxu0 0.0
      %1396 = vmatpush1.msra.mxu0 0.0
      %1397 = vmatprep.subr.mxu0 0.0
      %1398 = vmatpush1.msra.mxu0 0.0
      %1399 = vmatprep.subr.mxu0 0.0
      %1400 = vmatpush1.msra.mxu0 0.0
      %1401 = vmatprep.subr.mxu0 0.0
      %1402 = vmatpush1.msra.mxu0 0.0
      %1403 = vmatprep.subr.mxu0 0.0
      %1404 = vmatpush1.msra.mxu0 0.0
      %1405 = vmatprep.subr.mxu0 0.0
      %1406 = vmatpush1.msra.mxu0 0.0
      %1407 = vmatprep.subr.mxu0 0.0
      %1408 = vmatpush1.msra.mxu0 0.0
      %1409 = vmatprep.subr.mxu0 0.0
      %1410 = vmatpush1.msra.mxu0 0.0
      %1411 = vmatprep.subr.mxu0 0.0
      %1412 = vmatpush1.msra.mxu0 0.0
      %1413 = vmatprep.subr.mxu0 0.0
      %1414 = vmatpush1.msra.mxu0 0.0
      %1415 = vmatprep.subr.mxu0 %v1383
      %1416 = vmatpush1.msra.mxu0 %v1380
      %1417 = vmatprep.subr.mxu0 0.0
      %1418 = vmatpush2.msra.mxu0 0.0
      %1419 = vmatprep.subr.mxu0 0.0
      %1420 = vmatpush2.msra.mxu0 0.0
      %1421 = vmatprep.subr.mxu0 0.0
      %1422 = vmatpush2.msra.mxu0 0.0
      %1423 = vmatprep.subr.mxu0 0.0
      %1424 = vmatpush2.msra.mxu0 0.0
      %1425 = vmatprep.subr.mxu0 0.0
      %1426 = vmatpush2.msra.mxu0 0.0
      %1427 = vmatprep.subr.mxu0 0.0
      %1428 = vmatpush2.msra.mxu0 0.0
      %1429 = vmatprep.subr.mxu0 0.0
      %1430 = vmatpush2.msra.mxu0 0.0
      %1431 = vmatprep.subr.mxu0 0.0
      %1432 = vmatpush2.msra.mxu0 0.0
      %1433 = vmatprep.subr.mxu0 0.0
      %1434 = vmatpush2.msra.mxu0 0.0
      %1435 = vmatprep.subr.mxu0 0.0
      %1436 = vmatpush2.msra.mxu0 0.0
      %1437 = vmatprep.subr.mxu0 0.0
      %1438 = vmatpush2.msra.mxu0 0.0
      %1439 = vmatprep.subr.mxu0 0.0
      %1440 = vmatpush2.msra.mxu0 0.0
      %1441 = vmatprep.subr.mxu0 0.0
      %1442 = vmatpush2.msra.mxu0 0.0
      %1443 = vmatprep.subr.mxu0 0.0
      %1444 = vmatpush2.msra.mxu0 0.0
      %1445 = vmatprep.subr.mxu0 0.0
      %1446 = vmatpush2.msra.mxu0 0.0
      %1447 = vmatprep.subr.mxu0 0.0
      %1448 = vmatpush2.msra.mxu0 0.0
      %1449 = vmatprep.mubr.f32.mxu0 0.0
      %1450 = vmatmul.mubr.f32.gmra.mxu0 %v1377
      %v1451 = vpop.f32.mrf.mxu0
      %v1452 = vadd.f32 0.0, %v1451
      %v1453 = vpop.f32.mrf.mxu0
      %v1454 = vadd.f32 0.0, %v1453
      %1455 = vdwg.mxu0
      %v1458 = vcombine.low %v1452, %v1454
      %v1460 = vadd.f32 %v1365, %v1458
      %1461 = vrot.lane.b32.xlu0 %v1173, 1
      %v1462 = vpop.permute.xlu0 %1461
      %1463 = vrot.lane.b32.xlu0 %v1174, 1
      %v1464 = vpop.permute.xlu0 %1463
      %v1465 = vsel %vm559, %v1462, %v1464
      %v1466 = vsel %vm559, %v1464, %v1462
      %v1467 = vmul.f32 %v1466, %v566
      %v1468 = vmul.f32 %v1465, %v570
      %s1469 = scalar_lea.vmem %s1, 48
      %v1470 = vld [vmem:[%s1469] sm:$0xf]
      %v1472 = vsel %vm289, %v1470, 0
      %v1475 = vsel %vm293, %v1467, 0
      %v1478 = vsel %vm293, %v1468, 0
      %1480 = vmatprep.subr.mxu0 0.0
      %1481 = vmatpush1.msra.mxu0 0.0
      %1482 = vmatprep.subr.mxu0 0.0
      %1483 = vmatpush1.msra.mxu0 0.0
      %1484 = vmatprep.subr.mxu0 0.0
      %1485 = vmatpush1.msra.mxu0 0.0
      %1486 = vmatprep.subr.mxu0 0.0
      %1487 = vmatpush1.msra.mxu0 0.0
      %1488 = vmatprep.subr.mxu0 0.0
      %1489 = vmatpush1.msra.mxu0 0.0
      %1490 = vmatprep.subr.mxu0 0.0
      %1491 = vmatpush1.msra.mxu0 0.0
      %1492 = vmatprep.subr.mxu0 0.0
      %1493 = vmatpush1.msra.mxu0 0.0
      %1494 = vmatprep.subr.mxu0 0.0
      %1495 = vmatpush1.msra.mxu0 0.0
      %1496 = vmatprep.subr.mxu0 0.0
      %1497 = vmatpush1.msra.mxu0 0.0
      %1498 = vmatprep.subr.mxu0 0.0
      %1499 = vmatpush1.msra.mxu0 0.0
      %1500 = vmatprep.subr.mxu0 0.0
      %1501 = vmatpush1.msra.mxu0 0.0
      %1502 = vmatprep.subr.mxu0 0.0
      %1503 = vmatpush1.msra.mxu0 0.0
      %1504 = vmatprep.subr.mxu0 0.0
      %1505 = vmatpush1.msra.mxu0 0.0
      %1506 = vmatprep.subr.mxu0 0.0
      %1507 = vmatpush1.msra.mxu0 0.0
      %1508 = vmatprep.subr.mxu0 0.0
      %1509 = vmatpush1.msra.mxu0 0.0
      %1510 = vmatprep.subr.mxu0 %v1478
      %1511 = vmatpush1.msra.mxu0 %v1475
      %1512 = vmatprep.subr.mxu0 0.0
      %1513 = vmatpush2.msra.mxu0 0.0
      %1514 = vmatprep.subr.mxu0 0.0
      %1515 = vmatpush2.msra.mxu0 0.0
      %1516 = vmatprep.subr.mxu0 0.0
      %1517 = vmatpush2.msra.mxu0 0.0
      %1518 = vmatprep.subr.mxu0 0.0
      %1519 = vmatpush2.msra.mxu0 0.0
      %1520 = vmatprep.subr.mxu0 0.0
      %1521 = vmatpush2.msra.mxu0 0.0
      %1522 = vmatprep.subr.mxu0 0.0
      %1523 = vmatpush2.msra.mxu0 0.0
      %1524 = vmatprep.subr.mxu0 0.0
      %1525 = vmatpush2.msra.mxu0 0.0
      %1526 = vmatprep.subr.mxu0 0.0
      %1527 = vmatpush2.msra.mxu0 0.0
      %1528 = vmatprep.subr.mxu0 0.0
      %1529 = vmatpush2.msra.mxu0 0.0
      %1530 = vmatprep.subr.mxu0 0.0
      %1531 = vmatpush2.msra.mxu0 0.0
      %1532 = vmatprep.subr.mxu0 0.0
      %1533 = vmatpush2.msra.mxu0 0.0
      %1534 = vmatprep.subr.mxu0 0.0
      %1535 = vmatpush2.msra.mxu0 0.0
      %1536 = vmatprep.subr.mxu0 0.0
      %1537 = vmatpush2.msra.mxu0 0.0
      %1538 = vmatprep.subr.mxu0 0.0
      %1539 = vmatpush2.msra.mxu0 0.0
      %1540 = vmatprep.subr.mxu0 0.0
      %1541 = vmatpush2.msra.mxu0 0.0
      %1542 = vmatprep.subr.mxu0 0.0
      %1543 = vmatpush2.msra.mxu0 0.0
      %1544 = vmatprep.mubr.f32.mxu0 0.0
      %1545 = vmatmul.mubr.f32.gmra.mxu0 %v1472
      %v1546 = vpop.f32.mrf.mxu0
      %v1547 = vadd.f32 0.0, %v1546
      %v1548 = vpop.f32.mrf.mxu0
      %v1549 = vadd.f32 0.0, %v1548
      %1550 = vdwg.mxu0
      %v1553 = vcombine.low %v1547, %v1549
      %v1555 = vadd.f32 %v1460, %v1553
      %s1556 = scalar_lea.vmem %s1, 52
      %v1557 = vld [vmem:[%s1556] sm:$0xf]
      %v1559 = vsel %vm289, %v1557, 0
      %v1562 = vsel %vm293, %v1173, 0
      %v1565 = vsel %vm293, %v1174, 0
      %1567 = vmatprep.subr.mxu0 0.0
      %1568 = vmatpush1.msra.mxu0 0.0
      %1569 = vmatprep.subr.mxu0 0.0
      %1570 = vmatpush1.msra.mxu0 0.0
      %1571 = vmatprep.subr.mxu0 0.0
      %1572 = vmatpush1.msra.mxu0 0.0
      %1573 = vmatprep.subr.mxu0 0.0
      %1574 = vmatpush1.msra.mxu0 0.0
      %1575 = vmatprep.subr.mxu0 0.0
      %1576 = vmatpush1.msra.mxu0 0.0
      %1577 = vmatprep.subr.mxu0 0.0
      %1578 = vmatpush1.msra.mxu0 0.0
      %1579 = vmatprep.subr.mxu0 0.0
      %1580 = vmatpush1.msra.mxu0 0.0
      %1581 = vmatprep.subr.mxu0 0.0
      %1582 = vmatpush1.msra.mxu0 0.0
      %1583 = vmatprep.subr.mxu0 0.0
      %1584 = vmatpush1.msra.mxu0 0.0
      %1585 = vmatprep.subr.mxu0 0.0
      %1586 = vmatpush1.msra.mxu0 0.0
      %1587 = vmatprep.subr.mxu0 0.0
      %1588 = vmatpush1.msra.mxu0 0.0
      %1589 = vmatprep.subr.mxu0 0.0
      %1590 = vmatpush1.msra.mxu0 0.0
      %1591 = vmatprep.subr.mxu0 0.0
      %1592 = vmatpush1.msra.mxu0 0.0
      %1593 = vmatprep.subr.mxu0 0.0
      %1594 = vmatpush1.msra.mxu0 0.0
      %1595 = vmatprep.subr.mxu0 0.0
      %1596 = vmatpush1.msra.mxu0 0.0
      %1597 = vmatprep.subr.mxu0 %v1565
      %1598 = vmatpush1.msra.mxu0 %v1562
      %1599 = vmatprep.subr.mxu0 0.0
      %1600 = vmatpush2.msra.mxu0 0.0
      %1601 = vmatprep.subr.mxu0 0.0
      %1602 = vmatpush2.msra.mxu0 0.0
      %1603 = vmatprep.subr.mxu0 0.0
      %1604 = vmatpush2.msra.mxu0 0.0
      %1605 = vmatprep.subr.mxu0 0.0
      %1606 = vmatpush2.msra.mxu0 0.0
      %1607 = vmatprep.subr.mxu0 0.0
      %1608 = vmatpush2.msra.mxu0 0.0
      %1609 = vmatprep.subr.mxu0 0.0
      %1610 = vmatpush2.msra.mxu0 0.0
      %1611 = vmatprep.subr.mxu0 0.0
      %1612 = vmatpush2.msra.mxu0 0.0
      %1613 = vmatprep.subr.mxu0 0.0
      %1614 = vmatpush2.msra.mxu0 0.0
      %1615 = vmatprep.subr.mxu0 0.0
      %1616 = vmatpush2.msra.mxu0 0.0
      %1617 = vmatprep.subr.mxu0 0.0
      %1618 = vmatpush2.msra.mxu0 0.0
      %1619 = vmatprep.subr.mxu0 0.0
      %1620 = vmatpush2.msra.mxu0 0.0
      %1621 = vmatprep.subr.mxu0 0.0
      %1622 = vmatpush2.msra.mxu0 0.0
      %1623 = vmatprep.subr.mxu0 0.0
      %1624 = vmatpush2.msra.mxu0 0.0
      %1625 = vmatprep.subr.mxu0 0.0
      %1626 = vmatpush2.msra.mxu0 0.0
      %1627 = vmatprep.subr.mxu0 0.0
      %1628 = vmatpush2.msra.mxu0 0.0
      %1629 = vmatprep.subr.mxu0 0.0
      %1630 = vmatpush2.msra.mxu0 0.0
      %1631 = vmatprep.mubr.f32.mxu0 0.0
      %1632 = vmatmul.mubr.f32.gmra.mxu0 %v1559
      %v1633 = vpop.f32.mrf.mxu0
      %v1634 = vadd.f32 0.0, %v1633
      %v1635 = vpop.f32.mrf.mxu0
      %v1636 = vadd.f32 0.0, %v1635
      %1637 = vdwg.mxu0
      %v1640 = vcombine.low %v1634, %v1636
      %v1642 = vadd.f32 %v1555, %v1640
      %1643 = vrot.lane.b32.xlu0 %v1173, 127
      %v1644 = vpop.permute.xlu0 %1643
      %1645 = vrot.lane.b32.xlu0 %v1174, 127
      %v1646 = vpop.permute.xlu0 %1645
      %v1647 = vsel %vm745, %v1644, %v1646
      %v1648 = vsel %vm745, %v1646, %v1644
      %v1649 = vmul.f32 %v1647, %v752
      %v1650 = vmul.f32 %v1648, %v756
      %s1651 = scalar_lea.vmem %s1, 56
      %v1652 = vld [vmem:[%s1651] sm:$0xf]
      %v1654 = vsel %vm289, %v1652, 0
      %v1657 = vsel %vm293, %v1649, 0
      %v1660 = vsel %vm293, %v1650, 0
      %1662 = vmatprep.subr.mxu0 0.0
      %1663 = vmatpush1.msra.mxu0 0.0
      %1664 = vmatprep.subr.mxu0 0.0
      %1665 = vmatpush1.msra.mxu0 0.0
      %1666 = vmatprep.subr.mxu0 0.0
      %1667 = vmatpush1.msra.mxu0 0.0
      %1668 = vmatprep.subr.mxu0 0.0
      %1669 = vmatpush1.msra.mxu0 0.0
      %1670 = vmatprep.subr.mxu0 0.0
      %1671 = vmatpush1.msra.mxu0 0.0
      %1672 = vmatprep.subr.mxu0 0.0
      %1673 = vmatpush1.msra.mxu0 0.0
      %1674 = vmatprep.subr.mxu0 0.0
      %1675 = vmatpush1.msra.mxu0 0.0
      %1676 = vmatprep.subr.mxu0 0.0
      %1677 = vmatpush1.msra.mxu0 0.0
      %1678 = vmatprep.subr.mxu0 0.0
      %1679 = vmatpush1.msra.mxu0 0.0
      %1680 = vmatprep.subr.mxu0 0.0
      %1681 = vmatpush1.msra.mxu0 0.0
      %1682 = vmatprep.subr.mxu0 0.0
      %1683 = vmatpush1.msra.mxu0 0.0
      %1684 = vmatprep.subr.mxu0 0.0
      %1685 = vmatpush1.msra.mxu0 0.0
      %1686 = vmatprep.subr.mxu0 0.0
      %1687 = vmatpush1.msra.mxu0 0.0
      %1688 = vmatprep.subr.mxu0 0.0
      %1689 = vmatpush1.msra.mxu0 0.0
      %1690 = vmatprep.subr.mxu0 0.0
      %1691 = vmatpush1.msra.mxu0 0.0
      %1692 = vmatprep.subr.mxu0 %v1660
      %1693 = vmatpush1.msra.mxu0 %v1657
      %1694 = vmatprep.subr.mxu0 0.0
      %1695 = vmatpush2.msra.mxu0 0.0
      %1696 = vmatprep.subr.mxu0 0.0
      %1697 = vmatpush2.msra.mxu0 0.0
      %1698 = vmatprep.subr.mxu0 0.0
      %1699 = vmatpush2.msra.mxu0 0.0
      %1700 = vmatprep.subr.mxu0 0.0
      %1701 = vmatpush2.msra.mxu0 0.0
      %1702 = vmatprep.subr.mxu0 0.0
      %1703 = vmatpush2.msra.mxu0 0.0
      %1704 = vmatprep.subr.mxu0 0.0
      %1705 = vmatpush2.msra.mxu0 0.0
      %1706 = vmatprep.subr.mxu0 0.0
      %1707 = vmatpush2.msra.mxu0 0.0
      %1708 = vmatprep.subr.mxu0 0.0
      %1709 = vmatpush2.msra.mxu0 0.0
      %1710 = vmatprep.subr.mxu0 0.0
      %1711 = vmatpush2.msra.mxu0 0.0
      %1712 = vmatprep.subr.mxu0 0.0
      %1713 = vmatpush2.msra.mxu0 0.0
      %1714 = vmatprep.subr.mxu0 0.0
      %1715 = vmatpush2.msra.mxu0 0.0
      %1716 = vmatprep.subr.mxu0 0.0
      %1717 = vmatpush2.msra.mxu0 0.0
      %1718 = vmatprep.subr.mxu0 0.0
      %1719 = vmatpush2.msra.mxu0 0.0
      %1720 = vmatprep.subr.mxu0 0.0
      %1721 = vmatpush2.msra.mxu0 0.0
      %1722 = vmatprep.subr.mxu0 0.0
      %1723 = vmatpush2.msra.mxu0 0.0
      %1724 = vmatprep.subr.mxu0 0.0
      %1725 = vmatpush2.msra.mxu0 0.0
      %1726 = vmatprep.mubr.f32.mxu0 0.0
      %1727 = vmatmul.mubr.f32.gmra.mxu0 %v1654
      %v1728 = vpop.f32.mrf.mxu0
      %v1729 = vadd.f32 0.0, %v1728
      %v1730 = vpop.f32.mrf.mxu0
      %v1731 = vadd.f32 0.0, %v1730
      %1732 = vdwg.mxu0
      %v1735 = vcombine.low %v1729, %v1731
      %v1737 = vadd.f32 %v1642, %v1735
      %1738 = vrot.lane.b32.xlu0 %v1173, 113
      %v1739 = vpop.permute.xlu0 %1738
      %1740 = vrot.lane.b32.xlu0 %v1174, 113
      %v1741 = vpop.permute.xlu0 %1740
      %v1742 = vsel %vm849, %v1739, %v1741
      %v1743 = vsel %vm849, %v1741, %v1739
      %v1744 = vmul.f32 %v1742, %v856
      %v1745 = vmul.f32 %v1743, %v860
      %s1746 = scalar_lea.vmem %s1, 60
      %v1747 = vld [vmem:[%s1746] sm:$0xf]
      %v1749 = vsel %vm289, %v1747, 0
      %v1752 = vsel %vm293, %v1744, 0
      %v1755 = vsel %vm293, %v1745, 0
      %1757 = vmatprep.subr.mxu0 0.0
      %1758 = vmatpush1.msra.mxu0 0.0
      %1759 = vmatprep.subr.mxu0 0.0
      %1760 = vmatpush1.msra.mxu0 0.0
      %1761 = vmatprep.subr.mxu0 0.0
      %1762 = vmatpush1.msra.mxu0 0.0
      %1763 = vmatprep.subr.mxu0 0.0
      %1764 = vmatpush1.msra.mxu0 0.0
      %1765 = vmatprep.subr.mxu0 0.0
      %1766 = vmatpush1.msra.mxu0 0.0
      %1767 = vmatprep.subr.mxu0 0.0
      %1768 = vmatpush1.msra.mxu0 0.0
      %1769 = vmatprep.subr.mxu0 0.0
      %1770 = vmatpush1.msra.mxu0 0.0
      %1771 = vmatprep.subr.mxu0 0.0
      %1772 = vmatpush1.msra.mxu0 0.0
      %1773 = vmatprep.subr.mxu0 0.0
      %1774 = vmatpush1.msra.mxu0 0.0
      %1775 = vmatprep.subr.mxu0 0.0
      %1776 = vmatpush1.msra.mxu0 0.0
      %1777 = vmatprep.subr.mxu0 0.0
      %1778 = vmatpush1.msra.mxu0 0.0
      %1779 = vmatprep.subr.mxu0 0.0
      %1780 = vmatpush1.msra.mxu0 0.0
      %1781 = vmatprep.subr.mxu0 0.0
      %1782 = vmatpush1.msra.mxu0 0.0
      %1783 = vmatprep.subr.mxu0 0.0
      %1784 = vmatpush1.msra.mxu0 0.0
      %1785 = vmatprep.subr.mxu0 0.0
      %1786 = vmatpush1.msra.mxu0 0.0
      %1787 = vmatprep.subr.mxu0 %v1755
      %1788 = vmatpush1.msra.mxu0 %v1752
      %1789 = vmatprep.subr.mxu0 0.0
      %1790 = vmatpush2.msra.mxu0 0.0
      %1791 = vmatprep.subr.mxu0 0.0
      %1792 = vmatpush2.msra.mxu0 0.0
      %1793 = vmatprep.subr.mxu0 0.0
      %1794 = vmatpush2.msra.mxu0 0.0
      %1795 = vmatprep.subr.mxu0 0.0
      %1796 = vmatpush2.msra.mxu0 0.0
      %1797 = vmatprep.subr.mxu0 0.0
      %1798 = vmatpush2.msra.mxu0 0.0
      %1799 = vmatprep.subr.mxu0 0.0
      %1800 = vmatpush2.msra.mxu0 0.0
      %1801 = vmatprep.subr.mxu0 0.0
      %1802 = vmatpush2.msra.mxu0 0.0
      %1803 = vmatprep.subr.mxu0 0.0
      %1804 = vmatpush2.msra.mxu0 0.0
      %1805 = vmatprep.subr.mxu0 0.0
      %1806 = vmatpush2.msra.mxu0 0.0
      %1807 = vmatprep.subr.mxu0 0.0
      %1808 = vmatpush2.msra.mxu0 0.0
      %1809 = vmatprep.subr.mxu0 0.0
      %1810 = vmatpush2.msra.mxu0 0.0
      %1811 = vmatprep.subr.mxu0 0.0
      %1812 = vmatpush2.msra.mxu0 0.0
      %1813 = vmatprep.subr.mxu0 0.0
      %1814 = vmatpush2.msra.mxu0 0.0
      %1815 = vmatprep.subr.mxu0 0.0
      %1816 = vmatpush2.msra.mxu0 0.0
      %1817 = vmatprep.subr.mxu0 0.0
      %1818 = vmatpush2.msra.mxu0 0.0
      %1819 = vmatprep.subr.mxu0 0.0
      %1820 = vmatpush2.msra.mxu0 0.0
      %1821 = vmatprep.mubr.f32.mxu0 0.0
      %1822 = vmatmul.mubr.f32.gmra.mxu0 %v1749
      %v1823 = vpop.f32.mrf.mxu0
      %v1824 = vadd.f32 0.0, %v1823
      %v1825 = vpop.f32.mrf.mxu0
      %v1826 = vadd.f32 0.0, %v1825
      %1827 = vdwg.mxu0
      %v1830 = vcombine.low %v1824, %v1826
      %v1832 = vadd.f32 %v1737, %v1830
      %1833 = vrot.lane.b32.xlu0 %v1173, 112
      %v1834 = vpop.permute.xlu0 %1833
      %1835 = vrot.lane.b32.xlu0 %v1174, 112
      %v1836 = vpop.permute.xlu0 %1835
      %v1837 = vsel %vm953, %v1834, %v1836
      %v1838 = vsel %vm953, %v1836, %v1834
      %v1839 = vmul.f32 %v1837, %v960
      %v1840 = vmul.f32 %v1838, %v964
      %s1841 = scalar_lea.vmem %s1, 64
      %v1842 = vld [vmem:[%s1841] sm:$0xf]
      %v1844 = vsel %vm289, %v1842, 0
      %v1847 = vsel %vm293, %v1839, 0
      %v1850 = vsel %vm293, %v1840, 0
      %1852 = vmatprep.subr.mxu0 0.0
      %1853 = vmatpush1.msra.mxu0 0.0
      %1854 = vmatprep.subr.mxu0 0.0
      %1855 = vmatpush1.msra.mxu0 0.0
      %1856 = vmatprep.subr.mxu0 0.0
      %1857 = vmatpush1.msra.mxu0 0.0
      %1858 = vmatprep.subr.mxu0 0.0
      %1859 = vmatpush1.msra.mxu0 0.0
      %1860 = vmatprep.subr.mxu0 0.0
      %1861 = vmatpush1.msra.mxu0 0.0
      %1862 = vmatprep.subr.mxu0 0.0
      %1863 = vmatpush1.msra.mxu0 0.0
      %1864 = vmatprep.subr.mxu0 0.0
      %1865 = vmatpush1.msra.mxu0 0.0
      %1866 = vmatprep.subr.mxu0 0.0
      %1867 = vmatpush1.msra.mxu0 0.0
      %1868 = vmatprep.subr.mxu0 0.0
      %1869 = vmatpush1.msra.mxu0 0.0
      %1870 = vmatprep.subr.mxu0 0.0
      %1871 = vmatpush1.msra.mxu0 0.0
      %1872 = vmatprep.subr.mxu0 0.0
      %1873 = vmatpush1.msra.mxu0 0.0
      %1874 = vmatprep.subr.mxu0 0.0
      %1875 = vmatpush1.msra.mxu0 0.0
      %1876 = vmatprep.subr.mxu0 0.0
      %1877 = vmatpush1.msra.mxu0 0.0
      %1878 = vmatprep.subr.mxu0 0.0
      %1879 = vmatpush1.msra.mxu0 0.0
      %1880 = vmatprep.subr.mxu0 0.0
      %1881 = vmatpush1.msra.mxu0 0.0
      %1882 = vmatprep.subr.mxu0 %v1850
      %1883 = vmatpush1.msra.mxu0 %v1847
      %1884 = vmatprep.subr.mxu0 0.0
      %1885 = vmatpush2.msra.mxu0 0.0
      %1886 = vmatprep.subr.mxu0 0.0
      %1887 = vmatpush2.msra.mxu0 0.0
      %1888 = vmatprep.subr.mxu0 0.0
      %1889 = vmatpush2.msra.mxu0 0.0
      %1890 = vmatprep.subr.mxu0 0.0
      %1891 = vmatpush2.msra.mxu0 0.0
      %1892 = vmatprep.subr.mxu0 0.0
      %1893 = vmatpush2.msra.mxu0 0.0
      %1894 = vmatprep.subr.mxu0 0.0
      %1895 = vmatpush2.msra.mxu0 0.0
      %1896 = vmatprep.subr.mxu0 0.0
      %1897 = vmatpush2.msra.mxu0 0.0
      %1898 = vmatprep.subr.mxu0 0.0
      %1899 = vmatpush2.msra.mxu0 0.0
      %1900 = vmatprep.subr.mxu0 0.0
      %1901 = vmatpush2.msra.mxu0 0.0
      %1902 = vmatprep.subr.mxu0 0.0
      %1903 = vmatpush2.msra.mxu0 0.0
      %1904 = vmatprep.subr.mxu0 0.0
      %1905 = vmatpush2.msra.mxu0 0.0
      %1906 = vmatprep.subr.mxu0 0.0
      %1907 = vmatpush2.msra.mxu0 0.0
      %1908 = vmatprep.subr.mxu0 0.0
      %1909 = vmatpush2.msra.mxu0 0.0
      %1910 = vmatprep.subr.mxu0 0.0
      %1911 = vmatpush2.msra.mxu0 0.0
      %1912 = vmatprep.subr.mxu0 0.0
      %1913 = vmatpush2.msra.mxu0 0.0
      %1914 = vmatprep.subr.mxu0 0.0
      %1915 = vmatpush2.msra.mxu0 0.0
      %1916 = vmatprep.mubr.f32.mxu0 0.0
      %1917 = vmatmul.mubr.f32.gmra.mxu0 %v1844
      %v1918 = vpop.f32.mrf.mxu0
      %v1919 = vadd.f32 0.0, %v1918
      %v1920 = vpop.f32.mrf.mxu0
      %v1921 = vadd.f32 0.0, %v1920
      %1922 = vdwg.mxu0
      %v1925 = vcombine.low %v1919, %v1921
      %v1927 = vadd.f32 %v1832, %v1925
      %1928 = vrot.lane.b32.xlu0 %v1173, 111
      %v1929 = vpop.permute.xlu0 %1928
      %1930 = vrot.lane.b32.xlu0 %v1174, 111
      %v1931 = vpop.permute.xlu0 %1930
      %v1932 = vsel %vm1057, %v1929, %v1931
      %v1933 = vsel %vm1057, %v1931, %v1929
      %v1934 = vmul.f32 %v1932, %v1064
      %v1935 = vmul.f32 %v1933, %v1068
      %s1936 = scalar_lea.vmem %s1, 68
      %v1937 = vld [vmem:[%s1936] sm:$0xf]
      %v1939 = vsel %vm289, %v1937, 0
      %v1942 = vsel %vm293, %v1934, 0
      %v1945 = vsel %vm293, %v1935, 0
      %1947 = vmatprep.subr.mxu0 0.0
      %1948 = vmatpush1.msra.mxu0 0.0
      %1949 = vmatprep.subr.mxu0 0.0
      %1950 = vmatpush1.msra.mxu0 0.0
      %1951 = vmatprep.subr.mxu0 0.0
      %1952 = vmatpush1.msra.mxu0 0.0
      %1953 = vmatprep.subr.mxu0 0.0
      %1954 = vmatpush1.msra.mxu0 0.0
      %1955 = vmatprep.subr.mxu0 0.0
      %1956 = vmatpush1.msra.mxu0 0.0
      %1957 = vmatprep.subr.mxu0 0.0
      %1958 = vmatpush1.msra.mxu0 0.0
      %1959 = vmatprep.subr.mxu0 0.0
      %1960 = vmatpush1.msra.mxu0 0.0
      %1961 = vmatprep.subr.mxu0 0.0
      %1962 = vmatpush1.msra.mxu0 0.0
      %1963 = vmatprep.subr.mxu0 0.0
      %1964 = vmatpush1.msra.mxu0 0.0
      %1965 = vmatprep.subr.mxu0 0.0
      %1966 = vmatpush1.msra.mxu0 0.0
      %1967 = vmatprep.subr.mxu0 0.0
      %1968 = vmatpush1.msra.mxu0 0.0
      %1969 = vmatprep.subr.mxu0 0.0
      %1970 = vmatpush1.msra.mxu0 0.0
      %1971 = vmatprep.subr.mxu0 0.0
      %1972 = vmatpush1.msra.mxu0 0.0
      %1973 = vmatprep.subr.mxu0 0.0
      %1974 = vmatpush1.msra.mxu0 0.0
      %1975 = vmatprep.subr.mxu0 0.0
      %1976 = vmatpush1.msra.mxu0 0.0
      %1977 = vmatprep.subr.mxu0 %v1945
      %1978 = vmatpush1.msra.mxu0 %v1942
      %1979 = vmatprep.subr.mxu0 0.0
      %1980 = vmatpush2.msra.mxu0 0.0
      %1981 = vmatprep.subr.mxu0 0.0
      %1982 = vmatpush2.msra.mxu0 0.0
      %1983 = vmatprep.subr.mxu0 0.0
      %1984 = vmatpush2.msra.mxu0 0.0
      %1985 = vmatprep.subr.mxu0 0.0
      %1986 = vmatpush2.msra.mxu0 0.0
      %1987 = vmatprep.subr.mxu0 0.0
      %1988 = vmatpush2.msra.mxu0 0.0
      %1989 = vmatprep.subr.mxu0 0.0
      %1990 = vmatpush2.msra.mxu0 0.0
      %1991 = vmatprep.subr.mxu0 0.0
      %1992 = vmatpush2.msra.mxu0 0.0
      %1993 = vmatprep.subr.mxu0 0.0
      %1994 = vmatpush2.msra.mxu0 0.0
      %1995 = vmatprep.subr.mxu0 0.0
      %1996 = vmatpush2.msra.mxu0 0.0
      %1997 = vmatprep.subr.mxu0 0.0
      %1998 = vmatpush2.msra.mxu0 0.0
      %1999 = vmatprep.subr.mxu0 0.0
      %2000 = vmatpush2.msra.mxu0 0.0
      %2001 = vmatprep.subr.mxu0 0.0
      %2002 = vmatpush2.msra.mxu0 0.0
      %2003 = vmatprep.subr.mxu0 0.0
      %2004 = vmatpush2.msra.mxu0 0.0
      %2005 = vmatprep.subr.mxu0 0.0
      %2006 = vmatpush2.msra.mxu0 0.0
      %2007 = vmatprep.subr.mxu0 0.0
      %2008 = vmatpush2.msra.mxu0 0.0
      %2009 = vmatprep.subr.mxu0 0.0
      %2010 = vmatpush2.msra.mxu0 0.0
      %2011 = vmatprep.mubr.f32.mxu0 0.0
      %2012 = vmatmul.mubr.f32.gmra.mxu0 %v1939
      %v2013 = vpop.f32.mrf.mxu0
      %v2014 = vadd.f32 0.0, %v2013
      %v2015 = vpop.f32.mrf.mxu0
      %v2016 = vadd.f32 0.0, %v2015
      %2017 = vdwg.mxu0
      %v2020 = vcombine.low %v2014, %v2016
      %v2022 = vadd.f32 %v1927, %v2020
      %s2023 = scalar_lea.vmem %s2, 4
      %v2024 = vld [vmem:[%s2023] sm:$0xf]
      %2026 = vset.pattern.permute.xlu0 0
      %2027 = vperm.xlu0 %2026, %v2024
      %v2028 = vpop.permute.xlu0 %2027
      %v2030 = vunpack.c.l.s4 839922192
      %v2031 = vunpack.c.0.s8 %v2030
      %v2032 = vlaneseq
      %v2033 = vshrl.u32 %v2032, 7
      %v2034 = vsub.s32 %v2031, %v2033
      %v2035 = vrot.slane %v2028, %v2034
      %v2037 = vmul.f32 %v2022, %v2035
      %s2038 = scalar_lea.vmem %s3, 4
      %v2039 = vld [vmem:[%s2038] sm:$0xf]
      %2041 = vset.pattern.permute.xlu0 0
      %2042 = vperm.xlu0 %2041, %v2039
      %v2043 = vpop.permute.xlu0 %2042
      %v2045 = vunpack.c.l.s4 839922192
      %v2046 = vunpack.c.0.s8 %v2045
      %v2047 = vlaneseq
      %v2048 = vshrl.u32 %v2047, 7
      %v2049 = vsub.s32 %v2046, %v2048
      %v2050 = vrot.slane %v2043, %v2049
      %v2052 = vadd.f32 %v2037, %v2050
      %v2053 = vmax.f32 %v2052, 0.0
      %v2054 = vcombine.low %v1173, %v1174
      %v2056 = vadd.f32 %v1175, %v2054
      %v2058 = vcombine.high %v2053, %v2053
      %2060 = vrot.lane.b32.xlu0 %v2053, 17
      %v2061 = vpop.permute.xlu0 %2060
      %2062 = vrot.lane.b32.xlu0 %v2058, 17
      %v2063 = vpop.permute.xlu0 %2062
      %v2064 = vsel %vm250, %v2061, %v2063
      %v2065 = vsel %vm250, %v2063, %v2061
      %v2066 = vmul.f32 %v2065, %v257
      %v2067 = vmul.f32 %v2064, %v261
      %s2068 = scalar_lea.vmem %s1, 72
      %v2069 = vld [vmem:[%s2068] sm:$0xf]
      %v2071 = vsel %vm289, %v2069, 0
      %v2074 = vsel %vm293, %v2066, 0
      %v2077 = vsel %vm293, %v2067, 0
      %2079 = vmatprep.subr.mxu0 0.0
      %2080 = vmatpush1.msra.mxu0 0.0
      %2081 = vmatprep.subr.mxu0 0.0
      %2082 = vmatpush1.msra.mxu0 0.0
      %2083 = vmatprep.subr.mxu0 0.0
      %2084 = vmatpush1.msra.mxu0 0.0
      %2085 = vmatprep.subr.mxu0 0.0
      %2086 = vmatpush1.msra.mxu0 0.0
      %2087 = vmatprep.subr.mxu0 0.0
      %2088 = vmatpush1.msra.mxu0 0.0
      %2089 = vmatprep.subr.mxu0 0.0
      %2090 = vmatpush1.msra.mxu0 0.0
      %2091 = vmatprep.subr.mxu0 0.0
      %2092 = vmatpush1.msra.mxu0 0.0
      %2093 = vmatprep.subr.mxu0 0.0
      %2094 = vmatpush1.msra.mxu0 0.0
      %2095 = vmatprep.subr.mxu0 0.0
      %2096 = vmatpush1.msra.mxu0 0.0
      %2097 = vmatprep.subr.mxu0 0.0
      %2098 = vmatpush1.msra.mxu0 0.0
      %2099 = vmatprep.subr.mxu0 0.0
      %2100 = vmatpush1.msra.mxu0 0.0
      %2101 = vmatprep.subr.mxu0 0.0
      %2102 = vmatpush1.msra.mxu0 0.0
      %2103 = vmatprep.subr.mxu0 0.0
      %2104 = vmatpush1.msra.mxu0 0.0
      %2105 = vmatprep.subr.mxu0 0.0
      %2106 = vmatpush1.msra.mxu0 0.0
      %2107 = vmatprep.subr.mxu0 0.0
      %2108 = vmatpush1.msra.mxu0 0.0
      %2109 = vmatprep.subr.mxu0 %v2077
      %2110 = vmatpush1.msra.mxu0 %v2074
      %2111 = vmatprep.subr.mxu0 0.0
      %2112 = vmatpush2.msra.mxu0 0.0
      %2113 = vmatprep.subr.mxu0 0.0
      %2114 = vmatpush2.msra.mxu0 0.0
      %2115 = vmatprep.subr.mxu0 0.0
      %2116 = vmatpush2.msra.mxu0 0.0
      %2117 = vmatprep.subr.mxu0 0.0
      %2118 = vmatpush2.msra.mxu0 0.0
      %2119 = vmatprep.subr.mxu0 0.0
      %2120 = vmatpush2.msra.mxu0 0.0
      %2121 = vmatprep.subr.mxu0 0.0
      %2122 = vmatpush2.msra.mxu0 0.0
      %2123 = vmatprep.subr.mxu0 0.0
      %2124 = vmatpush2.msra.mxu0 0.0
      %2125 = vmatprep.subr.mxu0 0.0
      %2126 = vmatpush2.msra.mxu0 0.0
      %2127 = vmatprep.subr.mxu0 0.0
      %2128 = vmatpush2.msra.mxu0 0.0
      %2129 = vmatprep.subr.mxu0 0.0
      %2130 = vmatpush2.msra.mxu0 0.0
      %2131 = vmatprep.subr.mxu0 0.0
      %2132 = vmatpush2.msra.mxu0 0.0
      %2133 = vmatprep.subr.mxu0 0.0
      %2134 = vmatpush2.msra.mxu0 0.0
      %2135 = vmatprep.subr.mxu0 0.0
      %2136 = vmatpush2.msra.mxu0 0.0
      %2137 = vmatprep.subr.mxu0 0.0
      %2138 = vmatpush2.msra.mxu0 0.0
      %2139 = vmatprep.subr.mxu0 0.0
      %2140 = vmatpush2.msra.mxu0 0.0
      %2141 = vmatprep.subr.mxu0 0.0
      %2142 = vmatpush2.msra.mxu0 0.0
      %2143 = vmatprep.mubr.f32.mxu0 0.0
      %2144 = vmatmul.mubr.f32.gmra.mxu0 %v2071
      %v2145 = vpop.f32.mrf.mxu0
      %v2146 = vadd.f32 0.0, %v2145
      %v2147 = vpop.f32.mrf.mxu0
      %v2148 = vadd.f32 0.0, %v2147
      %2149 = vdwg.mxu0
      %v2152 = vcombine.low %v2146, %v2148
      %v2154 = vadd.f32 %v2056, %v2152
      %2155 = vrot.lane.b32.xlu0 %v2053, 16
      %v2156 = vpop.permute.xlu0 %2155
      %2157 = vrot.lane.b32.xlu0 %v2058, 16
      %v2158 = vpop.permute.xlu0 %2157
      %v2159 = vsel %vm271, %v2156, %v2158
      %v2160 = vsel %vm271, %v2158, %v2156
      %v2161 = vmul.f32 %v2160, %v278
      %v2162 = vmul.f32 %v2159, %v282
      %s2163 = scalar_lea.vmem %s1, 76
      %v2164 = vld [vmem:[%s2163] sm:$0xf]
      %v2166 = vsel %vm289, %v2164, 0
      %v2169 = vsel %vm293, %v2161, 0
      %v2172 = vsel %vm293, %v2162, 0
      %2174 = vmatprep.subr.mxu0 0.0
      %2175 = vmatpush1.msra.mxu0 0.0
      %2176 = vmatprep.subr.mxu0 0.0
      %2177 = vmatpush1.msra.mxu0 0.0
      %2178 = vmatprep.subr.mxu0 0.0
      %2179 = vmatpush1.msra.mxu0 0.0
      %2180 = vmatprep.subr.mxu0 0.0
      %2181 = vmatpush1.msra.mxu0 0.0
      %2182 = vmatprep.subr.mxu0 0.0
      %2183 = vmatpush1.msra.mxu0 0.0
      %2184 = vmatprep.subr.mxu0 0.0
      %2185 = vmatpush1.msra.mxu0 0.0
      %2186 = vmatprep.subr.mxu0 0.0
      %2187 = vmatpush1.msra.mxu0 0.0
      %2188 = vmatprep.subr.mxu0 0.0
      %2189 = vmatpush1.msra.mxu0 0.0
      %2190 = vmatprep.subr.mxu0 0.0
      %2191 = vmatpush1.msra.mxu0 0.0
      %2192 = vmatprep.subr.mxu0 0.0
      %2193 = vmatpush1.msra.mxu0 0.0
      %2194 = vmatprep.subr.mxu0 0.0
      %2195 = vmatpush1.msra.mxu0 0.0
      %2196 = vmatprep.subr.mxu0 0.0
      %2197 = vmatpush1.msra.mxu0 0.0
      %2198 = vmatprep.subr.mxu0 0.0
      %2199 = vmatpush1.msra.mxu0 0.0
      %2200 = vmatprep.subr.mxu0 0.0
      %2201 = vmatpush1.msra.mxu0 0.0
      %2202 = vmatprep.subr.mxu0 0.0
      %2203 = vmatpush1.msra.mxu0 0.0
      %2204 = vmatprep.subr.mxu0 %v2172
      %2205 = vmatpush1.msra.mxu0 %v2169
      %2206 = vmatprep.subr.mxu0 0.0
      %2207 = vmatpush2.msra.mxu0 0.0
      %2208 = vmatprep.subr.mxu0 0.0
      %2209 = vmatpush2.msra.mxu0 0.0
      %2210 = vmatprep.subr.mxu0 0.0
      %2211 = vmatpush2.msra.mxu0 0.0
      %2212 = vmatprep.subr.mxu0 0.0
      %2213 = vmatpush2.msra.mxu0 0.0
      %2214 = vmatprep.subr.mxu0 0.0
      %2215 = vmatpush2.msra.mxu0 0.0
      %2216 = vmatprep.subr.mxu0 0.0
      %2217 = vmatpush2.msra.mxu0 0.0
      %2218 = vmatprep.subr.mxu0 0.0
      %2219 = vmatpush2.msra.mxu0 0.0
      %2220 = vmatprep.subr.mxu0 0.0
      %2221 = vmatpush2.msra.mxu0 0.0
      %2222 = vmatprep.subr.mxu0 0.0
      %2223 = vmatpush2.msra.mxu0 0.0
      %2224 = vmatprep.subr.mxu0 0.0
      %2225 = vmatpush2.msra.mxu0 0.0
      %2226 = vmatprep.subr.mxu0 0.0
      %2227 = vmatpush2.msra.mxu0 0.0
      %2228 = vmatprep.subr.mxu0 0.0
      %2229 = vmatpush2.msra.mxu0 0.0
      %2230 = vmatprep.subr.mxu0 0.0
      %2231 = vmatpush2.msra.mxu0 0.0
      %2232 = vmatprep.subr.mxu0 0.0
      %2233 = vmatpush2.msra.mxu0 0.0
      %2234 = vmatprep.subr.mxu0 0.0
      %2235 = vmatpush2.msra.mxu0 0.0
      %2236 = vmatprep.subr.mxu0 0.0
      %2237 = vmatpush2.msra.mxu0 0.0
      %2238 = vmatprep.mubr.f32.mxu0 0.0
      %2239 = vmatmul.mubr.f32.gmra.mxu0 %v2166
      %v2240 = vpop.f32.mrf.mxu0
      %v2241 = vadd.f32 0.0, %v2240
      %v2242 = vpop.f32.mrf.mxu0
      %v2243 = vadd.f32 0.0, %v2242
      %2244 = vdwg.mxu0
      %v2247 = vcombine.low %v2241, %v2243
      %v2249 = vadd.f32 %v2154, %v2247
      %2250 = vrot.lane.b32.xlu0 %v2053, 15
      %v2251 = vpop.permute.xlu0 %2250
      %2252 = vrot.lane.b32.xlu0 %v2058, 15
      %v2253 = vpop.permute.xlu0 %2252
      %v2254 = vsel %vm455, %v2251, %v2253
      %v2255 = vsel %vm455, %v2253, %v2251
      %v2256 = vmul.f32 %v2255, %v462
      %v2257 = vmul.f32 %v2254, %v466
      %s2258 = scalar_lea.vmem %s1, 80
      %v2259 = vld [vmem:[%s2258] sm:$0xf]
      %v2261 = vsel %vm289, %v2259, 0
      %v2264 = vsel %vm293, %v2256, 0
      %v2267 = vsel %vm293, %v2257, 0
      %2269 = vmatprep.subr.mxu0 0.0
      %2270 = vmatpush1.msra.mxu0 0.0
      %2271 = vmatprep.subr.mxu0 0.0
      %2272 = vmatpush1.msra.mxu0 0.0
      %2273 = vmatprep.subr.mxu0 0.0
      %2274 = vmatpush1.msra.mxu0 0.0
      %2275 = vmatprep.subr.mxu0 0.0
      %2276 = vmatpush1.msra.mxu0 0.0
      %2277 = vmatprep.subr.mxu0 0.0
      %2278 = vmatpush1.msra.mxu0 0.0
      %2279 = vmatprep.subr.mxu0 0.0
      %2280 = vmatpush1.msra.mxu0 0.0
      %2281 = vmatprep.subr.mxu0 0.0
      %2282 = vmatpush1.msra.mxu0 0.0
      %2283 = vmatprep.subr.mxu0 0.0
      %2284 = vmatpush1.msra.mxu0 0.0
      %2285 = vmatprep.subr.mxu0 0.0
      %2286 = vmatpush1.msra.mxu0 0.0
      %2287 = vmatprep.subr.mxu0 0.0
      %2288 = vmatpush1.msra.mxu0 0.0
      %2289 = vmatprep.subr.mxu0 0.0
      %2290 = vmatpush1.msra.mxu0 0.0
      %2291 = vmatprep.subr.mxu0 0.0
      %2292 = vmatpush1.msra.mxu0 0.0
      %2293 = vmatprep.subr.mxu0 0.0
      %2294 = vmatpush1.msra.mxu0 0.0
      %2295 = vmatprep.subr.mxu0 0.0
      %2296 = vmatpush1.msra.mxu0 0.0
      %2297 = vmatprep.subr.mxu0 0.0
      %2298 = vmatpush1.msra.mxu0 0.0
      %2299 = vmatprep.subr.mxu0 %v2267
      %2300 = vmatpush1.msra.mxu0 %v2264
      %2301 = vmatprep.subr.mxu0 0.0
      %2302 = vmatpush2.msra.mxu0 0.0
      %2303 = vmatprep.subr.mxu0 0.0
      %2304 = vmatpush2.msra.mxu0 0.0
      %2305 = vmatprep.subr.mxu0 0.0
      %2306 = vmatpush2.msra.mxu0 0.0
      %2307 = vmatprep.subr.mxu0 0.0
      %2308 = vmatpush2.msra.mxu0 0.0
      %2309 = vmatprep.subr.mxu0 0.0
      %2310 = vmatpush2.msra.mxu0 0.0
      %2311 = vmatprep.subr.mxu0 0.0
      %2312 = vmatpush2.msra.mxu0 0.0
      %2313 = vmatprep.subr.mxu0 0.0
      %2314 = vmatpush2.msra.mxu0 0.0
      %2315 = vmatprep.subr.mxu0 0.0
      %2316 = vmatpush2.msra.mxu0 0.0
      %2317 = vmatprep.subr.mxu0 0.0
      %2318 = vmatpush2.msra.mxu0 0.0
      %2319 = vmatprep.subr.mxu0 0.0
      %2320 = vmatpush2.msra.mxu0 0.0
      %2321 = vmatprep.subr.mxu0 0.0
      %2322 = vmatpush2.msra.mxu0 0.0
      %2323 = vmatprep.subr.mxu0 0.0
      %2324 = vmatpush2.msra.mxu0 0.0
      %2325 = vmatprep.subr.mxu0 0.0
      %2326 = vmatpush2.msra.mxu0 0.0
      %2327 = vmatprep.subr.mxu0 0.0
      %2328 = vmatpush2.msra.mxu0 0.0
      %2329 = vmatprep.subr.mxu0 0.0
      %2330 = vmatpush2.msra.mxu0 0.0
      %2331 = vmatprep.subr.mxu0 0.0
      %2332 = vmatpush2.msra.mxu0 0.0
      %2333 = vmatprep.mubr.f32.mxu0 0.0
      %2334 = vmatmul.mubr.f32.gmra.mxu0 %v2261
      %v2335 = vpop.f32.mrf.mxu0
      %v2336 = vadd.f32 0.0, %v2335
      %v2337 = vpop.f32.mrf.mxu0
      %v2338 = vadd.f32 0.0, %v2337
      %2339 = vdwg.mxu0
      %v2342 = vcombine.low %v2336, %v2338
      %v2344 = vadd.f32 %v2249, %v2342
      %2345 = vrot.lane.b32.xlu0 %v2053, 1
      %v2346 = vpop.permute.xlu0 %2345
      %2347 = vrot.lane.b32.xlu0 %v2058, 1
      %v2348 = vpop.permute.xlu0 %2347
      %v2349 = vsel %vm559, %v2346, %v2348
      %v2350 = vsel %vm559, %v2348, %v2346
      %v2351 = vmul.f32 %v2350, %v566
      %v2352 = vmul.f32 %v2349, %v570
      %s2353 = scalar_lea.vmem %s1, 84
      %v2354 = vld [vmem:[%s2353] sm:$0xf]
      %v2356 = vsel %vm289, %v2354, 0
      %v2359 = vsel %vm293, %v2351, 0
      %v2362 = vsel %vm293, %v2352, 0
      %2364 = vmatprep.subr.mxu0 0.0
      %2365 = vmatpush1.msra.mxu0 0.0
      %2366 = vmatprep.subr.mxu0 0.0
      %2367 = vmatpush1.msra.mxu0 0.0
      %2368 = vmatprep.subr.mxu0 0.0
      %2369 = vmatpush1.msra.mxu0 0.0
      %2370 = vmatprep.subr.mxu0 0.0
      %2371 = vmatpush1.msra.mxu0 0.0
      %2372 = vmatprep.subr.mxu0 0.0
      %2373 = vmatpush1.msra.mxu0 0.0
      %2374 = vmatprep.subr.mxu0 0.0
      %2375 = vmatpush1.msra.mxu0 0.0
      %2376 = vmatprep.subr.mxu0 0.0
      %2377 = vmatpush1.msra.mxu0 0.0
      %2378 = vmatprep.subr.mxu0 0.0
      %2379 = vmatpush1.msra.mxu0 0.0
      %2380 = vmatprep.subr.mxu0 0.0
      %2381 = vmatpush1.msra.mxu0 0.0
      %2382 = vmatprep.subr.mxu0 0.0
      %2383 = vmatpush1.msra.mxu0 0.0
      %2384 = vmatprep.subr.mxu0 0.0
      %2385 = vmatpush1.msra.mxu0 0.0
      %2386 = vmatprep.subr.mxu0 0.0
      %2387 = vmatpush1.msra.mxu0 0.0
      %2388 = vmatprep.subr.mxu0 0.0
      %2389 = vmatpush1.msra.mxu0 0.0
      %2390 = vmatprep.subr.mxu0 0.0
      %2391 = vmatpush1.msra.mxu0 0.0
      %2392 = vmatprep.subr.mxu0 0.0
      %2393 = vmatpush1.msra.mxu0 0.0
      %2394 = vmatprep.subr.mxu0 %v2362
      %2395 = vmatpush1.msra.mxu0 %v2359
      %2396 = vmatprep.subr.mxu0 0.0
      %2397 = vmatpush2.msra.mxu0 0.0
      %2398 = vmatprep.subr.mxu0 0.0
      %2399 = vmatpush2.msra.mxu0 0.0
      %2400 = vmatprep.subr.mxu0 0.0
      %2401 = vmatpush2.msra.mxu0 0.0
      %2402 = vmatprep.subr.mxu0 0.0
      %2403 = vmatpush2.msra.mxu0 0.0
      %2404 = vmatprep.subr.mxu0 0.0
      %2405 = vmatpush2.msra.mxu0 0.0
      %2406 = vmatprep.subr.mxu0 0.0
      %2407 = vmatpush2.msra.mxu0 0.0
      %2408 = vmatprep.subr.mxu0 0.0
      %2409 = vmatpush2.msra.mxu0 0.0
      %2410 = vmatprep.subr.mxu0 0.0
      %2411 = vmatpush2.msra.mxu0 0.0
      %2412 = vmatprep.subr.mxu0 0.0
      %2413 = vmatpush2.msra.mxu0 0.0
      %2414 = vmatprep.subr.mxu0 0.0
      %2415 = vmatpush2.msra.mxu0 0.0
      %2416 = vmatprep.subr.mxu0 0.0
      %2417 = vmatpush2.msra.mxu0 0.0
      %2418 = vmatprep.subr.mxu0 0.0
      %2419 = vmatpush2.msra.mxu0 0.0
      %2420 = vmatprep.subr.mxu0 0.0
      %2421 = vmatpush2.msra.mxu0 0.0
      %2422 = vmatprep.subr.mxu0 0.0
      %2423 = vmatpush2.msra.mxu0 0.0
      %2424 = vmatprep.subr.mxu0 0.0
      %2425 = vmatpush2.msra.mxu0 0.0
      %2426 = vmatprep.subr.mxu0 0.0
      %2427 = vmatpush2.msra.mxu0 0.0
      %2428 = vmatprep.mubr.f32.mxu0 0.0
      %2429 = vmatmul.mubr.f32.gmra.mxu0 %v2356
      %v2430 = vpop.f32.mrf.mxu0
      %v2431 = vadd.f32 0.0, %v2430
      %v2432 = vpop.f32.mrf.mxu0
      %v2433 = vadd.f32 0.0, %v2432
      %2434 = vdwg.mxu0
      %v2437 = vcombine.low %v2431, %v2433
      %v2439 = vadd.f32 %v2344, %v2437
      %s2440 = scalar_lea.vmem %s1, 88
      %v2441 = vld [vmem:[%s2440] sm:$0xf]
      %v2443 = vsel %vm289, %v2441, 0
      %v2445 = vsel %vm293, %v2053, 0
      %v2447 = vsel %vm293, %v2058, 0
      %2449 = vmatprep.subr.mxu0 0.0
      %2450 = vmatpush1.msra.mxu0 0.0
      %2451 = vmatprep.subr.mxu0 0.0
      %2452 = vmatpush1.msra.mxu0 0.0
      %2453 = vmatprep.subr.mxu0 0.0
      %2454 = vmatpush1.msra.mxu0 0.0
      %2455 = vmatprep.subr.mxu0 0.0
      %2456 = vmatpush1.msra.mxu0 0.0
      %2457 = vmatprep.subr.mxu0 0.0
      %2458 = vmatpush1.msra.mxu0 0.0
      %2459 = vmatprep.subr.mxu0 0.0
      %2460 = vmatpush1.msra.mxu0 0.0
      %2461 = vmatprep.subr.mxu0 0.0
      %2462 = vmatpush1.msra.mxu0 0.0
      %2463 = vmatprep.subr.mxu0 0.0
      %2464 = vmatpush1.msra.mxu0 0.0
      %2465 = vmatprep.subr.mxu0 0.0
      %2466 = vmatpush1.msra.mxu0 0.0
      %2467 = vmatprep.subr.mxu0 0.0
      %2468 = vmatpush1.msra.mxu0 0.0
      %2469 = vmatprep.subr.mxu0 0.0
      %2470 = vmatpush1.msra.mxu0 0.0
      %2471 = vmatprep.subr.mxu0 0.0
      %2472 = vmatpush1.msra.mxu0 0.0
      %2473 = vmatprep.subr.mxu0 0.0
      %2474 = vmatpush1.msra.mxu0 0.0
      %2475 = vmatprep.subr.mxu0 0.0
      %2476 = vmatpush1.msra.mxu0 0.0
      %2477 = vmatprep.subr.mxu0 0.0
      %2478 = vmatpush1.msra.mxu0 0.0
      %2479 = vmatprep.subr.mxu0 %v2447
      %2480 = vmatpush1.msra.mxu0 %v2445
      %2481 = vmatprep.subr.mxu0 0.0
      %2482 = vmatpush2.msra.mxu0 0.0
      %2483 = vmatprep.subr.mxu0 0.0
      %2484 = vmatpush2.msra.mxu0 0.0
      %2485 = vmatprep.subr.mxu0 0.0
      %2486 = vmatpush2.msra.mxu0 0.0
      %2487 = vmatprep.subr.mxu0 0.0
      %2488 = vmatpush2.msra.mxu0 0.0
      %2489 = vmatprep.subr.mxu0 0.0
      %2490 = vmatpush2.msra.mxu0 0.0
      %2491 = vmatprep.subr.mxu0 0.0
      %2492 = vmatpush2.msra.mxu0 0.0
      %2493 = vmatprep.subr.mxu0 0.0
      %2494 = vmatpush2.msra.mxu0 0.0
      %2495 = vmatprep.subr.mxu0 0.0
      %2496 = vmatpush2.msra.mxu0 0.0
      %2497 = vmatprep.subr.mxu0 0.0
      %2498 = vmatpush2.msra.mxu0 0.0
      %2499 = vmatprep.subr.mxu0 0.0
      %2500 = vmatpush2.msra.mxu0 0.0
      %2501 = vmatprep.subr.mxu0 0.0
      %2502 = vmatpush2.msra.mxu0 0.0
      %2503 = vmatprep.subr.mxu0 0.0
      %2504 = vmatpush2.msra.mxu0 0.0
      %2505 = vmatprep.subr.mxu0 0.0
      %2506 = vmatpush2.msra.mxu0 0.0
      %2507 = vmatprep.subr.mxu0 0.0
      %2508 = vmatpush2.msra.mxu0 0.0
      %2509 = vmatprep.subr.mxu0 0.0
      %2510 = vmatpush2.msra.mxu0 0.0
      %2511 = vmatprep.subr.mxu0 0.0
      %2512 = vmatpush2.msra.mxu0 0.0
      %2513 = vmatprep.mubr.f32.mxu0 0.0
      %2514 = vmatmul.mubr.f32.gmra.mxu0 %v2443
      %v2515 = vpop.f32.mrf.mxu0
      %v2516 = vadd.f32 0.0, %v2515
      %v2517 = vpop.f32.mrf.mxu0
      %v2518 = vadd.f32 0.0, %v2517
      %2519 = vdwg.mxu0
      %v2522 = vcombine.low %v2516, %v2518
      %v2524 = vadd.f32 %v2439, %v2522
      %2525 = vrot.lane.b32.xlu0 %v2053, 127
      %v2526 = vpop.permute.xlu0 %2525
      %2527 = vrot.lane.b32.xlu0 %v2058, 127
      %v2528 = vpop.permute.xlu0 %2527
      %v2529 = vsel %vm745, %v2526, %v2528
      %v2530 = vsel %vm745, %v2528, %v2526
      %v2531 = vmul.f32 %v2529, %v752
      %v2532 = vmul.f32 %v2530, %v756
      %s2533 = scalar_lea.vmem %s1, 92
      %v2534 = vld [vmem:[%s2533] sm:$0xf]
      %v2536 = vsel %vm289, %v2534, 0
      %v2539 = vsel %vm293, %v2531, 0
      %v2542 = vsel %vm293, %v2532, 0
      %2544 = vmatprep.subr.mxu0 0.0
      %2545 = vmatpush1.msra.mxu0 0.0
      %2546 = vmatprep.subr.mxu0 0.0
      %2547 = vmatpush1.msra.mxu0 0.0
      %2548 = vmatprep.subr.mxu0 0.0
      %2549 = vmatpush1.msra.mxu0 0.0
      %2550 = vmatprep.subr.mxu0 0.0
      %2551 = vmatpush1.msra.mxu0 0.0
      %2552 = vmatprep.subr.mxu0 0.0
      %2553 = vmatpush1.msra.mxu0 0.0
      %2554 = vmatprep.subr.mxu0 0.0
      %2555 = vmatpush1.msra.mxu0 0.0
      %2556 = vmatprep.subr.mxu0 0.0
      %2557 = vmatpush1.msra.mxu0 0.0
      %2558 = vmatprep.subr.mxu0 0.0
      %2559 = vmatpush1.msra.mxu0 0.0
      %2560 = vmatprep.subr.mxu0 0.0
      %2561 = vmatpush1.msra.mxu0 0.0
      %2562 = vmatprep.subr.mxu0 0.0
      %2563 = vmatpush1.msra.mxu0 0.0
      %2564 = vmatprep.subr.mxu0 0.0
      %2565 = vmatpush1.msra.mxu0 0.0
      %2566 = vmatprep.subr.mxu0 0.0
      %2567 = vmatpush1.msra.mxu0 0.0
      %2568 = vmatprep.subr.mxu0 0.0
      %2569 = vmatpush1.msra.mxu0 0.0
      %2570 = vmatprep.subr.mxu0 0.0
      %2571 = vmatpush1.msra.mxu0 0.0
      %2572 = vmatprep.subr.mxu0 0.0
      %2573 = vmatpush1.msra.mxu0 0.0
      %2574 = vmatprep.subr.mxu0 %v2542
      %2575 = vmatpush1.msra.mxu0 %v2539
      %2576 = vmatprep.subr.mxu0 0.0
      %2577 = vmatpush2.msra.mxu0 0.0
      %2578 = vmatprep.subr.mxu0 0.0
      %2579 = vmatpush2.msra.mxu0 0.0
      %2580 = vmatprep.subr.mxu0 0.0
      %2581 = vmatpush2.msra.mxu0 0.0
      %2582 = vmatprep.subr.mxu0 0.0
      %2583 = vmatpush2.msra.mxu0 0.0
      %2584 = vmatprep.subr.mxu0 0.0
      %2585 = vmatpush2.msra.mxu0 0.0
      %2586 = vmatprep.subr.mxu0 0.0
      %2587 = vmatpush2.msra.mxu0 0.0
      %2588 = vmatprep.subr.mxu0 0.0
      %2589 = vmatpush2.msra.mxu0 0.0
      %2590 = vmatprep.subr.mxu0 0.0
      %2591 = vmatpush2.msra.mxu0 0.0
      %2592 = vmatprep.subr.mxu0 0.0
      %2593 = vmatpush2.msra.mxu0 0.0
      %2594 = vmatprep.subr.mxu0 0.0
      %2595 = vmatpush2.msra.mxu0 0.0
      %2596 = vmatprep.subr.mxu0 0.0
      %2597 = vmatpush2.msra.mxu0 0.0
      %2598 = vmatprep.subr.mxu0 0.0
      %2599 = vmatpush2.msra.mxu0 0.0
      %2600 = vmatprep.subr.mxu0 0.0
      %2601 = vmatpush2.msra.mxu0 0.0
      %2602 = vmatprep.subr.mxu0 0.0
      %2603 = vmatpush2.msra.mxu0 0.0
      %2604 = vmatprep.subr.mxu0 0.0
      %2605 = vmatpush2.msra.mxu0 0.0
      %2606 = vmatprep.subr.mxu0 0.0
      %2607 = vmatpush2.msra.mxu0 0.0
      %2608 = vmatprep.mubr.f32.mxu0 0.0
      %2609 = vmatmul.mubr.f32.gmra.mxu0 %v2536
      %v2610 = vpop.f32.mrf.mxu0
      %v2611 = vadd.f32 0.0, %v2610
      %v2612 = vpop.f32.mrf.mxu0
      %v2613 = vadd.f32 0.0, %v2612
      %2614 = vdwg.mxu0
      %v2617 = vcombine.low %v2611, %v2613
      %v2619 = vadd.f32 %v2524, %v2617
      %2620 = vrot.lane.b32.xlu0 %v2053, 113
      %v2621 = vpop.permute.xlu0 %2620
      %2622 = vrot.lane.b32.xlu0 %v2058, 113
      %v2623 = vpop.permute.xlu0 %2622
      %v2624 = vsel %vm849, %v2621, %v2623
      %v2625 = vsel %vm849, %v2623, %v2621
      %v2626 = vmul.f32 %v2624, %v856
      %v2627 = vmul.f32 %v2625, %v860
      %s2628 = scalar_lea.vmem %s1, 96
      %v2629 = vld [vmem:[%s2628] sm:$0xf]
      %v2631 = vsel %vm289, %v2629, 0
      %v2634 = vsel %vm293, %v2626, 0
      %v2637 = vsel %vm293, %v2627, 0
      %2639 = vmatprep.subr.mxu0 0.0
      %2640 = vmatpush1.msra.mxu0 0.0
      %2641 = vmatprep.subr.mxu0 0.0
      %2642 = vmatpush1.msra.mxu0 0.0
      %2643 = vmatprep.subr.mxu0 0.0
      %2644 = vmatpush1.msra.mxu0 0.0
      %2645 = vmatprep.subr.mxu0 0.0
      %2646 = vmatpush1.msra.mxu0 0.0
      %2647 = vmatprep.subr.mxu0 0.0
      %2648 = vmatpush1.msra.mxu0 0.0
      %2649 = vmatprep.subr.mxu0 0.0
      %2650 = vmatpush1.msra.mxu0 0.0
      %2651 = vmatprep.subr.mxu0 0.0
      %2652 = vmatpush1.msra.mxu0 0.0
      %2653 = vmatprep.subr.mxu0 0.0
      %2654 = vmatpush1.msra.mxu0 0.0
      %2655 = vmatprep.subr.mxu0 0.0
      %2656 = vmatpush1.msra.mxu0 0.0
      %2657 = vmatprep.subr.mxu0 0.0
      %2658 = vmatpush1.msra.mxu0 0.0
      %2659 = vmatprep.subr.mxu0 0.0
      %2660 = vmatpush1.msra.mxu0 0.0
      %2661 = vmatprep.subr.mxu0 0.0
      %2662 = vmatpush1.msra.mxu0 0.0
      %2663 = vmatprep.subr.mxu0 0.0
      %2664 = vmatpush1.msra.mxu0 0.0
      %2665 = vmatprep.subr.mxu0 0.0
      %2666 = vmatpush1.msra.mxu0 0.0
      %2667 = vmatprep.subr.mxu0 0.0
      %2668 = vmatpush1.msra.mxu0 0.0
      %2669 = vmatprep.subr.mxu0 %v2637
      %2670 = vmatpush1.msra.mxu0 %v2634
      %2671 = vmatprep.subr.mxu0 0.0
      %2672 = vmatpush2.msra.mxu0 0.0
      %2673 = vmatprep.subr.mxu0 0.0
      %2674 = vmatpush2.msra.mxu0 0.0
      %2675 = vmatprep.subr.mxu0 0.0
      %2676 = vmatpush2.msra.mxu0 0.0
      %2677 = vmatprep.subr.mxu0 0.0
      %2678 = vmatpush2.msra.mxu0 0.0
      %2679 = vmatprep.subr.mxu0 0.0
      %2680 = vmatpush2.msra.mxu0 0.0
      %2681 = vmatprep.subr.mxu0 0.0
      %2682 = vmatpush2.msra.mxu0 0.0
      %2683 = vmatprep.subr.mxu0 0.0
      %2684 = vmatpush2.msra.mxu0 0.0
      %2685 = vmatprep.subr.mxu0 0.0
      %2686 = vmatpush2.msra.mxu0 0.0
      %2687 = vmatprep.subr.mxu0 0.0
      %2688 = vmatpush2.msra.mxu0 0.0
      %2689 = vmatprep.subr.mxu0 0.0
      %2690 = vmatpush2.msra.mxu0 0.0
      %2691 = vmatprep.subr.mxu0 0.0
      %2692 = vmatpush2.msra.mxu0 0.0
      %2693 = vmatprep.subr.mxu0 0.0
      %2694 = vmatpush2.msra.mxu0 0.0
      %2695 = vmatprep.subr.mxu0 0.0
      %2696 = vmatpush2.msra.mxu0 0.0
      %2697 = vmatprep.subr.mxu0 0.0
      %2698 = vmatpush2.msra.mxu0 0.0
      %2699 = vmatprep.subr.mxu0 0.0
      %2700 = vmatpush2.msra.mxu0 0.0
      %2701 = vmatprep.subr.mxu0 0.0
      %2702 = vmatpush2.msra.mxu0 0.0
      %2703 = vmatprep.mubr.f32.mxu0 0.0
      %2704 = vmatmul.mubr.f32.gmra.mxu0 %v2631
      %v2705 = vpop.f32.mrf.mxu0
      %v2706 = vadd.f32 0.0, %v2705
      %v2707 = vpop.f32.mrf.mxu0
      %v2708 = vadd.f32 0.0, %v2707
      %2709 = vdwg.mxu0
      %v2712 = vcombine.low %v2706, %v2708
      %v2714 = vadd.f32 %v2619, %v2712
      %2715 = vrot.lane.b32.xlu0 %v2053, 112
      %v2716 = vpop.permute.xlu0 %2715
      %2717 = vrot.lane.b32.xlu0 %v2058, 112
      %v2718 = vpop.permute.xlu0 %2717
      %v2719 = vsel %vm953, %v2716, %v2718
      %v2720 = vsel %vm953, %v2718, %v2716
      %v2721 = vmul.f32 %v2719, %v960
      %v2722 = vmul.f32 %v2720, %v964
      %s2723 = scalar_lea.vmem %s1, 100
      %v2724 = vld [vmem:[%s2723] sm:$0xf]
      %v2726 = vsel %vm289, %v2724, 0
      %v2729 = vsel %vm293, %v2721, 0
      %v2732 = vsel %vm293, %v2722, 0
      %2734 = vmatprep.subr.mxu0 0.0
      %2735 = vmatpush1.msra.mxu0 0.0
      %2736 = vmatprep.subr.mxu0 0.0
      %2737 = vmatpush1.msra.mxu0 0.0
      %2738 = vmatprep.subr.mxu0 0.0
      %2739 = vmatpush1.msra.mxu0 0.0
      %2740 = vmatprep.subr.mxu0 0.0
      %2741 = vmatpush1.msra.mxu0 0.0
      %2742 = vmatprep.subr.mxu0 0.0
      %2743 = vmatpush1.msra.mxu0 0.0
      %2744 = vmatprep.subr.mxu0 0.0
      %2745 = vmatpush1.msra.mxu0 0.0
      %2746 = vmatprep.subr.mxu0 0.0
      %2747 = vmatpush1.msra.mxu0 0.0
      %2748 = vmatprep.subr.mxu0 0.0
      %2749 = vmatpush1.msra.mxu0 0.0
      %2750 = vmatprep.subr.mxu0 0.0
      %2751 = vmatpush1.msra.mxu0 0.0
      %2752 = vmatprep.subr.mxu0 0.0
      %2753 = vmatpush1.msra.mxu0 0.0
      %2754 = vmatprep.subr.mxu0 0.0
      %2755 = vmatpush1.msra.mxu0 0.0
      %2756 = vmatprep.subr.mxu0 0.0
      %2757 = vmatpush1.msra.mxu0 0.0
      %2758 = vmatprep.subr.mxu0 0.0
      %2759 = vmatpush1.msra.mxu0 0.0
      %2760 = vmatprep.subr.mxu0 0.0
      %2761 = vmatpush1.msra.mxu0 0.0
      %2762 = vmatprep.subr.mxu0 0.0
      %2763 = vmatpush1.msra.mxu0 0.0
      %2764 = vmatprep.subr.mxu0 %v2732
      %2765 = vmatpush1.msra.mxu0 %v2729
      %2766 = vmatprep.subr.mxu0 0.0
      %2767 = vmatpush2.msra.mxu0 0.0
      %2768 = vmatprep.subr.mxu0 0.0
      %2769 = vmatpush2.msra.mxu0 0.0
      %2770 = vmatprep.subr.mxu0 0.0
      %2771 = vmatpush2.msra.mxu0 0.0
      %2772 = vmatprep.subr.mxu0 0.0
      %2773 = vmatpush2.msra.mxu0 0.0
      %2774 = vmatprep.subr.mxu0 0.0
      %2775 = vmatpush2.msra.mxu0 0.0
      %2776 = vmatprep.subr.mxu0 0.0
      %2777 = vmatpush2.msra.mxu0 0.0
      %2778 = vmatprep.subr.mxu0 0.0
      %2779 = vmatpush2.msra.mxu0 0.0
      %2780 = vmatprep.subr.mxu0 0.0
      %2781 = vmatpush2.msra.mxu0 0.0
      %2782 = vmatprep.subr.mxu0 0.0
      %2783 = vmatpush2.msra.mxu0 0.0
      %2784 = vmatprep.subr.mxu0 0.0
      %2785 = vmatpush2.msra.mxu0 0.0
      %2786 = vmatprep.subr.mxu0 0.0
      %2787 = vmatpush2.msra.mxu0 0.0
      %2788 = vmatprep.subr.mxu0 0.0
      %2789 = vmatpush2.msra.mxu0 0.0
      %2790 = vmatprep.subr.mxu0 0.0
      %2791 = vmatpush2.msra.mxu0 0.0
      %2792 = vmatprep.subr.mxu0 0.0
      %2793 = vmatpush2.msra.mxu0 0.0
      %2794 = vmatprep.subr.mxu0 0.0
      %2795 = vmatpush2.msra.mxu0 0.0
      %2796 = vmatprep.subr.mxu0 0.0
      %2797 = vmatpush2.msra.mxu0 0.0
      %2798 = vmatprep.mubr.f32.mxu0 0.0
      %2799 = vmatmul.mubr.f32.gmra.mxu0 %v2726
      %v2800 = vpop.f32.mrf.mxu0
      %v2801 = vadd.f32 0.0, %v2800
      %v2802 = vpop.f32.mrf.mxu0
      %v2803 = vadd.f32 0.0, %v2802
      %2804 = vdwg.mxu0
      %v2807 = vcombine.low %v2801, %v2803
      %v2809 = vadd.f32 %v2714, %v2807
      %2810 = vrot.lane.b32.xlu0 %v2053, 111
      %v2811 = vpop.permute.xlu0 %2810
      %2812 = vrot.lane.b32.xlu0 %v2058, 111
      %v2813 = vpop.permute.xlu0 %2812
      %v2814 = vsel %vm1057, %v2811, %v2813
      %v2815 = vsel %vm1057, %v2813, %v2811
      %v2816 = vmul.f32 %v2814, %v1064
      %v2817 = vmul.f32 %v2815, %v1068
      %s2818 = scalar_lea.vmem %s1, 104
      %v2819 = vld [vmem:[%s2818] sm:$0xf]
      %v2821 = vsel %vm289, %v2819, 0
      %v2824 = vsel %vm293, %v2816, 0
      %v2827 = vsel %vm293, %v2817, 0
      %2829 = vmatprep.subr.mxu0 0.0
      %2830 = vmatpush1.msra.mxu0 0.0
      %2831 = vmatprep.subr.mxu0 0.0
      %2832 = vmatpush1.msra.mxu0 0.0
      %2833 = vmatprep.subr.mxu0 0.0
      %2834 = vmatpush1.msra.mxu0 0.0
      %2835 = vmatprep.subr.mxu0 0.0
      %2836 = vmatpush1.msra.mxu0 0.0
      %2837 = vmatprep.subr.mxu0 0.0
      %2838 = vmatpush1.msra.mxu0 0.0
      %2839 = vmatprep.subr.mxu0 0.0
      %2840 = vmatpush1.msra.mxu0 0.0
      %2841 = vmatprep.subr.mxu0 0.0
      %2842 = vmatpush1.msra.mxu0 0.0
      %2843 = vmatprep.subr.mxu0 0.0
      %2844 = vmatpush1.msra.mxu0 0.0
      %2845 = vmatprep.subr.mxu0 0.0
      %2846 = vmatpush1.msra.mxu0 0.0
      %2847 = vmatprep.subr.mxu0 0.0
      %2848 = vmatpush1.msra.mxu0 0.0
      %2849 = vmatprep.subr.mxu0 0.0
      %2850 = vmatpush1.msra.mxu0 0.0
      %2851 = vmatprep.subr.mxu0 0.0
      %2852 = vmatpush1.msra.mxu0 0.0
      %2853 = vmatprep.subr.mxu0 0.0
      %2854 = vmatpush1.msra.mxu0 0.0
      %2855 = vmatprep.subr.mxu0 0.0
      %2856 = vmatpush1.msra.mxu0 0.0
      %2857 = vmatprep.subr.mxu0 0.0
      %2858 = vmatpush1.msra.mxu0 0.0
      %2859 = vmatprep.subr.mxu0 %v2827
      %2860 = vmatpush1.msra.mxu0 %v2824
      %2861 = vmatprep.subr.mxu0 0.0
      %2862 = vmatpush2.msra.mxu0 0.0
      %2863 = vmatprep.subr.mxu0 0.0
      %2864 = vmatpush2.msra.mxu0 0.0
      %2865 = vmatprep.subr.mxu0 0.0
      %2866 = vmatpush2.msra.mxu0 0.0
      %2867 = vmatprep.subr.mxu0 0.0
      %2868 = vmatpush2.msra.mxu0 0.0
      %2869 = vmatprep.subr.mxu0 0.0
      %2870 = vmatpush2.msra.mxu0 0.0
      %2871 = vmatprep.subr.mxu0 0.0
      %2872 = vmatpush2.msra.mxu0 0.0
      %2873 = vmatprep.subr.mxu0 0.0
      %2874 = vmatpush2.msra.mxu0 0.0
      %2875 = vmatprep.subr.mxu0 0.0
      %2876 = vmatpush2.msra.mxu0 0.0
      %2877 = vmatprep.subr.mxu0 0.0
      %2878 = vmatpush2.msra.mxu0 0.0
      %2879 = vmatprep.subr.mxu0 0.0
      %2880 = vmatpush2.msra.mxu0 0.0
      %2881 = vmatprep.subr.mxu0 0.0
      %2882 = vmatpush2.msra.mxu0 0.0
      %2883 = vmatprep.subr.mxu0 0.0
      %2884 = vmatpush2.msra.mxu0 0.0
      %2885 = vmatprep.subr.mxu0 0.0
      %2886 = vmatpush2.msra.mxu0 0.0
      %2887 = vmatprep.subr.mxu0 0.0
      %2888 = vmatpush2.msra.mxu0 0.0
      %2889 = vmatprep.subr.mxu0 0.0
      %2890 = vmatpush2.msra.mxu0 0.0
      %2891 = vmatprep.subr.mxu0 0.0
      %2892 = vmatpush2.msra.mxu0 0.0
      %2893 = vmatprep.mubr.f32.mxu0 0.0
      %2894 = vmatmul.mubr.f32.gmra.mxu0 %v2821
      %v2895 = vpop.f32.mrf.mxu0
      %v2896 = vadd.f32 0.0, %v2895
      %v2897 = vpop.f32.mrf.mxu0
      %v2898 = vadd.f32 0.0, %v2897
      %2899 = vdwg.mxu0
      %v2902 = vcombine.low %v2896, %v2898
      %v2904 = vadd.f32 %v2809, %v2902
      %s2905 = scalar_lea.vmem %s2, 8
      %v2906 = vld [vmem:[%s2905] sm:$0xf]
      %2908 = vset.pattern.permute.xlu0 0
      %2909 = vperm.xlu0 %2908, %v2906
      %v2910 = vpop.permute.xlu0 %2909
      %v2912 = vunpack.c.l.s4 839922192
      %v2913 = vunpack.c.0.s8 %v2912
      %v2914 = vlaneseq
      %v2915 = vshrl.u32 %v2914, 7
      %v2916 = vsub.s32 %v2913, %v2915
      %v2917 = vrot.slane %v2910, %v2916
      %v2919 = vmul.f32 %v2904, %v2917
      %s2920 = scalar_lea.vmem %s3, 8
      %v2921 = vld [vmem:[%s2920] sm:$0xf]
      %2923 = vset.pattern.permute.xlu0 0
      %2924 = vperm.xlu0 %2923, %v2921
      %v2925 = vpop.permute.xlu0 %2924
      %v2927 = vunpack.c.l.s4 839922192
      %v2928 = vunpack.c.0.s8 %v2927
      %v2929 = vlaneseq
      %v2930 = vshrl.u32 %v2929, 7
      %v2931 = vsub.s32 %v2928, %v2930
      %v2932 = vrot.slane %v2925, %v2931
      %v2934 = vadd.f32 %v2919, %v2932
      %v2935 = vmax.f32 %v2934, 0.0
      %v2936 = vadd.f32 %v2056, %v2053
      %v2938 = vcombine.high %v2935, %v2935
      %2940 = vrot.lane.b32.xlu0 %v2935, 17
      %v2941 = vpop.permute.xlu0 %2940
      %2942 = vrot.lane.b32.xlu0 %v2938, 17
      %v2943 = vpop.permute.xlu0 %2942
      %v2944 = vsel %vm250, %v2941, %v2943
      %v2945 = vsel %vm250, %v2943, %v2941
      %v2946 = vmul.f32 %v2945, %v257
      %v2947 = vmul.f32 %v2944, %v261
      %s2948 = scalar_lea.vmem %s1, 108
      %v2949 = vld [vmem:[%s2948] sm:$0xf]
      %v2951 = vsel %vm289, %v2949, 0
      %v2954 = vsel %vm293, %v2946, 0
      %v2957 = vsel %vm293, %v2947, 0
      %2959 = vmatprep.subr.mxu0 0.0
      %2960 = vmatpush1.msra.mxu0 0.0
      %2961 = vmatprep.subr.mxu0 0.0
      %2962 = vmatpush1.msra.mxu0 0.0
      %2963 = vmatprep.subr.mxu0 0.0
      %2964 = vmatpush1.msra.mxu0 0.0
      %2965 = vmatprep.subr.mxu0 0.0
      %2966 = vmatpush1.msra.mxu0 0.0
      %2967 = vmatprep.subr.mxu0 0.0
      %2968 = vmatpush1.msra.mxu0 0.0
      %2969 = vmatprep.subr.mxu0 0.0
      %2970 = vmatpush1.msra.mxu0 0.0
      %2971 = vmatprep.subr.mxu0 0.0
      %2972 = vmatpush1.msra.mxu0 0.0
      %2973 = vmatprep.subr.mxu0 0.0
      %2974 = vmatpush1.msra.mxu0 0.0
      %2975 = vmatprep.subr.mxu0 0.0
      %2976 = vmatpush1.msra.mxu0 0.0
      %2977 = vmatprep.subr.mxu0 0.0
      %2978 = vmatpush1.msra.mxu0 0.0
      %2979 = vmatprep.subr.mxu0 0.0
      %2980 = vmatpush1.msra.mxu0 0.0
      %2981 = vmatprep.subr.mxu0 0.0
      %2982 = vmatpush1.msra.mxu0 0.0
      %2983 = vmatprep.subr.mxu0 0.0
      %2984 = vmatpush1.msra.mxu0 0.0
      %2985 = vmatprep.subr.mxu0 0.0
      %2986 = vmatpush1.msra.mxu0 0.0
      %2987 = vmatprep.subr.mxu0 0.0
      %2988 = vmatpush1.msra.mxu0 0.0
      %2989 = vmatprep.subr.mxu0 %v2957
      %2990 = vmatpush1.msra.mxu0 %v2954
      %2991 = vmatprep.subr.mxu0 0.0
      %2992 = vmatpush2.msra.mxu0 0.0
      %2993 = vmatprep.subr.mxu0 0.0
      %2994 = vmatpush2.msra.mxu0 0.0
      %2995 = vmatprep.subr.mxu0 0.0
      %2996 = vmatpush2.msra.mxu0 0.0
      %2997 = vmatprep.subr.mxu0 0.0
      %2998 = vmatpush2.msra.mxu0 0.0
      %2999 = vmatprep.subr.mxu0 0.0
      %3000 = vmatpush2.msra.mxu0 0.0
      %3001 = vmatprep.subr.mxu0 0.0
      %3002 = vmatpush2.msra.mxu0 0.0
      %3003 = vmatprep.subr.mxu0 0.0
      %3004 = vmatpush2.msra.mxu0 0.0
      %3005 = vmatprep.subr.mxu0 0.0
      %3006 = vmatpush2.msra.mxu0 0.0
      %3007 = vmatprep.subr.mxu0 0.0
      %3008 = vmatpush2.msra.mxu0 0.0
      %3009 = vmatprep.subr.mxu0 0.0
      %3010 = vmatpush2.msra.mxu0 0.0
      %3011 = vmatprep.subr.mxu0 0.0
      %3012 = vmatpush2.msra.mxu0 0.0
      %3013 = vmatprep.subr.mxu0 0.0
      %3014 = vmatpush2.msra.mxu0 0.0
      %3015 = vmatprep.subr.mxu0 0.0
      %3016 = vmatpush2.msra.mxu0 0.0
      %3017 = vmatprep.subr.mxu0 0.0
      %3018 = vmatpush2.msra.mxu0 0.0
      %3019 = vmatprep.subr.mxu0 0.0
      %3020 = vmatpush2.msra.mxu0 0.0
      %3021 = vmatprep.subr.mxu0 0.0
      %3022 = vmatpush2.msra.mxu0 0.0
      %3023 = vmatprep.mubr.f32.mxu0 0.0
      %3024 = vmatmul.mubr.f32.gmra.mxu0 %v2951
      %v3025 = vpop.f32.mrf.mxu0
      %v3026 = vadd.f32 0.0, %v3025
      %v3027 = vpop.f32.mrf.mxu0
      %v3028 = vadd.f32 0.0, %v3027
      %3029 = vdwg.mxu0
      %v3032 = vcombine.low %v3026, %v3028
      %v3034 = vadd.f32 %v2936, %v3032
      %3035 = vrot.lane.b32.xlu0 %v2935, 16
      %v3036 = vpop.permute.xlu0 %3035
      %3037 = vrot.lane.b32.xlu0 %v2938, 16
      %v3038 = vpop.permute.xlu0 %3037
      %v3039 = vsel %vm271, %v3036, %v3038
      %v3040 = vsel %vm271, %v3038, %v3036
      %v3041 = vmul.f32 %v3040, %v278
      %v3042 = vmul.f32 %v3039, %v282
      %s3043 = scalar_lea.vmem %s1, 112
      %v3044 = vld [vmem:[%s3043] sm:$0xf]
      %v3046 = vsel %vm289, %v3044, 0
      %v3049 = vsel %vm293, %v3041, 0
      %v3052 = vsel %vm293, %v3042, 0
      %3054 = vmatprep.subr.mxu0 0.0
      %3055 = vmatpush1.msra.mxu0 0.0
      %3056 = vmatprep.subr.mxu0 0.0
      %3057 = vmatpush1.msra.mxu0 0.0
      %3058 = vmatprep.subr.mxu0 0.0
      %3059 = vmatpush1.msra.mxu0 0.0
      %3060 = vmatprep.subr.mxu0 0.0
      %3061 = vmatpush1.msra.mxu0 0.0
      %3062 = vmatprep.subr.mxu0 0.0
      %3063 = vmatpush1.msra.mxu0 0.0
      %3064 = vmatprep.subr.mxu0 0.0
      %3065 = vmatpush1.msra.mxu0 0.0
      %3066 = vmatprep.subr.mxu0 0.0
      %3067 = vmatpush1.msra.mxu0 0.0
      %3068 = vmatprep.subr.mxu0 0.0
      %3069 = vmatpush1.msra.mxu0 0.0
      %3070 = vmatprep.subr.mxu0 0.0
      %3071 = vmatpush1.msra.mxu0 0.0
      %3072 = vmatprep.subr.mxu0 0.0
      %3073 = vmatpush1.msra.mxu0 0.0
      %3074 = vmatprep.subr.mxu0 0.0
      %3075 = vmatpush1.msra.mxu0 0.0
      %3076 = vmatprep.subr.mxu0 0.0
      %3077 = vmatpush1.msra.mxu0 0.0
      %3078 = vmatprep.subr.mxu0 0.0
      %3079 = vmatpush1.msra.mxu0 0.0
      %3080 = vmatprep.subr.mxu0 0.0
      %3081 = vmatpush1.msra.mxu0 0.0
      %3082 = vmatprep.subr.mxu0 0.0
      %3083 = vmatpush1.msra.mxu0 0.0
      %3084 = vmatprep.subr.mxu0 %v3052
      %3085 = vmatpush1.msra.mxu0 %v3049
      %3086 = vmatprep.subr.mxu0 0.0
      %3087 = vmatpush2.msra.mxu0 0.0
      %3088 = vmatprep.subr.mxu0 0.0
      %3089 = vmatpush2.msra.mxu0 0.0
      %3090 = vmatprep.subr.mxu0 0.0
      %3091 = vmatpush2.msra.mxu0 0.0
      %3092 = vmatprep.subr.mxu0 0.0
      %3093 = vmatpush2.msra.mxu0 0.0
      %3094 = vmatprep.subr.mxu0 0.0
      %3095 = vmatpush2.msra.mxu0 0.0
      %3096 = vmatprep.subr.mxu0 0.0
      %3097 = vmatpush2.msra.mxu0 0.0
      %3098 = vmatprep.subr.mxu0 0.0
      %3099 = vmatpush2.msra.mxu0 0.0
      %3100 = vmatprep.subr.mxu0 0.0
      %3101 = vmatpush2.msra.mxu0 0.0
      %3102 = vmatprep.subr.mxu0 0.0
      %3103 = vmatpush2.msra.mxu0 0.0
      %3104 = vmatprep.subr.mxu0 0.0
      %3105 = vmatpush2.msra.mxu0 0.0
      %3106 = vmatprep.subr.mxu0 0.0
      %3107 = vmatpush2.msra.mxu0 0.0
      %3108 = vmatprep.subr.mxu0 0.0
      %3109 = vmatpush2.msra.mxu0 0.0
      %3110 = vmatprep.subr.mxu0 0.0
      %3111 = vmatpush2.msra.mxu0 0.0
      %3112 = vmatprep.subr.mxu0 0.0
      %3113 = vmatpush2.msra.mxu0 0.0
      %3114 = vmatprep.subr.mxu0 0.0
      %3115 = vmatpush2.msra.mxu0 0.0
      %3116 = vmatprep.subr.mxu0 0.0
      %3117 = vmatpush2.msra.mxu0 0.0
      %3118 = vmatprep.mubr.f32.mxu0 0.0
      %3119 = vmatmul.mubr.f32.gmra.mxu0 %v3046
      %v3120 = vpop.f32.mrf.mxu0
      %v3121 = vadd.f32 0.0, %v3120
      %v3122 = vpop.f32.mrf.mxu0
      %v3123 = vadd.f32 0.0, %v3122
      %3124 = vdwg.mxu0
      %v3127 = vcombine.low %v3121, %v3123
      %v3129 = vadd.f32 %v3034, %v3127
      %3130 = vrot.lane.b32.xlu0 %v2935, 15
      %v3131 = vpop.permute.xlu0 %3130
      %3132 = vrot.lane.b32.xlu0 %v2938, 15
      %v3133 = vpop.permute.xlu0 %3132
      %v3134 = vsel %vm455, %v3131, %v3133
      %v3135 = vsel %vm455, %v3133, %v3131
      %v3136 = vmul.f32 %v3135, %v462
      %v3137 = vmul.f32 %v3134, %v466
      %s3138 = scalar_lea.vmem %s1, 116
      %v3139 = vld [vmem:[%s3138] sm:$0xf]
      %v3141 = vsel %vm289, %v3139, 0
      %v3144 = vsel %vm293, %v3136, 0
      %v3147 = vsel %vm293, %v3137, 0
      %3149 = vmatprep.subr.mxu0 0.0
      %3150 = vmatpush1.msra.mxu0 0.0
      %3151 = vmatprep.subr.mxu0 0.0
      %3152 = vmatpush1.msra.mxu0 0.0
      %3153 = vmatprep.subr.mxu0 0.0
      %3154 = vmatpush1.msra.mxu0 0.0
      %3155 = vmatprep.subr.mxu0 0.0
      %3156 = vmatpush1.msra.mxu0 0.0
      %3157 = vmatprep.subr.mxu0 0.0
      %3158 = vmatpush1.msra.mxu0 0.0
      %3159 = vmatprep.subr.mxu0 0.0
      %3160 = vmatpush1.msra.mxu0 0.0
      %3161 = vmatprep.subr.mxu0 0.0
      %3162 = vmatpush1.msra.mxu0 0.0
      %3163 = vmatprep.subr.mxu0 0.0
      %3164 = vmatpush1.msra.mxu0 0.0
      %3165 = vmatprep.subr.mxu0 0.0
      %3166 = vmatpush1.msra.mxu0 0.0
      %3167 = vmatprep.subr.mxu0 0.0
      %3168 = vmatpush1.msra.mxu0 0.0
      %3169 = vmatprep.subr.mxu0 0.0
      %3170 = vmatpush1.msra.mxu0 0.0
      %3171 = vmatprep.subr.mxu0 0.0
      %3172 = vmatpush1.msra.mxu0 0.0
      %3173 = vmatprep.subr.mxu0 0.0
      %3174 = vmatpush1.msra.mxu0 0.0
      %3175 = vmatprep.subr.mxu0 0.0
      %3176 = vmatpush1.msra.mxu0 0.0
      %3177 = vmatprep.subr.mxu0 0.0
      %3178 = vmatpush1.msra.mxu0 0.0
      %3179 = vmatprep.subr.mxu0 %v3147
      %3180 = vmatpush1.msra.mxu0 %v3144
      %3181 = vmatprep.subr.mxu0 0.0
      %3182 = vmatpush2.msra.mxu0 0.0
      %3183 = vmatprep.subr.mxu0 0.0
      %3184 = vmatpush2.msra.mxu0 0.0
      %3185 = vmatprep.subr.mxu0 0.0
      %3186 = vmatpush2.msra.mxu0 0.0
      %3187 = vmatprep.subr.mxu0 0.0
      %3188 = vmatpush2.msra.mxu0 0.0
      %3189 = vmatprep.subr.mxu0 0.0
      %3190 = vmatpush2.msra.mxu0 0.0
      %3191 = vmatprep.subr.mxu0 0.0
      %3192 = vmatpush2.msra.mxu0 0.0
      %3193 = vmatprep.subr.mxu0 0.0
      %3194 = vmatpush2.msra.mxu0 0.0
      %3195 = vmatprep.subr.mxu0 0.0
      %3196 = vmatpush2.msra.mxu0 0.0
      %3197 = vmatprep.subr.mxu0 0.0
      %3198 = vmatpush2.msra.mxu0 0.0
      %3199 = vmatprep.subr.mxu0 0.0
      %3200 = vmatpush2.msra.mxu0 0.0
      %3201 = vmatprep.subr.mxu0 0.0
      %3202 = vmatpush2.msra.mxu0 0.0
      %3203 = vmatprep.subr.mxu0 0.0
      %3204 = vmatpush2.msra.mxu0 0.0
      %3205 = vmatprep.subr.mxu0 0.0
      %3206 = vmatpush2.msra.mxu0 0.0
      %3207 = vmatprep.subr.mxu0 0.0
      %3208 = vmatpush2.msra.mxu0 0.0
      %3209 = vmatprep.subr.mxu0 0.0
      %3210 = vmatpush2.msra.mxu0 0.0
      %3211 = vmatprep.subr.mxu0 0.0
      %3212 = vmatpush2.msra.mxu0 0.0
      %3213 = vmatprep.mubr.f32.mxu0 0.0
      %3214 = vmatmul.mubr.f32.gmra.mxu0 %v3141
      %v3215 = vpop.f32.mrf.mxu0
      %v3216 = vadd.f32 0.0, %v3215
      %v3217 = vpop.f32.mrf.mxu0
      %v3218 = vadd.f32 0.0, %v3217
      %3219 = vdwg.mxu0
      %v3222 = vcombine.low %v3216, %v3218
      %v3224 = vadd.f32 %v3129, %v3222
      %3225 = vrot.lane.b32.xlu0 %v2935, 1
      %v3226 = vpop.permute.xlu0 %3225
      %3227 = vrot.lane.b32.xlu0 %v2938, 1
      %v3228 = vpop.permute.xlu0 %3227
      %v3229 = vsel %vm559, %v3226, %v3228
      %v3230 = vsel %vm559, %v3228, %v3226
      %v3231 = vmul.f32 %v3230, %v566
      %v3232 = vmul.f32 %v3229, %v570
      %s3233 = scalar_lea.vmem %s1, 120
      %v3234 = vld [vmem:[%s3233] sm:$0xf]
      %v3236 = vsel %vm289, %v3234, 0
      %v3239 = vsel %vm293, %v3231, 0
      %v3242 = vsel %vm293, %v3232, 0
      %3244 = vmatprep.subr.mxu0 0.0
      %3245 = vmatpush1.msra.mxu0 0.0
      %3246 = vmatprep.subr.mxu0 0.0
      %3247 = vmatpush1.msra.mxu0 0.0
      %3248 = vmatprep.subr.mxu0 0.0
      %3249 = vmatpush1.msra.mxu0 0.0
      %3250 = vmatprep.subr.mxu0 0.0
      %3251 = vmatpush1.msra.mxu0 0.0
      %3252 = vmatprep.subr.mxu0 0.0
      %3253 = vmatpush1.msra.mxu0 0.0
      %3254 = vmatprep.subr.mxu0 0.0
      %3255 = vmatpush1.msra.mxu0 0.0
      %3256 = vmatprep.subr.mxu0 0.0
      %3257 = vmatpush1.msra.mxu0 0.0
      %3258 = vmatprep.subr.mxu0 0.0
      %3259 = vmatpush1.msra.mxu0 0.0
      %3260 = vmatprep.subr.mxu0 0.0
      %3261 = vmatpush1.msra.mxu0 0.0
      %3262 = vmatprep.subr.mxu0 0.0
      %3263 = vmatpush1.msra.mxu0 0.0
      %3264 = vmatprep.subr.mxu0 0.0
      %3265 = vmatpush1.msra.mxu0 0.0
      %3266 = vmatprep.subr.mxu0 0.0
      %3267 = vmatpush1.msra.mxu0 0.0
      %3268 = vmatprep.subr.mxu0 0.0
      %3269 = vmatpush1.msra.mxu0 0.0
      %3270 = vmatprep.subr.mxu0 0.0
      %3271 = vmatpush1.msra.mxu0 0.0
      %3272 = vmatprep.subr.mxu0 0.0
      %3273 = vmatpush1.msra.mxu0 0.0
      %3274 = vmatprep.subr.mxu0 %v3242
      %3275 = vmatpush1.msra.mxu0 %v3239
      %3276 = vmatprep.subr.mxu0 0.0
      %3277 = vmatpush2.msra.mxu0 0.0
      %3278 = vmatprep.subr.mxu0 0.0
      %3279 = vmatpush2.msra.mxu0 0.0
      %3280 = vmatprep.subr.mxu0 0.0
      %3281 = vmatpush2.msra.mxu0 0.0
      %3282 = vmatprep.subr.mxu0 0.0
      %3283 = vmatpush2.msra.mxu0 0.0
      %3284 = vmatprep.subr.mxu0 0.0
      %3285 = vmatpush2.msra.mxu0 0.0
      %3286 = vmatprep.subr.mxu0 0.0
      %3287 = vmatpush2.msra.mxu0 0.0
      %3288 = vmatprep.subr.mxu0 0.0
      %3289 = vmatpush2.msra.mxu0 0.0
      %3290 = vmatprep.subr.mxu0 0.0
      %3291 = vmatpush2.msra.mxu0 0.0
      %3292 = vmatprep.subr.mxu0 0.0
      %3293 = vmatpush2.msra.mxu0 0.0
      %3294 = vmatprep.subr.mxu0 0.0
      %3295 = vmatpush2.msra.mxu0 0.0
      %3296 = vmatprep.subr.mxu0 0.0
      %3297 = vmatpush2.msra.mxu0 0.0
      %3298 = vmatprep.subr.mxu0 0.0
      %3299 = vmatpush2.msra.mxu0 0.0
      %3300 = vmatprep.subr.mxu0 0.0
      %3301 = vmatpush2.msra.mxu0 0.0
      %3302 = vmatprep.subr.mxu0 0.0
      %3303 = vmatpush2.msra.mxu0 0.0
      %3304 = vmatprep.subr.mxu0 0.0
      %3305 = vmatpush2.msra.mxu0 0.0
      %3306 = vmatprep.subr.mxu0 0.0
      %3307 = vmatpush2.msra.mxu0 0.0
      %3308 = vmatprep.mubr.f32.mxu0 0.0
      %3309 = vmatmul.mubr.f32.gmra.mxu0 %v3236
      %v3310 = vpop.f32.mrf.mxu0
      %v3311 = vadd.f32 0.0, %v3310
      %v3312 = vpop.f32.mrf.mxu0
      %v3313 = vadd.f32 0.0, %v3312
      %3314 = vdwg.mxu0
      %v3317 = vcombine.low %v3311, %v3313
      %v3319 = vadd.f32 %v3224, %v3317
      %s3320 = scalar_lea.vmem %s1, 124
      %v3321 = vld [vmem:[%s3320] sm:$0xf]
      %v3323 = vsel %vm289, %v3321, 0
      %v3325 = vsel %vm293, %v2935, 0
      %v3327 = vsel %vm293, %v2938, 0
      %3329 = vmatprep.subr.mxu0 0.0
      %3330 = vmatpush1.msra.mxu0 0.0
      %3331 = vmatprep.subr.mxu0 0.0
      %3332 = vmatpush1.msra.mxu0 0.0
      %3333 = vmatprep.subr.mxu0 0.0
      %3334 = vmatpush1.msra.mxu0 0.0
      %3335 = vmatprep.subr.mxu0 0.0
      %3336 = vmatpush1.msra.mxu0 0.0
      %3337 = vmatprep.subr.mxu0 0.0
      %3338 = vmatpush1.msra.mxu0 0.0
      %3339 = vmatprep.subr.mxu0 0.0
      %3340 = vmatpush1.msra.mxu0 0.0
      %3341 = vmatprep.subr.mxu0 0.0
      %3342 = vmatpush1.msra.mxu0 0.0
      %3343 = vmatprep.subr.mxu0 0.0
      %3344 = vmatpush1.msra.mxu0 0.0
      %3345 = vmatprep.subr.mxu0 0.0
      %3346 = vmatpush1.msra.mxu0 0.0
      %3347 = vmatprep.subr.mxu0 0.0
      %3348 = vmatpush1.msra.mxu0 0.0
      %3349 = vmatprep.subr.mxu0 0.0
      %3350 = vmatpush1.msra.mxu0 0.0
      %3351 = vmatprep.subr.mxu0 0.0
      %3352 = vmatpush1.msra.mxu0 0.0
      %3353 = vmatprep.subr.mxu0 0.0
      %3354 = vmatpush1.msra.mxu0 0.0
      %3355 = vmatprep.subr.mxu0 0.0
      %3356 = vmatpush1.msra.mxu0 0.0
      %3357 = vmatprep.subr.mxu0 0.0
      %3358 = vmatpush1.msra.mxu0 0.0
      %3359 = vmatprep.subr.mxu0 %v3327
      %3360 = vmatpush1.msra.mxu0 %v3325
      %3361 = vmatprep.subr.mxu0 0.0
      %3362 = vmatpush2.msra.mxu0 0.0
      %3363 = vmatprep.subr.mxu0 0.0
      %3364 = vmatpush2.msra.mxu0 0.0
      %3365 = vmatprep.subr.mxu0 0.0
      %3366 = vmatpush2.msra.mxu0 0.0
      %3367 = vmatprep.subr.mxu0 0.0
      %3368 = vmatpush2.msra.mxu0 0.0
      %3369 = vmatprep.subr.mxu0 0.0
      %3370 = vmatpush2.msra.mxu0 0.0
      %3371 = vmatprep.subr.mxu0 0.0
      %3372 = vmatpush2.msra.mxu0 0.0
      %3373 = vmatprep.subr.mxu0 0.0
      %3374 = vmatpush2.msra.mxu0 0.0
      %3375 = vmatprep.subr.mxu0 0.0
      %3376 = vmatpush2.msra.mxu0 0.0
      %3377 = vmatprep.subr.mxu0 0.0
      %3378 = vmatpush2.msra.mxu0 0.0
      %3379 = vmatprep.subr.mxu0 0.0
      %3380 = vmatpush2.msra.mxu0 0.0
      %3381 = vmatprep.subr.mxu0 0.0
      %3382 = vmatpush2.msra.mxu0 0.0
      %3383 = vmatprep.subr.mxu0 0.0
      %3384 = vmatpush2.msra.mxu0 0.0
      %3385 = vmatprep.subr.mxu0 0.0
      %3386 = vmatpush2.msra.mxu0 0.0
      %3387 = vmatprep.subr.mxu0 0.0
      %3388 = vmatpush2.msra.mxu0 0.0
      %3389 = vmatprep.subr.mxu0 0.0
      %3390 = vmatpush2.msra.mxu0 0.0
      %3391 = vmatprep.subr.mxu0 0.0
      %3392 = vmatpush2.msra.mxu0 0.0
      %3393 = vmatprep.mubr.f32.mxu0 0.0
      %3394 = vmatmul.mubr.f32.gmra.mxu0 %v3323
      %v3395 = vpop.f32.mrf.mxu0
      %v3396 = vadd.f32 0.0, %v3395
      %v3397 = vpop.f32.mrf.mxu0
      %v3398 = vadd.f32 0.0, %v3397
      %3399 = vdwg.mxu0
      %v3402 = vcombine.low %v3396, %v3398
      %v3404 = vadd.f32 %v3319, %v3402
      %3405 = vrot.lane.b32.xlu0 %v2935, 127
      %v3406 = vpop.permute.xlu0 %3405
      %3407 = vrot.lane.b32.xlu0 %v2938, 127
      %v3408 = vpop.permute.xlu0 %3407
      %v3409 = vsel %vm745, %v3406, %v3408
      %v3410 = vsel %vm745, %v3408, %v3406
      %v3411 = vmul.f32 %v3409, %v752
      %v3412 = vmul.f32 %v3410, %v756
      %s3413 = scalar_lea.vmem %s1, 128
      %v3414 = vld [vmem:[%s3413] sm:$0xf]
      %v3416 = vsel %vm289, %v3414, 0
      %v3419 = vsel %vm293, %v3411, 0
      %v3422 = vsel %vm293, %v3412, 0
      %3424 = vmatprep.subr.mxu0 0.0
      %3425 = vmatpush1.msra.mxu0 0.0
      %3426 = vmatprep.subr.mxu0 0.0
      %3427 = vmatpush1.msra.mxu0 0.0
      %3428 = vmatprep.subr.mxu0 0.0
      %3429 = vmatpush1.msra.mxu0 0.0
      %3430 = vmatprep.subr.mxu0 0.0
      %3431 = vmatpush1.msra.mxu0 0.0
      %3432 = vmatprep.subr.mxu0 0.0
      %3433 = vmatpush1.msra.mxu0 0.0
      %3434 = vmatprep.subr.mxu0 0.0
      %3435 = vmatpush1.msra.mxu0 0.0
      %3436 = vmatprep.subr.mxu0 0.0
      %3437 = vmatpush1.msra.mxu0 0.0
      %3438 = vmatprep.subr.mxu0 0.0
      %3439 = vmatpush1.msra.mxu0 0.0
      %3440 = vmatprep.subr.mxu0 0.0
      %3441 = vmatpush1.msra.mxu0 0.0
      %3442 = vmatprep.subr.mxu0 0.0
      %3443 = vmatpush1.msra.mxu0 0.0
      %3444 = vmatprep.subr.mxu0 0.0
      %3445 = vmatpush1.msra.mxu0 0.0
      %3446 = vmatprep.subr.mxu0 0.0
      %3447 = vmatpush1.msra.mxu0 0.0
      %3448 = vmatprep.subr.mxu0 0.0
      %3449 = vmatpush1.msra.mxu0 0.0
      %3450 = vmatprep.subr.mxu0 0.0
      %3451 = vmatpush1.msra.mxu0 0.0
      %3452 = vmatprep.subr.mxu0 0.0
      %3453 = vmatpush1.msra.mxu0 0.0
      %3454 = vmatprep.subr.mxu0 %v3422
      %3455 = vmatpush1.msra.mxu0 %v3419
      %3456 = vmatprep.subr.mxu0 0.0
      %3457 = vmatpush2.msra.mxu0 0.0
      %3458 = vmatprep.subr.mxu0 0.0
      %3459 = vmatpush2.msra.mxu0 0.0
      %3460 = vmatprep.subr.mxu0 0.0
      %3461 = vmatpush2.msra.mxu0 0.0
      %3462 = vmatprep.subr.mxu0 0.0
      %3463 = vmatpush2.msra.mxu0 0.0
      %3464 = vmatprep.subr.mxu0 0.0
      %3465 = vmatpush2.msra.mxu0 0.0
      %3466 = vmatprep.subr.mxu0 0.0
      %3467 = vmatpush2.msra.mxu0 0.0
      %3468 = vmatprep.subr.mxu0 0.0
      %3469 = vmatpush2.msra.mxu0 0.0
      %3470 = vmatprep.subr.mxu0 0.0
      %3471 = vmatpush2.msra.mxu0 0.0
      %3472 = vmatprep.subr.mxu0 0.0
      %3473 = vmatpush2.msra.mxu0 0.0
      %3474 = vmatprep.subr.mxu0 0.0
      %3475 = vmatpush2.msra.mxu0 0.0
      %3476 = vmatprep.subr.mxu0 0.0
      %3477 = vmatpush2.msra.mxu0 0.0
      %3478 = vmatprep.subr.mxu0 0.0
      %3479 = vmatpush2.msra.mxu0 0.0
      %3480 = vmatprep.subr.mxu0 0.0
      %3481 = vmatpush2.msra.mxu0 0.0
      %3482 = vmatprep.subr.mxu0 0.0
      %3483 = vmatpush2.msra.mxu0 0.0
      %3484 = vmatprep.subr.mxu0 0.0
      %3485 = vmatpush2.msra.mxu0 0.0
      %3486 = vmatprep.subr.mxu0 0.0
      %3487 = vmatpush2.msra.mxu0 0.0
      %3488 = vmatprep.mubr.f32.mxu0 0.0
      %3489 = vmatmul.mubr.f32.gmra.mxu0 %v3416
      %v3490 = vpop.f32.mrf.mxu0
      %v3491 = vadd.f32 0.0, %v3490
      %v3492 = vpop.f32.mrf.mxu0
      %v3493 = vadd.f32 0.0, %v3492
      %3494 = vdwg.mxu0
      %v3497 = vcombine.low %v3491, %v3493
      %v3499 = vadd.f32 %v3404, %v3497
      %3500 = vrot.lane.b32.xlu0 %v2935, 113
      %v3501 = vpop.permute.xlu0 %3500
      %3502 = vrot.lane.b32.xlu0 %v2938, 113
      %v3503 = vpop.permute.xlu0 %3502
      %v3504 = vsel %vm849, %v3501, %v3503
      %v3505 = vsel %vm849, %v3503, %v3501
      %v3506 = vmul.f32 %v3504, %v856
      %v3507 = vmul.f32 %v3505, %v860
      %s3508 = scalar_lea.vmem %s1, 132
      %v3509 = vld [vmem:[%s3508] sm:$0xf]
      %v3511 = vsel %vm289, %v3509, 0
      %v3514 = vsel %vm293, %v3506, 0
      %v3517 = vsel %vm293, %v3507, 0
      %3519 = vmatprep.subr.mxu0 0.0
      %3520 = vmatpush1.msra.mxu0 0.0
      %3521 = vmatprep.subr.mxu0 0.0
      %3522 = vmatpush1.msra.mxu0 0.0
      %3523 = vmatprep.subr.mxu0 0.0
      %3524 = vmatpush1.msra.mxu0 0.0
      %3525 = vmatprep.subr.mxu0 0.0
      %3526 = vmatpush1.msra.mxu0 0.0
      %3527 = vmatprep.subr.mxu0 0.0
      %3528 = vmatpush1.msra.mxu0 0.0
      %3529 = vmatprep.subr.mxu0 0.0
      %3530 = vmatpush1.msra.mxu0 0.0
      %3531 = vmatprep.subr.mxu0 0.0
      %3532 = vmatpush1.msra.mxu0 0.0
      %3533 = vmatprep.subr.mxu0 0.0
      %3534 = vmatpush1.msra.mxu0 0.0
      %3535 = vmatprep.subr.mxu0 0.0
      %3536 = vmatpush1.msra.mxu0 0.0
      %3537 = vmatprep.subr.mxu0 0.0
      %3538 = vmatpush1.msra.mxu0 0.0
      %3539 = vmatprep.subr.mxu0 0.0
      %3540 = vmatpush1.msra.mxu0 0.0
      %3541 = vmatprep.subr.mxu0 0.0
      %3542 = vmatpush1.msra.mxu0 0.0
      %3543 = vmatprep.subr.mxu0 0.0
      %3544 = vmatpush1.msra.mxu0 0.0
      %3545 = vmatprep.subr.mxu0 0.0
      %3546 = vmatpush1.msra.mxu0 0.0
      %3547 = vmatprep.subr.mxu0 0.0
      %3548 = vmatpush1.msra.mxu0 0.0
      %3549 = vmatprep.subr.mxu0 %v3517
      %3550 = vmatpush1.msra.mxu0 %v3514
      %3551 = vmatprep.subr.mxu0 0.0
      %3552 = vmatpush2.msra.mxu0 0.0
      %3553 = vmatprep.subr.mxu0 0.0
      %3554 = vmatpush2.msra.mxu0 0.0
      %3555 = vmatprep.subr.mxu0 0.0
      %3556 = vmatpush2.msra.mxu0 0.0
      %3557 = vmatprep.subr.mxu0 0.0
      %3558 = vmatpush2.msra.mxu0 0.0
      %3559 = vmatprep.subr.mxu0 0.0
      %3560 = vmatpush2.msra.mxu0 0.0
      %3561 = vmatprep.subr.mxu0 0.0
      %3562 = vmatpush2.msra.mxu0 0.0
      %3563 = vmatprep.subr.mxu0 0.0
      %3564 = vmatpush2.msra.mxu0 0.0
      %3565 = vmatprep.subr.mxu0 0.0
      %3566 = vmatpush2.msra.mxu0 0.0
      %3567 = vmatprep.subr.mxu0 0.0
      %3568 = vmatpush2.msra.mxu0 0.0
      %3569 = vmatprep.subr.mxu0 0.0
      %3570 = vmatpush2.msra.mxu0 0.0
      %3571 = vmatprep.subr.mxu0 0.0
      %3572 = vmatpush2.msra.mxu0 0.0
      %3573 = vmatprep.subr.mxu0 0.0
      %3574 = vmatpush2.msra.mxu0 0.0
      %3575 = vmatprep.subr.mxu0 0.0
      %3576 = vmatpush2.msra.mxu0 0.0
      %3577 = vmatprep.subr.mxu0 0.0
      %3578 = vmatpush2.msra.mxu0 0.0
      %3579 = vmatprep.subr.mxu0 0.0
      %3580 = vmatpush2.msra.mxu0 0.0
      %3581 = vmatprep.subr.mxu0 0.0
      %3582 = vmatpush2.msra.mxu0 0.0
      %3583 = vmatprep.mubr.f32.mxu0 0.0
      %3584 = vmatmul.mubr.f32.gmra.mxu0 %v3511
      %v3585 = vpop.f32.mrf.mxu0
      %v3586 = vadd.f32 0.0, %v3585
      %v3587 = vpop.f32.mrf.mxu0
      %v3588 = vadd.f32 0.0, %v3587
      %3589 = vdwg.mxu0
      %v3592 = vcombine.low %v3586, %v3588
      %v3594 = vadd.f32 %v3499, %v3592
      %3595 = vrot.lane.b32.xlu0 %v2935, 112
      %v3596 = vpop.permute.xlu0 %3595
      %3597 = vrot.lane.b32.xlu0 %v2938, 112
      %v3598 = vpop.permute.xlu0 %3597
      %v3599 = vsel %vm953, %v3596, %v3598
      %v3600 = vsel %vm953, %v3598, %v3596
      %v3601 = vmul.f32 %v3599, %v960
      %v3602 = vmul.f32 %v3600, %v964
      %s3603 = scalar_lea.vmem %s1, 136
      %v3604 = vld [vmem:[%s3603] sm:$0xf]
      %v3606 = vsel %vm289, %v3604, 0
      %v3609 = vsel %vm293, %v3601, 0
      %v3612 = vsel %vm293, %v3602, 0
      %3614 = vmatprep.subr.mxu0 0.0
      %3615 = vmatpush1.msra.mxu0 0.0
      %3616 = vmatprep.subr.mxu0 0.0
      %3617 = vmatpush1.msra.mxu0 0.0
      %3618 = vmatprep.subr.mxu0 0.0
      %3619 = vmatpush1.msra.mxu0 0.0
      %3620 = vmatprep.subr.mxu0 0.0
      %3621 = vmatpush1.msra.mxu0 0.0
      %3622 = vmatprep.subr.mxu0 0.0
      %3623 = vmatpush1.msra.mxu0 0.0
      %3624 = vmatprep.subr.mxu0 0.0
      %3625 = vmatpush1.msra.mxu0 0.0
      %3626 = vmatprep.subr.mxu0 0.0
      %3627 = vmatpush1.msra.mxu0 0.0
      %3628 = vmatprep.subr.mxu0 0.0
      %3629 = vmatpush1.msra.mxu0 0.0
      %3630 = vmatprep.subr.mxu0 0.0
      %3631 = vmatpush1.msra.mxu0 0.0
      %3632 = vmatprep.subr.mxu0 0.0
      %3633 = vmatpush1.msra.mxu0 0.0
      %3634 = vmatprep.subr.mxu0 0.0
      %3635 = vmatpush1.msra.mxu0 0.0
      %3636 = vmatprep.subr.mxu0 0.0
      %3637 = vmatpush1.msra.mxu0 0.0
      %3638 = vmatprep.subr.mxu0 0.0
      %3639 = vmatpush1.msra.mxu0 0.0
      %3640 = vmatprep.subr.mxu0 0.0
      %3641 = vmatpush1.msra.mxu0 0.0
      %3642 = vmatprep.subr.mxu0 0.0
      %3643 = vmatpush1.msra.mxu0 0.0
      %3644 = vmatprep.subr.mxu0 %v3612
      %3645 = vmatpush1.msra.mxu0 %v3609
      %3646 = vmatprep.subr.mxu0 0.0
      %3647 = vmatpush2.msra.mxu0 0.0
      %3648 = vmatprep.subr.mxu0 0.0
      %3649 = vmatpush2.msra.mxu0 0.0
      %3650 = vmatprep.subr.mxu0 0.0
      %3651 = vmatpush2.msra.mxu0 0.0
      %3652 = vmatprep.subr.mxu0 0.0
      %3653 = vmatpush2.msra.mxu0 0.0
      %3654 = vmatprep.subr.mxu0 0.0
      %3655 = vmatpush2.msra.mxu0 0.0
      %3656 = vmatprep.subr.mxu0 0.0
      %3657 = vmatpush2.msra.mxu0 0.0
      %3658 = vmatprep.subr.mxu0 0.0
      %3659 = vmatpush2.msra.mxu0 0.0
      %3660 = vmatprep.subr.mxu0 0.0
      %3661 = vmatpush2.msra.mxu0 0.0
      %3662 = vmatprep.subr.mxu0 0.0
      %3663 = vmatpush2.msra.mxu0 0.0
      %3664 = vmatprep.subr.mxu0 0.0
      %3665 = vmatpush2.msra.mxu0 0.0
      %3666 = vmatprep.subr.mxu0 0.0
      %3667 = vmatpush2.msra.mxu0 0.0
      %3668 = vmatprep.subr.mxu0 0.0
      %3669 = vmatpush2.msra.mxu0 0.0
      %3670 = vmatprep.subr.mxu0 0.0
      %3671 = vmatpush2.msra.mxu0 0.0
      %3672 = vmatprep.subr.mxu0 0.0
      %3673 = vmatpush2.msra.mxu0 0.0
      %3674 = vmatprep.subr.mxu0 0.0
      %3675 = vmatpush2.msra.mxu0 0.0
      %3676 = vmatprep.subr.mxu0 0.0
      %3677 = vmatpush2.msra.mxu0 0.0
      %3678 = vmatprep.mubr.f32.mxu0 0.0
      %3679 = vmatmul.mubr.f32.gmra.mxu0 %v3606
      %v3680 = vpop.f32.mrf.mxu0
      %v3681 = vadd.f32 0.0, %v3680
      %v3682 = vpop.f32.mrf.mxu0
      %v3683 = vadd.f32 0.0, %v3682
      %3684 = vdwg.mxu0
      %v3687 = vcombine.low %v3681, %v3683
      %v3689 = vadd.f32 %v3594, %v3687
      %3690 = vrot.lane.b32.xlu0 %v2935, 111
      %v3691 = vpop.permute.xlu0 %3690
      %3692 = vrot.lane.b32.xlu0 %v2938, 111
      %v3693 = vpop.permute.xlu0 %3692
      %v3694 = vsel %vm1057, %v3691, %v3693
      %v3695 = vsel %vm1057, %v3693, %v3691
      %v3696 = vmul.f32 %v3694, %v1064
      %v3697 = vmul.f32 %v3695, %v1068
      %s3698 = scalar_lea.vmem %s1, 140
      %v3699 = vld [vmem:[%s3698] sm:$0xf]
      %v3701 = vsel %vm289, %v3699, 0
      %v3704 = vsel %vm293, %v3696, 0
      %v3707 = vsel %vm293, %v3697, 0
      %3709 = vmatprep.subr.mxu0 0.0
      %3710 = vmatpush1.msra.mxu0 0.0
      %3711 = vmatprep.subr.mxu0 0.0
      %3712 = vmatpush1.msra.mxu0 0.0
      %3713 = vmatprep.subr.mxu0 0.0
      %3714 = vmatpush1.msra.mxu0 0.0
      %3715 = vmatprep.subr.mxu0 0.0
      %3716 = vmatpush1.msra.mxu0 0.0
      %3717 = vmatprep.subr.mxu0 0.0
      %3718 = vmatpush1.msra.mxu0 0.0
      %3719 = vmatprep.subr.mxu0 0.0
      %3720 = vmatpush1.msra.mxu0 0.0
      %3721 = vmatprep.subr.mxu0 0.0
      %3722 = vmatpush1.msra.mxu0 0.0
      %3723 = vmatprep.subr.mxu0 0.0
      %3724 = vmatpush1.msra.mxu0 0.0
      %3725 = vmatprep.subr.mxu0 0.0
      %3726 = vmatpush1.msra.mxu0 0.0
      %3727 = vmatprep.subr.mxu0 0.0
      %3728 = vmatpush1.msra.mxu0 0.0
      %3729 = vmatprep.subr.mxu0 0.0
      %3730 = vmatpush1.msra.mxu0 0.0
      %3731 = vmatprep.subr.mxu0 0.0
      %3732 = vmatpush1.msra.mxu0 0.0
      %3733 = vmatprep.subr.mxu0 0.0
      %3734 = vmatpush1.msra.mxu0 0.0
      %3735 = vmatprep.subr.mxu0 0.0
      %3736 = vmatpush1.msra.mxu0 0.0
      %3737 = vmatprep.subr.mxu0 0.0
      %3738 = vmatpush1.msra.mxu0 0.0
      %3739 = vmatprep.subr.mxu0 %v3707
      %3740 = vmatpush1.msra.mxu0 %v3704
      %3741 = vmatprep.subr.mxu0 0.0
      %3742 = vmatpush2.msra.mxu0 0.0
      %3743 = vmatprep.subr.mxu0 0.0
      %3744 = vmatpush2.msra.mxu0 0.0
      %3745 = vmatprep.subr.mxu0 0.0
      %3746 = vmatpush2.msra.mxu0 0.0
      %3747 = vmatprep.subr.mxu0 0.0
      %3748 = vmatpush2.msra.mxu0 0.0
      %3749 = vmatprep.subr.mxu0 0.0
      %3750 = vmatpush2.msra.mxu0 0.0
      %3751 = vmatprep.subr.mxu0 0.0
      %3752 = vmatpush2.msra.mxu0 0.0
      %3753 = vmatprep.subr.mxu0 0.0
      %3754 = vmatpush2.msra.mxu0 0.0
      %3755 = vmatprep.subr.mxu0 0.0
      %3756 = vmatpush2.msra.mxu0 0.0
      %3757 = vmatprep.subr.mxu0 0.0
      %3758 = vmatpush2.msra.mxu0 0.0
      %3759 = vmatprep.subr.mxu0 0.0
      %3760 = vmatpush2.msra.mxu0 0.0
      %3761 = vmatprep.subr.mxu0 0.0
      %3762 = vmatpush2.msra.mxu0 0.0
      %3763 = vmatprep.subr.mxu0 0.0
      %3764 = vmatpush2.msra.mxu0 0.0
      %3765 = vmatprep.subr.mxu0 0.0
      %3766 = vmatpush2.msra.mxu0 0.0
      %3767 = vmatprep.subr.mxu0 0.0
      %3768 = vmatpush2.msra.mxu0 0.0
      %3769 = vmatprep.subr.mxu0 0.0
      %3770 = vmatpush2.msra.mxu0 0.0
      %3771 = vmatprep.subr.mxu0 0.0
      %3772 = vmatpush2.msra.mxu0 0.0
      %3773 = vmatprep.mubr.f32.mxu0 0.0
      %3774 = vmatmul.mubr.f32.gmra.mxu0 %v3701
      %v3775 = vpop.f32.mrf.mxu0
      %v3776 = vadd.f32 0.0, %v3775
      %v3777 = vpop.f32.mrf.mxu0
      %v3778 = vadd.f32 0.0, %v3777
      %3779 = vdwg.mxu0
      %v3782 = vcombine.low %v3776, %v3778
      %v3784 = vadd.f32 %v3689, %v3782
      %s3785 = scalar_lea.vmem %s2, 12
      %v3786 = vld [vmem:[%s3785] sm:$0xf]
      %3788 = vset.pattern.permute.xlu0 0
      %3789 = vperm.xlu0 %3788, %v3786
      %v3790 = vpop.permute.xlu0 %3789
      %v3792 = vunpack.c.l.s4 839922192
      %v3793 = vunpack.c.0.s8 %v3792
      %v3794 = vlaneseq
      %v3795 = vshrl.u32 %v3794, 7
      %v3796 = vsub.s32 %v3793, %v3795
      %v3797 = vrot.slane %v3790, %v3796
      %v3799 = vmul.f32 %v3784, %v3797
      %s3800 = scalar_lea.vmem %s3, 12
      %v3801 = vld [vmem:[%s3800] sm:$0xf]
      %3803 = vset.pattern.permute.xlu0 0
      %3804 = vperm.xlu0 %3803, %v3801
      %v3805 = vpop.permute.xlu0 %3804
      %v3807 = vunpack.c.l.s4 839922192
      %v3808 = vunpack.c.0.s8 %v3807
      %v3809 = vlaneseq
      %v3810 = vshrl.u32 %v3809, 7
      %v3811 = vsub.s32 %v3808, %v3810
      %v3812 = vrot.slane %v3805, %v3811
      %v3814 = vadd.f32 %v3799, %v3812
      %v3815 = vmax.f32 %v3814, 0.0
      %3816 = vst [vmem:[%s224] sm:$0xff] %v3815
      %p3817 = scmp.lt.s32.totalorder %s16, 1
      %s3818 = scalar_select %p3817, %s16, 1
      %s3819 = smul.addr %s3818, 2
      %s3820 = smul.addr %s3819, 4
      %s3821 = scalar_lea.vmem %s5, %s3820
      // Predicated region
      $region41: #{single_level_densenet_forward.1} parent=39 // pred_check
        %p3822 = pneg %p144
      $region42: #{single_level_densenet_forward.1} parent=39 // pred_check_branch
        %3824 = sbr.rel (%p3822) target = $region44
      $region43: #{single_level_densenet_forward.1} parent=39 // pred_region
        _
      $region44: #{single_level_densenet_forward.1} parent=39 // pred_fallthru
        _
    $region40: #{single_level_densenet_forward.1} parent=5 // pred_fallthru
      _
    %p3825 = scmp.le.s32.totalorder 2, %s11
    // Predicated region
    $region45: #{single_level_densenet_forward.1} parent=5 // pred_check
      %p3826 = pneg %p3825
    $region46: #{single_level_densenet_forward.1} parent=5 // pred_check_branch
      %3828 = sbr.rel (%p3826) target = $region48
    $region47: #{single_level_densenet_forward.1} parent=5 // pred_region
      %s3829 = ssub.s32 %s11, 2
      // Predicated region
      $region49: #{single_level_densenet_forward.1} parent=47 // pred_check
        %p3830 = pneg %p150
      $region50: #{single_level_densenet_forward.1} parent=47 // pred_check_branch
        %3832 = sbr.rel (%p3830) target = $region52
      $region51: #{single_level_densenet_forward.1} parent=47 // pred_region
        %p3833 = scmp.lt.s32.totalorder %s17, 1
        %s3834 = scalar_select %p3833, %s17, 1
        %s3835 = smul.addr %s3834, 2
        %s3836 = smul.addr %s3835, 4
        %s3837 = scalar_lea.vmem %s5, %s3836
      $region52: #{single_level_densenet_forward.1} parent=47 // pred_fallthru
        _
    $region48: #{single_level_densenet_forward.1} parent=5 // pred_fallthru
      _
  $region6: #{single_level_densenet_forward.1} parent=0 // loop_footer
    %s15 = sadd.s32 1, %s11
  $region7: #{single_level_densenet_forward.1} parent=0 // loop_footer_branch
    %10 = sbr.rel target = $region3
  $region8: #{single_level_densenet_forward.1} parent=0 // loop_exit
    _

</llo_original>
